<compile_context>
chip_gen: v7x
topology: tpu7x:2x2x1
jax: 0.10.0
libtpu: 0.0.40
codegen_flags: <defaults>
</compile_context>

<pallas_src>
import functools

import jax
import jax.numpy as jnp
from jax.experimental import pallas as pl
from jax.experimental.pallas import tpu as pltpu


# ---------------------------------------------------------------------------
# Pallas kernel: whole decoder stack; one layer per grid step.  The residual
# stream lives in the resident output block (constant block index); per-layer
# weights are streamed (auto double-buffered) across the layer grid.
# ---------------------------------------------------------------------------
def _transformer_stack_kernel(
    x_ref,                       # (B*S, D)  embeddings (read only at layer 0)
    wqkv_ref, bqkv_ref,          # (1, D, 3*HK), (1, 1, 3*HK)
    wo_ref, bo_ref,              # (1, HK, D),   (1, 1, D)
    w1_ref, b1_ref,              # (1, D, F),    (1, 1, F)
    w2_ref, b2_ref,              # (1, F, D),    (1, 1, D)
    out_ref,                     # (B*S, D)  resident residual stream
    *, num_heads, key_size, batch, seq_len, compute_dtype, approx_recip,
):
    layer = pl.program_id(0)
    hk = num_heads * key_size
    bs = batch * seq_len

    # Seed the resident residual stream once, at the first layer.
    @pl.when(layer == 0)
    def _():
        out_ref[...] = x_ref[...]

    x2 = out_ref[...]                                    # (B*S, D) f32

    def proj(a, w, b):
        # MXU matmul with f32 accumulation; bias added in f32 (VPU stays f32).
        return jnp.dot(a.astype(compute_dtype), w,
                       preferred_element_type=jnp.float32) + b

    # --- fused QKV projection: one MXU pass over the activations ---
    # (1/sqrt(key_size) is pre-folded into the Q weight/bias in the wrapper.)
    qkv = proj(x2, wqkv_ref[0], bqkv_ref[0])             # (B*S, 3*HK) f32

    def split_heads(mat2d):
        # (B*S, HK) -> (H*B, S, K): heads become a leading batch dim so a
        # single 3-D contraction covers every (head, batch) pair.
        m3 = mat2d.reshape(batch, seq_len, hk)
        return jnp.stack(
            [m3[:, :, h * key_size:(h + 1) * key_size]
             for h in range(num_heads)],
            axis=0).reshape(num_heads * batch, seq_len, key_size)

    q = split_heads(qkv[:, :hk]).astype(compute_dtype)          # (H*B, S, K)
    k = split_heads(qkv[:, hk:2 * hk]).astype(compute_dtype)
    v = split_heads(qkv[:, 2 * hk:]).astype(compute_dtype)

    # --- attention scores (all heads & batches in one contraction) ---
    s = jnp.einsum("nqk,nsk->nqs", q, k,
                   preferred_element_type=jnp.float32)          # (H*B, S, S)
    row = jax.lax.broadcasted_iota(jnp.int32, (seq_len, seq_len), 0)
    col = jax.lax.broadcasted_iota(jnp.int32, (seq_len, seq_len), 1)
    s = jnp.where((col > row)[None], jnp.float32(-1e30), s)     # causal mask

    # --- softmax with deferred normalisation ---
    m = jnp.max(s, axis=-1, keepdims=True)
    p = jnp.exp(s - m)
    denom = jnp.sum(p, axis=-1, keepdims=True)                  # (H*B, S, 1)
    o = jnp.einsum("nqs,nsk->nqk", p.astype(compute_dtype), v,
                   preferred_element_type=jnp.float32)          # (H*B, S, K)
    # Normalise the small (n,S,K) output instead of the (n,S,S) probabilities.
    o = o * pl.reciprocal(denom, approx=approx_recip)

    # --- output projection: sum_h o_h @ Wo[hK:(h+1)K]  (no lane-dim concat) ---
    o = o.reshape(num_heads, bs, key_size)                      # (H, B*S, K)
    wo = wo_ref[0]                                              # (HK, D)
    ctx = jnp.dot(o[0].astype(compute_dtype), wo[:key_size, :],
                  preferred_element_type=jnp.float32)
    for h in range(1, num_heads):
        ctx = ctx + jnp.dot(o[h].astype(compute_dtype),
                            wo[h * key_size:(h + 1) * key_size, :],
                            preferred_element_type=jnp.float32)
    x1 = x2 + ctx + bo_ref[0]                                   # residual add

    # --- feed-forward: Linear -> ReLU -> Linear + residual ---
    # TODO(synk): row-tile over (B*S) chunks for large B*S*F (v7x VMEM budget).
    h1 = jnp.maximum(proj(x1, w1_ref[0], b1_ref[0]), 0.0)
    ff = proj(h1, w2_ref[0], b2_ref[0])
    new_resid = x1 + ff

    # out_ref is the resident residual stream; HBM writeback happens once at
    # the end of the grid (constant output block index).
    out_ref[...] = new_resid


# ---------------------------------------------------------------------------
# One-time parameter preparation (hoisted out of the per-call path): fuse QKV,
# bake the attention scale into the Q weights, stack all layers on a leading
# L axis, optionally cast matmul operands (weights) to bf16.
# ---------------------------------------------------------------------------
def prepare_stacked_params(params, *, num_heads, key_size,
                           compute_dtype=jnp.float32):
    layers = params["layers"]
    scale = jnp.float32(1.0 / (float(key_size) ** 0.5))

    def stack(fn):
        return jnp.stack([fn(lp) for lp in layers], axis=0)

    return {
        "token_embed": params["token_embed"],
        "pos_embed": params["pos_embed"],
        # scale folded into the Q columns / bias:
        "wqkv": stack(lambda lp: jnp.concatenate(
            [lp[0] * scale, lp[2], lp[4]], axis=1)).astype(compute_dtype),
        "bqkv": stack(lambda lp: jnp.concatenate(
            [lp[1] * scale, lp[3], lp[5]])[None, :]).astype(jnp.float32),
        "wo": stack(lambda lp: lp[6]).astype(compute_dtype),
        "bo": stack(lambda lp: lp[7][None, :]).astype(jnp.float32),
        "w1": stack(lambda lp: lp[8]).astype(compute_dtype),
        "b1": stack(lambda lp: lp[9][None, :]).astype(jnp.float32),
        "w2": stack(lambda lp: lp[10]).astype(compute_dtype),
        "b2": stack(lambda lp: lp[11][None, :]).astype(jnp.float32),
    }


def _pick_vmem_limit_bytes():
    # Size the scoped-VMEM limit from the chip's capacity, leaving headroom
    # (~56 MiB on v7x, capped at ~100 MiB on v5e/v6e).
    try:
        cap = int(pltpu.get_tpu_info().vmem_capacity_bytes)
        if cap <= 0:
            return None
        return max(32 * 1024 * 1024,
                   min(cap - 8 * 1024 * 1024, 100 * 1024 * 1024))
    except Exception:
        return None


# ---------------------------------------------------------------------------
# Wrapper: embeddings (JAX glue) + ONE pallas_call over all layers.
# ---------------------------------------------------------------------------
def transformer_forward(token_ids, stacked, *, num_heads, key_size,
                        compute_dtype=jnp.float32, approx_recip=True,
                        single_buffer_resident=True):
    """token_ids: (B, S) int32 -> (B, S, D) float32."""
    B, S = token_ids.shape
    tok_emb = stacked["token_embed"][token_ids]                 # (B, S, D)
    pos_emb = stacked["pos_embed"][jnp.arange(S)][None, :, :]   # (1, S, D)
    x = (tok_emb + pos_emb).astype(jnp.float32).reshape(B * S, -1)
    D = x.shape[-1]
    BS = B * S
    L = stacked["wqkv"].shape[0]

    kernel = functools.partial(
        _transformer_stack_kernel,
        num_heads=num_heads, key_size=key_size, batch=B, seq_len=S,
        compute_dtype=compute_dtype, approx_recip=approx_recip)

    def w_spec(arr):
        shp = arr.shape
        nd = len(shp)
        # TODO(synk): on v5e with small B*S, raise weight pipelining depth
        # (pipeline_mode=pl.Buffered(3)) once profiling shows exposed DMA.
        return pl.BlockSpec((1,) + shp[1:],
                            lambda l, _nd=nd: (l,) + (0,) * (_nd - 1))

    def act_spec():
        # Resident activation block (constant index across the layer grid):
        # single-buffer it so only one VMEM copy is held.
        if single_buffer_resident and hasattr(pl, "Buffered"):
            return pl.BlockSpec((BS, D), lambda l: (0, 0),
                                pipeline_mode=pl.Buffered(1))
        return pl.BlockSpec((BS, D), lambda l: (0, 0))

    cparams = dict(dimension_semantics=("arbitrary",))   # layers are sequential
    vmem_limit = _pick_vmem_limit_bytes()
    if vmem_limit is not None:
        cparams["vmem_limit_bytes"] = vmem_limit

    out = pl.pallas_call(
        kernel,
        out_shape=jax.ShapeDtypeStruct((BS, D), jnp.float32),
        grid=(L,),
        in_specs=[
            act_spec(),
            w_spec(stacked["wqkv"]), w_spec(stacked["bqkv"]),
            w_spec(stacked["wo"]), w_spec(stacked["bo"]),
            w_spec(stacked["w1"]), w_spec(stacked["b1"]),
            w_spec(stacked["w2"]), w_spec(stacked["b2"]),
        ],
        out_specs=act_spec(),
        # Alias the embedding slab to the output: out_ref IS the residual
        # stream, so no extra activation copies are held in HBM or VMEM.
        input_output_aliases={0: 0},
        compiler_params=pltpu.CompilerParams(**cparams),
    )(x, stacked["wqkv"], stacked["bqkv"], stacked["wo"], stacked["bo"],
      stacked["w1"], stacked["b1"], stacked["w2"], stacked["b2"])

    return out.reshape(B, S, D)


# ---------------------------------------------------------------------------
# Pure-JAX reference (mirrors the PyTorch forward) for correctness check.
# ---------------------------------------------------------------------------
def _reference_forward(token_ids, params, *, num_heads, key_size):
    B, S = token_ids.shape
    x = params["token_embed"][token_ids] + params["pos_embed"][jnp.arange(S)][None]
    for (wq, bq, wk, bk, wv, bv, wo, bo, w1, b1, w2, b2) in params["layers"]:
        q = (x @ wq + bq).reshape(B, S, num_heads, key_size).transpose(0, 2, 1, 3)
        k = (x @ wk + bk).reshape(B, S, num_heads, key_size).transpose(0, 2, 1, 3)
        v = (x @ wv + bv).reshape(B, S, num_heads, key_size).transpose(0, 2, 1, 3)
        scores = jnp.einsum("bhqd,bhkd->bhqk", q, k) / jnp.sqrt(
            jnp.float32(key_size))
        mask = jnp.triu(jnp.ones((S, S), dtype=bool), k=1)
        scores = jnp.where(mask[None, None], -jnp.inf, scores)
        p = jax.nn.softmax(scores, axis=-1)
        attn = jnp.einsum("bhqk,bhkd->bhqd", p, v)
        attn = attn.transpose(0, 2, 1, 3).reshape(B, S, num_heads * key_size)
        attn = attn @ wo + bo
        x = x + attn
        ff = jnp.maximum(x @ w1 + b1, 0.0) @ w2 + b2
        x = x + ff
    return x


# ---------------------------------------------------------------------------
# Deterministic synthetic parameter init (no checkpoint).
# ---------------------------------------------------------------------------
def init_params(key, *, input_dim, model_dim, num_heads, num_layers,
                ff_dim, seq_len, key_size):
    hk = num_heads * key_size
    keys = jax.random.split(key, 2 + num_layers)
    params = {
        "token_embed": jax.random.normal(keys[0], (input_dim, model_dim),
                                         jnp.float32) * 0.1,
        "pos_embed": jax.random.normal(keys[1], (seq_len, model_dim),
                                       jnp.float32) * 0.1,
        "layers": [],
    }
    for i in range(num_layers):
        lk = jax.random.split(keys[2 + i], 12)
        scale = 0.1
        layer = (
            jax.random.normal(lk[0], (model_dim, hk), jnp.float32) * scale,     # wq
            jax.random.normal(lk[1], (hk,), jnp.float32) * scale,               # bq
            jax.random.normal(lk[2], (model_dim, hk), jnp.float32) * scale,     # wk
            jax.random.normal(lk[3], (hk,), jnp.float32) * scale,               # bk
            jax.random.normal(lk[4], (model_dim, hk), jnp.float32) * scale,     # wv
            jax.random.normal(lk[5], (hk,), jnp.float32) * scale,               # bv
            jax.random.normal(lk[6], (hk, model_dim), jnp.float32) * scale,     # wo
            jax.random.normal(lk[7], (model_dim,), jnp.float32) * scale,        # bo
            jax.random.normal(lk[8], (model_dim, ff_dim), jnp.float32) * scale,    # w1
            jax.random.normal(lk[9], (ff_dim,), jnp.float32) * scale,              # b1
            jax.random.normal(lk[10], (ff_dim, model_dim), jnp.float32) * scale,   # w2
            jax.random.normal(lk[11], (model_dim,), jnp.float32) * scale,          # b2
        )
        params["layers"].append(layer)
    return params


if __name__ == "__main__":
    # Small config consistent with the module's constructor.
    INPUT_DIM = 16      # vocab size
    MODEL_DIM = 32
    NUM_HEADS = 4
    KEY_SIZE = 8        # num_heads * key_size == model_dim
    NUM_LAYERS = 2
    FF_DIM = 64
    SEQ_LEN = 8
    BATCH = 2

    root_key = jax.random.PRNGKey(0)
    pkey, xkey = jax.random.split(root_key)

    params = init_params(
        pkey,
        input_dim=INPUT_DIM, model_dim=MODEL_DIM, num_heads=NUM_HEADS,
        num_layers=NUM_LAYERS, ff_dim=FF_DIM, seq_len=SEQ_LEN,
        key_size=KEY_SIZE,
    )

    token_ids = jax.random.randint(xkey, (BATCH, SEQ_LEN), 0, INPUT_DIM,
                                   dtype=jnp.int32)

    # Weight stacking/fusing hoisted out of the per-call path (done once).
    # Demo runs the MXU in f32 for a tight tolerance; pass
    # compute_dtype=jnp.bfloat16 here (and below) for bf16 MXU operands.
    stacked = prepare_stacked_params(params, num_heads=NUM_HEADS,
                                     key_size=KEY_SIZE,
                                     compute_dtype=jnp.float32)

    def run(single_buffer):
        fwd = jax.jit(functools.partial(
            transformer_forward, num_heads=NUM_HEADS, key_size=KEY_SIZE,
            compute_dtype=jnp.float32, approx_recip=True,
            single_buffer_resident=single_buffer))
        return jax.block_until_ready(fwd(token_ids, stacked))

    try:
        out = run(True)
    except Exception:
        # Fallback: default (double-buffered) resident activation specs.
        out = run(False)

    ref = _reference_forward(token_ids, params,
                             num_heads=NUM_HEADS, key_size=KEY_SIZE)
    ref = jax.block_until_ready(ref)

    assert out.shape == (BATCH, SEQ_LEN, MODEL_DIM)
    # Tolerance accounts for the approximate (EUP) reciprocal in the softmax.
    assert jnp.allclose(out, ref, atol=2e-3, rtol=2e-3), "mismatch vs reference"

    print("KERNEL_OK")
</pallas_src>

<mosaic_0001>
module attributes {stable_mosaic.version = 11 : i64} {
  func.func @_transformer_stack_kernel(%arg0: i32, %arg1: memref<16x32xf32, #tpu.memory_space<vmem>>, %arg2: memref<1x32x96xf32, #tpu.memory_space<vmem>>, %arg3: memref<1x1x96xf32, #tpu.memory_space<vmem>>, %arg4: memref<1x32x32xf32, #tpu.memory_space<vmem>>, %arg5: memref<1x1x32xf32, #tpu.memory_space<vmem>>, %arg6: memref<1x32x64xf32, #tpu.memory_space<vmem>>, %arg7: memref<1x1x64xf32, #tpu.memory_space<vmem>>, %arg8: memref<1x64x32xf32, #tpu.memory_space<vmem>>, %arg9: memref<1x1x32xf32, #tpu.memory_space<vmem>>, %arg10: memref<16x32xf32, #tpu.memory_space<vmem>>) attributes {dimension_semantics = [#tpu.dimension_semantics<arbitrary>], iteration_bounds = array<i64: 2>, scalar_prefetch = 0 : i64, scratch_operands = 0 : i64, tpu.core_type = #tpu.core_type<tc>, window_params = [{pipeline_mode = #tpu.pipeline_mode<synchronous>, transform_indices = @transform_0, window_bounds = array<i64: 16, 32>}, {transform_indices = @transform_1, window_bounds = array<i64: 1, 32, 96>}, {transform_indices = @transform_2, window_bounds = array<i64: 1, 1, 96>}, {transform_indices = @transform_3, window_bounds = array<i64: 1, 32, 32>}, {transform_indices = @transform_4, window_bounds = array<i64: 1, 1, 32>}, {transform_indices = @transform_5, window_bounds = array<i64: 1, 32, 64>}, {transform_indices = @transform_6, window_bounds = array<i64: 1, 1, 64>}, {transform_indices = @transform_7, window_bounds = array<i64: 1, 64, 32>}, {transform_indices = @transform_8, window_bounds = array<i64: 1, 1, 32>}, {pipeline_mode = #tpu.pipeline_mode<synchronous>, transform_indices = @transform_9, window_bounds = array<i64: 16, 32>}]} {
    %c0_i32 = arith.constant 0 : i32
    %0 = arith.cmpi eq, %arg0, %c0_i32 : i32
    %1 = arith.extui %0 : i1 to i32
    %c0_i32_0 = arith.constant 0 : i32
    %2 = arith.cmpi ne, %1, %c0_i32_0 : i32
    scf.if %2 {
      %c0_40 = arith.constant 0 : index
      %c0_41 = arith.constant 0 : index
      %112 = vector.load %arg1[%c0_40, %c0_41] : memref<16x32xf32, #tpu.memory_space<vmem>>, vector<16x32xf32>
      %c0_42 = arith.constant 0 : index
      %c0_43 = arith.constant 0 : index
      %113 = vector.load %arg10[%c0_42, %c0_43] : memref<16x32xf32, #tpu.memory_space<vmem>>, vector<16x32xf32>
      tpu.vector_store %arg10[%c0_42, %c0_43], %112 {strides = array<i32>} : memref<16x32xf32, #tpu.memory_space<vmem>>, vector<16x32xf32>,
    } else {
    }
    %c0 = arith.constant 0 : index
    %c0_1 = arith.constant 0 : index
    %3 = vector.load %arg10[%c0, %c0_1] : memref<16x32xf32, #tpu.memory_space<vmem>>, vector<16x32xf32>
    %c0_2 = arith.constant 0 : index
    %c0_3 = arith.constant 0 : index
    %c0_4 = arith.constant 0 : index
    %4 = vector.load %arg2[%c0_2, %c0_3, %c0_4] : memref<1x32x96xf32, #tpu.memory_space<vmem>>, vector<1x32x96xf32>
    %5 = vector.shape_cast %4 : vector<1x32x96xf32> to vector<32x96xf32>
    %c0_5 = arith.constant 0 : index
    %c0_6 = arith.constant 0 : index
    %c0_7 = arith.constant 0 : index
    %6 = vector.load %arg3[%c0_5, %c0_6, %c0_7] : memref<1x1x96xf32, #tpu.memory_space<vmem>>, vector<1x1x96xf32>
    %7 = vector.shape_cast %6 : vector<1x1x96xf32> to vector<1x96xf32>
    %cst = arith.constant dense<0.000000e+00> : vector<16x96xf32>
    %8 = tpu.matmul %3, %5, %cst {dimension_numbers = #tpu.dot_dimension_numbers<[1], [0], [0], [1], [0, 0, 1, 1], [], []>} : vector<16x32xf32>, vector<32x96xf32>, vector<16x96xf32> -> vector<16x96xf32>
    %9 = vector.broadcast %7 : vector<1x96xf32> to vector<16x96xf32>
    %10 = arith.addf %8, %9 : vector<16x96xf32>
    %11 = vector.extract_strided_slice %10 {offsets = [0, 0], sizes = [16, 32], strides = [1, 1]} : vector<16x96xf32> to vector<16x32xf32>
    %12 = vector.shape_cast %11 : vector<16x32xf32> to vector<2x8x32xf32>
    %13 = vector.extract_strided_slice %12 {offsets = [0, 0, 0], sizes = [2, 8, 8], strides = [1, 1, 1]} : vector<2x8x32xf32> to vector<2x8x8xf32>
    %14 = vector.extract_strided_slice %12 {offsets = [0, 0, 8], sizes = [2, 8, 8], strides = [1, 1, 1]} : vector<2x8x32xf32> to vector<2x8x8xf32>
    %15 = vector.extract_strided_slice %12 {offsets = [0, 0, 16], sizes = [2, 8, 8], strides = [1, 1, 1]} : vector<2x8x32xf32> to vector<2x8x8xf32>
    %16 = vector.extract_strided_slice %12 {offsets = [0, 0, 24], sizes = [2, 8, 8], strides = [1, 1, 1]} : vector<2x8x32xf32> to vector<2x8x8xf32>
    %17 = vector.shape_cast %13 : vector<2x8x8xf32> to vector<1x2x8x8xf32>
    %18 = vector.shape_cast %14 : vector<2x8x8xf32> to vector<1x2x8x8xf32>
    %19 = vector.shape_cast %15 : vector<2x8x8xf32> to vector<1x2x8x8xf32>
    %20 = vector.shape_cast %16 : vector<2x8x8xf32> to vector<1x2x8x8xf32>
    %21 = tpu.concatenate %17, %18, %19, %20 in 0 : vector<1x2x8x8xf32>, vector<1x2x8x8xf32>, vector<1x2x8x8xf32>, vector<1x2x8x8xf32> -> vector<4x2x8x8xf32>
    %22 = vector.shape_cast %21 : vector<4x2x8x8xf32> to vector<8x8x8xf32>
    %23 = vector.extract_strided_slice %10 {offsets = [0, 32], sizes = [16, 32], strides = [1, 1]} : vector<16x96xf32> to vector<16x32xf32>
    %24 = vector.shape_cast %23 : vector<16x32xf32> to vector<2x8x32xf32>
    %25 = vector.extract_strided_slice %24 {offsets = [0, 0, 0], sizes = [2, 8, 8], strides = [1, 1, 1]} : vector<2x8x32xf32> to vector<2x8x8xf32>
    %26 = vector.extract_strided_slice %24 {offsets = [0, 0, 8], sizes = [2, 8, 8], strides = [1, 1, 1]} : vector<2x8x32xf32> to vector<2x8x8xf32>
    %27 = vector.extract_strided_slice %24 {offsets = [0, 0, 16], sizes = [2, 8, 8], strides = [1, 1, 1]} : vector<2x8x32xf32> to vector<2x8x8xf32>
    %28 = vector.extract_strided_slice %24 {offsets = [0, 0, 24], sizes = [2, 8, 8], strides = [1, 1, 1]} : vector<2x8x32xf32> to vector<2x8x8xf32>
    %29 = vector.shape_cast %25 : vector<2x8x8xf32> to vector<1x2x8x8xf32>
    %30 = vector.shape_cast %26 : vector<2x8x8xf32> to vector<1x2x8x8xf32>
    %31 = vector.shape_cast %27 : vector<2x8x8xf32> to vector<1x2x8x8xf32>
    %32 = vector.shape_cast %28 : vector<2x8x8xf32> to vector<1x2x8x8xf32>
    %33 = tpu.concatenate %29, %30, %31, %32 in 0 : vector<1x2x8x8xf32>, vector<1x2x8x8xf32>, vector<1x2x8x8xf32>, vector<1x2x8x8xf32> -> vector<4x2x8x8xf32>
    %34 = vector.shape_cast %33 : vector<4x2x8x8xf32> to vector<8x8x8xf32>
    %35 = vector.extract_strided_slice %10 {offsets = [0, 64], sizes = [16, 32], strides = [1, 1]} : vector<16x96xf32> to vector<16x32xf32>
    %36 = vector.shape_cast %35 : vector<16x32xf32> to vector<2x8x32xf32>
    %37 = vector.extract_strided_slice %36 {offsets = [0, 0, 0], sizes = [2, 8, 8], strides = [1, 1, 1]} : vector<2x8x32xf32> to vector<2x8x8xf32>
    %38 = vector.extract_strided_slice %36 {offsets = [0, 0, 8], sizes = [2, 8, 8], strides = [1, 1, 1]} : vector<2x8x32xf32> to vector<2x8x8xf32>
    %39 = vector.extract_strided_slice %36 {offsets = [0, 0, 16], sizes = [2, 8, 8], strides = [1, 1, 1]} : vector<2x8x32xf32> to vector<2x8x8xf32>
    %40 = vector.extract_strided_slice %36 {offsets = [0, 0, 24], sizes = [2, 8, 8], strides = [1, 1, 1]} : vector<2x8x32xf32> to vector<2x8x8xf32>
    %41 = vector.shape_cast %37 : vector<2x8x8xf32> to vector<1x2x8x8xf32>
    %42 = vector.shape_cast %38 : vector<2x8x8xf32> to vector<1x2x8x8xf32>
    %43 = vector.shape_cast %39 : vector<2x8x8xf32> to vector<1x2x8x8xf32>
    %44 = vector.shape_cast %40 : vector<2x8x8xf32> to vector<1x2x8x8xf32>
    %45 = tpu.concatenate %41, %42, %43, %44 in 0 : vector<1x2x8x8xf32>, vector<1x2x8x8xf32>, vector<1x2x8x8xf32>, vector<1x2x8x8xf32> -> vector<4x2x8x8xf32>
    %46 = vector.shape_cast %45 : vector<4x2x8x8xf32> to vector<8x8x8xf32>
    "tpu.trace_start"() <{level = 10 : i32, message = "nqk,nsk->nqs"}> : () -> ()
    %cst_8 = arith.constant dense<0.000000e+00> : vector<8x8x8xf32>
    %47 = tpu.matmul %22, %34, %cst_8 {dimension_numbers = #tpu.dot_dimension_numbers<[2], [2], [1], [1], [0, 0, 0, 1, 1, 1], [0], [0]>} : vector<8x8x8xf32>, vector<8x8x8xf32>, vector<8x8x8xf32> -> vector<8x8x8xf32>
    "tpu.trace_stop"() : () -> ()
    %48 = tpu.iota {dimensions = array<i32: 0>} : vector<8x8xi32>
    %49 = tpu.iota {dimensions = array<i32: 1>} : vector<8x8xi32>
    %50 = arith.cmpi sgt, %49, %48 : vector<8x8xi32>
    %51 = vector.shape_cast %50 : vector<8x8xi1> to vector<1x8x8xi1>
    %cst_9 = arith.constant -1.000000e+30 : f32
    %52 = vector.shape_cast %51 : vector<1x8x8xi1> to vector<1x8x8xi1>
    %53 = vector.broadcast %52 : vector<1x8x8xi1> to vector<8x8x8xi1>
    %54 = vector.broadcast %cst_9 : f32 to vector<8x8x8xf32>
    %55 = arith.select %53, %54, %47 : vector<8x8x8xi1>, vector<8x8x8xf32>
    %cst_10 = arith.constant dense<0xFF800000> : vector<8x8xf32>
    %56 = vector.multi_reduction <maximumf>, %55, %cst_10 [2] : vector<8x8x8xf32> to vector<8x8xf32>
    %57 = vector.shape_cast %56 : vector<8x8xf32> to vector<8x8x1xf32>
    %58 = vector.broadcast %57 : vector<8x8x1xf32> to vector<8x8x8xf32>
    %59 = arith.subf %55, %58 : vector<8x8x8xf32>
    %60 = math.exp %59 : vector<8x8x8xf32>
    %cst_11 = arith.constant dense<0.000000e+00> : vector<8x8xf32>
    %61 = vector.multi_reduction <add>, %60, %cst_11 [2] : vector<8x8x8xf32> to vector<8x8xf32>
    %62 = vector.shape_cast %61 : vector<8x8xf32> to vector<8x8x1xf32>
    "tpu.trace_start"() <{level = 10 : i32, message = "nqs,nsk->nqk"}> : () -> ()
    %cst_12 = arith.constant dense<0.000000e+00> : vector<8x8x8xf32>
    %63 = tpu.matmul %60, %46, %cst_12 {dimension_numbers = #tpu.dot_dimension_numbers<[2], [1], [1], [2], [0, 0, 0, 1, 1, 2], [0], [0]>} : vector<8x8x8xf32>, vector<8x8x8xf32>, vector<8x8x8xf32> -> vector<8x8x8xf32>
    "tpu.trace_stop"() : () -> ()
    %64 = tpu.reciprocal %62 {approx = true} : vector<8x8x1xf32> -> vector<8x8x1xf32>
    %65 = vector.broadcast %64 : vector<8x8x1xf32> to vector<8x8x8xf32>
    %66 = arith.mulf %63, %65 : vector<8x8x8xf32>
    %67 = vector.shape_cast %66 : vector<8x8x8xf32> to vector<4x16x8xf32>
    %c0_13 = arith.constant 0 : index
    %c0_14 = arith.constant 0 : index
    %c0_15 = arith.constant 0 : index
    %68 = vector.load %arg4[%c0_13, %c0_14, %c0_15] : memref<1x32x32xf32, #tpu.memory_space<vmem>>, vector<1x32x32xf32>
    %69 = vector.shape_cast %68 : vector<1x32x32xf32> to vector<32x32xf32>
    %70 = vector.extract_strided_slice %67 {offsets = [0, 0, 0], sizes = [1, 16, 8], strides = [1, 1, 1]} : vector<4x16x8xf32> to vector<1x16x8xf32>
    %71 = vector.shape_cast %70 : vector<1x16x8xf32> to vector<16x8xf32>
    %72 = vector.extract_strided_slice %69 {offsets = [0, 0], sizes = [8, 32], strides = [1, 1]} : vector<32x32xf32> to vector<8x32xf32>
    %cst_16 = arith.constant dense<0.000000e+00> : vector<16x32xf32>
    %73 = tpu.matmul %71, %72, %cst_16 {dimension_numbers = #tpu.dot_dimension_numbers<[1], [0], [0], [1], [0, 0, 1, 1], [], []>} : vector<16x8xf32>, vector<8x32xf32>, vector<16x32xf32> -> vector<16x32xf32>
    %74 = vector.extract_strided_slice %67 {offsets = [1, 0, 0], sizes = [1, 16, 8], strides = [1, 1, 1]} : vector<4x16x8xf32> to vector<1x16x8xf32>
    %75 = vector.shape_cast %74 : vector<1x16x8xf32> to vector<16x8xf32>
    %76 = vector.extract_strided_slice %69 {offsets = [8, 0], sizes = [8, 32], strides = [1, 1]} : vector<32x32xf32> to vector<8x32xf32>
    %cst_17 = arith.constant dense<0.000000e+00> : vector<16x32xf32>
    %77 = tpu.matmul %75, %76, %cst_17 {dimension_numbers = #tpu.dot_dimension_numbers<[1], [0], [0], [1], [0, 0, 1, 1], [], []>} : vector<16x8xf32>, vector<8x32xf32>, vector<16x32xf32> -> vector<16x32xf32>
    %78 = arith.addf %73, %77 : vector<16x32xf32>
    %79 = vector.extract_strided_slice %67 {offsets = [2, 0, 0], sizes = [1, 16, 8], strides = [1, 1, 1]} : vector<4x16x8xf32> to vector<1x16x8xf32>
    %80 = vector.shape_cast %79 : vector<1x16x8xf32> to vector<16x8xf32>
    %81 = vector.extract_strided_slice %69 {offsets = [16, 0], sizes = [8, 32], strides = [1, 1]} : vector<32x32xf32> to vector<8x32xf32>
    %cst_18 = arith.constant dense<0.000000e+00> : vector<16x32xf32>
    %82 = tpu.matmul %80, %81, %cst_18 {dimension_numbers = #tpu.dot_dimension_numbers<[1], [0], [0], [1], [0, 0, 1, 1], [], []>} : vector<16x8xf32>, vector<8x32xf32>, vector<16x32xf32> -> vector<16x32xf32>
    %83 = arith.addf %78, %82 : vector<16x32xf32>
    %84 = vector.extract_strided_slice %67 {offsets = [3, 0, 0], sizes = [1, 16, 8], strides = [1, 1, 1]} : vector<4x16x8xf32> to vector<1x16x8xf32>
    %85 = vector.shape_cast %84 : vector<1x16x8xf32> to vector<16x8xf32>
    %86 = vector.extract_strided_slice %69 {offsets = [24, 0], sizes = [8, 32], strides = [1, 1]} : vector<32x32xf32> to vector<8x32xf32>
    %cst_19 = arith.constant dense<0.000000e+00> : vector<16x32xf32>
    %87 = tpu.matmul %85, %86, %cst_19 {dimension_numbers = #tpu.dot_dimension_numbers<[1], [0], [0], [1], [0, 0, 1, 1], [], []>} : vector<16x8xf32>, vector<8x32xf32>, vector<16x32xf32> -> vector<16x32xf32>
    %88 = arith.addf %83, %87 : vector<16x32xf32>
    %89 = arith.addf %3, %88 : vector<16x32xf32>
    %c0_20 = arith.constant 0 : index
    %c0_21 = arith.constant 0 : index
    %c0_22 = arith.constant 0 : index
    %90 = vector.load %arg5[%c0_20, %c0_21, %c0_22] : memref<1x1x32xf32, #tpu.memory_space<vmem>>, vector<1x1x32xf32>
    %91 = vector.shape_cast %90 : vector<1x1x32xf32> to vector<1x32xf32>
    %92 = vector.broadcast %91 : vector<1x32xf32> to vector<16x32xf32>
    %93 = arith.addf %89, %92 : vector<16x32xf32>
    %c0_23 = arith.constant 0 : index
    %c0_24 = arith.constant 0 : index
    %c0_25 = arith.constant 0 : index
    %94 = vector.load %arg6[%c0_23, %c0_24, %c0_25] : memref<1x32x64xf32, #tpu.memory_space<vmem>>, vector<1x32x64xf32>
    %95 = vector.shape_cast %94 : vector<1x32x64xf32> to vector<32x64xf32>
    %c0_26 = arith.constant 0 : index
    %c0_27 = arith.constant 0 : index
    %c0_28 = arith.constant 0 : index
    %96 = vector.load %arg7[%c0_26, %c0_27, %c0_28] : memref<1x1x64xf32, #tpu.memory_space<vmem>>, vector<1x1x64xf32>
    %97 = vector.shape_cast %96 : vector<1x1x64xf32> to vector<1x64xf32>
    %cst_29 = arith.constant dense<0.000000e+00> : vector<16x64xf32>
    %98 = tpu.matmul %93, %95, %cst_29 {dimension_numbers = #tpu.dot_dimension_numbers<[1], [0], [0], [1], [0, 0, 1, 1], [], []>} : vector<16x32xf32>, vector<32x64xf32>, vector<16x64xf32> -> vector<16x64xf32>
    %99 = vector.broadcast %97 : vector<1x64xf32> to vector<16x64xf32>
    %100 = arith.addf %98, %99 : vector<16x64xf32>
    %cst_30 = arith.constant 0.000000e+00 : f32
    %101 = vector.broadcast %cst_30 : f32 to vector<16x64xf32>
    %102 = arith.maximumf %100, %101 : vector<16x64xf32>
    %c0_31 = arith.constant 0 : index
    %c0_32 = arith.constant 0 : index
    %c0_33 = arith.constant 0 : index
    %103 = vector.load %arg8[%c0_31, %c0_32, %c0_33] : memref<1x64x32xf32, #tpu.memory_space<vmem>>, vector<1x64x32xf32>
    %104 = vector.shape_cast %103 : vector<1x64x32xf32> to vector<64x32xf32>
    %c0_34 = arith.constant 0 : index
    %c0_35 = arith.constant 0 : index
    %c0_36 = arith.constant 0 : index
    %105 = vector.load %arg9[%c0_34, %c0_35, %c0_36] : memref<1x1x32xf32, #tpu.memory_space<vmem>>, vector<1x1x32xf32>
    %106 = vector.shape_cast %105 : vector<1x1x32xf32> to vector<1x32xf32>
    %cst_37 = arith.constant dense<0.000000e+00> : vector<16x32xf32>
    %107 = tpu.matmul %102, %104, %cst_37 {dimension_numbers = #tpu.dot_dimension_numbers<[1], [0], [0], [1], [0, 0, 1, 1], [], []>} : vector<16x64xf32>, vector<64x32xf32>, vector<16x32xf32> -> vector<16x32xf32>
    %108 = vector.broadcast %106 : vector<1x32xf32> to vector<16x32xf32>
    %109 = arith.addf %107, %108 : vector<16x32xf32>
    %110 = arith.addf %93, %109 : vector<16x32xf32>
    %c0_38 = arith.constant 0 : index
    %c0_39 = arith.constant 0 : index
    %111 = vector.load %arg10[%c0_38, %c0_39] : memref<16x32xf32, #tpu.memory_space<vmem>>, vector<16x32xf32>
    tpu.vector_store %arg10[%c0_38, %c0_39], %110 {strides = array<i32>} : memref<16x32xf32, #tpu.memory_space<vmem>>, vector<16x32xf32>,
    return
  }
  func.func @transform_0(%arg0: i32) -> (i32, i32) {
    %c0_i32 = arith.constant 0 : i32
    %c0_i32_0 = arith.constant 0 : i32
    %c0_i32_1 = arith.constant 0 : i32
    return %c0_i32, %c0_i32_0 : i32, i32
  }
  func.func @transform_1(%arg0: i32) -> (i32, i32, i32) {
    %c0_i32 = arith.constant 0 : i32
    %c0_i32_0 = arith.constant 0 : i32
    %c0_i32_1 = arith.constant 0 : i32
    return %arg0, %c0_i32, %c0_i32_0 : i32, i32, i32
  }
  func.func @transform_2(%arg0: i32) -> (i32, i32, i32) {
    %c0_i32 = arith.constant 0 : i32
    %c0_i32_0 = arith.constant 0 : i32
    %c0_i32_1 = arith.constant 0 : i32
    return %arg0, %c0_i32, %c0_i32_0 : i32, i32, i32
  }
  func.func @transform_3(%arg0: i32) -> (i32, i32, i32) {
    %c0_i32 = arith.constant 0 : i32
    %c0_i32_0 = arith.constant 0 : i32
    %c0_i32_1 = arith.constant 0 : i32
    return %arg0, %c0_i32, %c0_i32_0 : i32, i32, i32
  }
  func.func @transform_4(%arg0: i32) -> (i32, i32, i32) {
    %c0_i32 = arith.constant 0 : i32
    %c0_i32_0 = arith.constant 0 : i32
    %c0_i32_1 = arith.constant 0 : i32
    return %arg0, %c0_i32, %c0_i32_0 : i32, i32, i32
  }
  func.func @transform_5(%arg0: i32) -> (i32, i32, i32) {
    %c0_i32 = arith.constant 0 : i32
    %c0_i32_0 = arith.constant 0 : i32
    %c0_i32_1 = arith.constant 0 : i32
    return %arg0, %c0_i32, %c0_i32_0 : i32, i32, i32
  }
  func.func @transform_6(%arg0: i32) -> (i32, i32, i32) {
    %c0_i32 = arith.constant 0 : i32
    %c0_i32_0 = arith.constant 0 : i32
    %c0_i32_1 = arith.constant 0 : i32
    return %arg0, %c0_i32, %c0_i32_0 : i32, i32, i32
  }
  func.func @transform_7(%arg0: i32) -> (i32, i32, i32) {
    %c0_i32 = arith.constant 0 : i32
    %c0_i32_0 = arith.constant 0 : i32
    %c0_i32_1 = arith.constant 0 : i32
    return %arg0, %c0_i32, %c0_i32_0 : i32, i32, i32
  }
  func.func @transform_8(%arg0: i32) -> (i32, i32, i32) {
    %c0_i32 = arith.constant 0 : i32
    %c0_i32_0 = arith.constant 0 : i32
    %c0_i32_1 = arith.constant 0 : i32
    return %arg0, %c0_i32, %c0_i32_0 : i32, i32, i32
  }
  func.func @transform_9(%arg0: i32) -> (i32, i32) {
    %c0_i32 = arith.constant 0 : i32
    %c0_i32_0 = arith.constant 0 : i32
    %c0_i32_1 = arith.constant 0 : i32
    return %c0_i32, %c0_i32_0 : i32, i32
  }
}

module attributes {stable_mosaic.version = 11 : i64} {
  func.func @_transformer_stack_kernel(%arg0: i32, %arg1: memref<16x32xf32, #tpu.memory_space<vmem>>, %arg2: memref<1x32x96xf32, #tpu.memory_space<vmem>>, %arg3: memref<1x1x96xf32, #tpu.memory_space<vmem>>, %arg4: memref<1x32x32xf32, #tpu.memory_space<vmem>>, %arg5: memref<1x1x32xf32, #tpu.memory_space<vmem>>, %arg6: memref<1x32x64xf32, #tpu.memory_space<vmem>>, %arg7: memref<1x1x64xf32, #tpu.memory_space<vmem>>, %arg8: memref<1x64x32xf32, #tpu.memory_space<vmem>>, %arg9: memref<1x1x32xf32, #tpu.memory_space<vmem>>, %arg10: memref<16x32xf32, #tpu.memory_space<vmem>>) attributes {dimension_semantics = [#tpu.dimension_semantics<arbitrary>], iteration_bounds = array<i64: 2>, scalar_prefetch = 0 : i64, scratch_operands = 0 : i64, tpu.core_type = #tpu.core_type<tc>, window_params = [{pipeline_mode = #tpu.pipeline_mode<synchronous>, transform_indices = @transform_0, window_bounds = array<i64: 16, 32>}, {transform_indices = @transform_1, window_bounds = array<i64: 1, 32, 96>}, {transform_indices = @transform_2, window_bounds = array<i64: 1, 1, 96>}, {transform_indices = @transform_3, window_bounds = array<i64: 1, 32, 32>}, {transform_indices = @transform_4, window_bounds = array<i64: 1, 1, 32>}, {transform_indices = @transform_5, window_bounds = array<i64: 1, 32, 64>}, {transform_indices = @transform_6, window_bounds = array<i64: 1, 1, 64>}, {transform_indices = @transform_7, window_bounds = array<i64: 1, 64, 32>}, {transform_indices = @transform_8, window_bounds = array<i64: 1, 1, 32>}, {pipeline_mode = #tpu.pipeline_mode<synchronous>, transform_indices = @transform_9, window_bounds = array<i64: 16, 32>}]} {
    %c0_i32 = arith.constant 0 : i32
    %0 = arith.cmpi eq, %arg0, %c0_i32 : i32
    %1 = arith.extui %0 : i1 to i32
    %c0_i32_0 = arith.constant 0 : i32
    %2 = arith.cmpi ne, %1, %c0_i32_0 : i32
    scf.if %2 {
      %c0_40 = arith.constant 0 : index
      %c0_41 = arith.constant 0 : index
      %112 = vector.load %arg1[%c0_40, %c0_41] : memref<16x32xf32, #tpu.memory_space<vmem>>, vector<16x32xf32>
      %c0_42 = arith.constant 0 : index
      %c0_43 = arith.constant 0 : index
      %113 = vector.load %arg10[%c0_42, %c0_43] : memref<16x32xf32, #tpu.memory_space<vmem>>, vector<16x32xf32>
      tpu.vector_store %arg10[%c0_42, %c0_43], %112 {strides = array<i32>} : memref<16x32xf32, #tpu.memory_space<vmem>>, vector<16x32xf32>,
    } else {
    }
    %c0 = arith.constant 0 : index
    %c0_1 = arith.constant 0 : index
    %3 = vector.load %arg10[%c0, %c0_1] : memref<16x32xf32, #tpu.memory_space<vmem>>, vector<16x32xf32>
    %c0_2 = arith.constant 0 : index
    %c0_3 = arith.constant 0 : index
    %c0_4 = arith.constant 0 : index
    %4 = vector.load %arg2[%c0_2, %c0_3, %c0_4] : memref<1x32x96xf32, #tpu.memory_space<vmem>>, vector<1x32x96xf32>
    %5 = vector.shape_cast %4 : vector<1x32x96xf32> to vector<32x96xf32>
    %c0_5 = arith.constant 0 : index
    %c0_6 = arith.constant 0 : index
    %c0_7 = arith.constant 0 : index
    %6 = vector.load %arg3[%c0_5, %c0_6, %c0_7] : memref<1x1x96xf32, #tpu.memory_space<vmem>>, vector<1x1x96xf32>
    %7 = vector.shape_cast %6 : vector<1x1x96xf32> to vector<1x96xf32>
    %cst = arith.constant dense<0.000000e+00> : vector<16x96xf32>
    %8 = tpu.matmul %3, %5, %cst {dimension_numbers = #tpu.dot_dimension_numbers<[1], [0], [0], [1], [0, 0, 1, 1], [], []>} : vector<16x32xf32>, vector<32x96xf32>, vector<16x96xf32> -> vector<16x96xf32>
    %9 = vector.broadcast %7 : vector<1x96xf32> to vector<16x96xf32>
    %10 = arith.addf %8, %9 : vector<16x96xf32>
    %11 = vector.extract_strided_slice %10 {offsets = [0, 0], sizes = [16, 32], strides = [1, 1]} : vector<16x96xf32> to vector<16x32xf32>
    %12 = vector.shape_cast %11 : vector<16x32xf32> to vector<2x8x32xf32>
    %13 = vector.extract_strided_slice %12 {offsets = [0, 0, 0], sizes = [2, 8, 8], strides = [1, 1, 1]} : vector<2x8x32xf32> to vector<2x8x8xf32>
    %14 = vector.extract_strided_slice %12 {offsets = [0, 0, 8], sizes = [2, 8, 8], strides = [1, 1, 1]} : vector<2x8x32xf32> to vector<2x8x8xf32>
    %15 = vector.extract_strided_slice %12 {offsets = [0, 0, 16], sizes = [2, 8, 8], strides = [1, 1, 1]} : vector<2x8x32xf32> to vector<2x8x8xf32>
    %16 = vector.extract_strided_slice %12 {offsets = [0, 0, 24], sizes = [2, 8, 8], strides = [1, 1, 1]} : vector<2x8x32xf32> to vector<2x8x8xf32>
    %17 = vector.shape_cast %13 : vector<2x8x8xf32> to vector<1x2x8x8xf32>
    %18 = vector.shape_cast %14 : vector<2x8x8xf32> to vector<1x2x8x8xf32>
    %19 = vector.shape_cast %15 : vector<2x8x8xf32> to vector<1x2x8x8xf32>
    %20 = vector.shape_cast %16 : vector<2x8x8xf32> to vector<1x2x8x8xf32>
    %21 = tpu.concatenate %17, %18, %19, %20 in 0 : vector<1x2x8x8xf32>, vector<1x2x8x8xf32>, vector<1x2x8x8xf32>, vector<1x2x8x8xf32> -> vector<4x2x8x8xf32>
    %22 = vector.shape_cast %21 : vector<4x2x8x8xf32> to vector<8x8x8xf32>
    %23 = vector.extract_strided_slice %10 {offsets = [0, 32], sizes = [16, 32], strides = [1, 1]} : vector<16x96xf32> to vector<16x32xf32>
    %24 = vector.shape_cast %23 : vector<16x32xf32> to vector<2x8x32xf32>
    %25 = vector.extract_strided_slice %24 {offsets = [0, 0, 0], sizes = [2, 8, 8], strides = [1, 1, 1]} : vector<2x8x32xf32> to vector<2x8x8xf32>
    %26 = vector.extract_strided_slice %24 {offsets = [0, 0, 8], sizes = [2, 8, 8], strides = [1, 1, 1]} : vector<2x8x32xf32> to vector<2x8x8xf32>
    %27 = vector.extract_strided_slice %24 {offsets = [0, 0, 16], sizes = [2, 8, 8], strides = [1, 1, 1]} : vector<2x8x32xf32> to vector<2x8x8xf32>
    %28 = vector.extract_strided_slice %24 {offsets = [0, 0, 24], sizes = [2, 8, 8], strides = [1, 1, 1]} : vector<2x8x32xf32> to vector<2x8x8xf32>
    %29 = vector.shape_cast %25 : vector<2x8x8xf32> to vector<1x2x8x8xf32>
    %30 = vector.shape_cast %26 : vector<2x8x8xf32> to vector<1x2x8x8xf32>
    %31 = vector.shape_cast %27 : vector<2x8x8xf32> to vector<1x2x8x8xf32>
    %32 = vector.shape_cast %28 : vector<2x8x8xf32> to vector<1x2x8x8xf32>
    %33 = tpu.concatenate %29, %30, %31, %32 in 0 : vector<1x2x8x8xf32>, vector<1x2x8x8xf32>, vector<1x2x8x8xf32>, vector<1x2x8x8xf32> -> vector<4x2x8x8xf32>
    %34 = vector.shape_cast %33 : vector<4x2x8x8xf32> to vector<8x8x8xf32>
    %35 = vector.extract_strided_slice %10 {offsets = [0, 64], sizes = [16, 32], strides = [1, 1]} : vector<16x96xf32> to vector<16x32xf32>
    %36 = vector.shape_cast %35 : vector<16x32xf32> to vector<2x8x32xf32>
    %37 = vector.extract_strided_slice %36 {offsets = [0, 0, 0], sizes = [2, 8, 8], strides = [1, 1, 1]} : vector<2x8x32xf32> to vector<2x8x8xf32>
    %38 = vector.extract_strided_slice %36 {offsets = [0, 0, 8], sizes = [2, 8, 8], strides = [1, 1, 1]} : vector<2x8x32xf32> to vector<2x8x8xf32>
    %39 = vector.extract_strided_slice %36 {offsets = [0, 0, 16], sizes = [2, 8, 8], strides = [1, 1, 1]} : vector<2x8x32xf32> to vector<2x8x8xf32>
    %40 = vector.extract_strided_slice %36 {offsets = [0, 0, 24], sizes = [2, 8, 8], strides = [1, 1, 1]} : vector<2x8x32xf32> to vector<2x8x8xf32>
    %41 = vector.shape_cast %37 : vector<2x8x8xf32> to vector<1x2x8x8xf32>
    %42 = vector.shape_cast %38 : vector<2x8x8xf32> to vector<1x2x8x8xf32>
    %43 = vector.shape_cast %39 : vector<2x8x8xf32> to vector<1x2x8x8xf32>
    %44 = vector.shape_cast %40 : vector<2x8x8xf32> to vector<1x2x8x8xf32>
    %45 = tpu.concatenate %41, %42, %43, %44 in 0 : vector<1x2x8x8xf32>, vector<1x2x8x8xf32>, vector<1x2x8x8xf32>, vector<1x2x8x8xf32> -> vector<4x2x8x8xf32>
    %46 = vector.shape_cast %45 : vector<4x2x8x8xf32> to vector<8x8x8xf32>
    "tpu.trace_start"() <{level = 10 : i32, message = "nqk,nsk->nqs"}> : () -> ()
    %cst_8 = arith.constant dense<0.000000e+00> : vector<8x8x8xf32>
    %47 = tpu.matmul %22, %34, %cst_8 {dimension_numbers = #tpu.dot_dimension_numbers<[2], [2], [1], [1], [0, 0, 0, 1, 1, 1], [0], [0]>} : vector<8x8x8xf32>, vector<8x8x8xf32>, vector<8x8x8xf32> -> vector<8x8x8xf32>
    "tpu.trace_stop"() : () -> ()
    %48 = tpu.iota {dimensions = array<i32: 0>} : vector<8x8xi32>
    %49 = tpu.iota {dimensions = array<i32: 1>} : vector<8x8xi32>
    %50 = arith.cmpi sgt, %49, %48 : vector<8x8xi32>
    %51 = vector.shape_cast %50 : vector<8x8xi1> to vector<1x8x8xi1>
    %cst_9 = arith.constant -1.000000e+30 : f32
    %52 = vector.shape_cast %51 : vector<1x8x8xi1> to vector<1x8x8xi1>
    %53 = vector.broadcast %52 : vector<1x8x8xi1> to vector<8x8x8xi1>
    %54 = vector.broadcast %cst_9 : f32 to vector<8x8x8xf32>
    %55 = arith.select %53, %54, %47 : vector<8x8x8xi1>, vector<8x8x8xf32>
    %cst_10 = arith.constant dense<0xFF800000> : vector<8x8xf32>
    %56 = vector.multi_reduction <maximumf>, %55, %cst_10 [2] : vector<8x8x8xf32> to vector<8x8xf32>
    %57 = vector.shape_cast %56 : vector<8x8xf32> to vector<8x8x1xf32>
    %58 = vector.broadcast %57 : vector<8x8x1xf32> to vector<8x8x8xf32>
    %59 = arith.subf %55, %58 : vector<8x8x8xf32>
    %60 = math.exp %59 : vector<8x8x8xf32>
    %cst_11 = arith.constant dense<0.000000e+00> : vector<8x8xf32>
    %61 = vector.multi_reduction <add>, %60, %cst_11 [2] : vector<8x8x8xf32> to vector<8x8xf32>
    %62 = vector.shape_cast %61 : vector<8x8xf32> to vector<8x8x1xf32>
    "tpu.trace_start"() <{level = 10 : i32, message = "nqs,nsk->nqk"}> : () -> ()
    %cst_12 = arith.constant dense<0.000000e+00> : vector<8x8x8xf32>
    %63 = tpu.matmul %60, %46, %cst_12 {dimension_numbers = #tpu.dot_dimension_numbers<[2], [1], [1], [2], [0, 0, 0, 1, 1, 2], [0], [0]>} : vector<8x8x8xf32>, vector<8x8x8xf32>, vector<8x8x8xf32> -> vector<8x8x8xf32>
    "tpu.trace_stop"() : () -> ()
    %64 = tpu.reciprocal %62 {approx = true} : vector<8x8x1xf32> -> vector<8x8x1xf32>
    %65 = vector.broadcast %64 : vector<8x8x1xf32> to vector<8x8x8xf32>
    %66 = arith.mulf %63, %65 : vector<8x8x8xf32>
    %67 = vector.shape_cast %66 : vector<8x8x8xf32> to vector<4x16x8xf32>
    %c0_13 = arith.constant 0 : index
    %c0_14 = arith.constant 0 : index
    %c0_15 = arith.constant 0 : index
    %68 = vector.load %arg4[%c0_13, %c0_14, %c0_15] : memref<1x32x32xf32, #tpu.memory_space<vmem>>, vector<1x32x32xf32>
    %69 = vector.shape_cast %68 : vector<1x32x32xf32> to vector<32x32xf32>
    %70 = vector.extract_strided_slice %67 {offsets = [0, 0, 0], sizes = [1, 16, 8], strides = [1, 1, 1]} : vector<4x16x8xf32> to vector<1x16x8xf32>
    %71 = vector.shape_cast %70 : vector<1x16x8xf32> to vector<16x8xf32>
    %72 = vector.extract_strided_slice %69 {offsets = [0, 0], sizes = [8, 32], strides = [1, 1]} : vector<32x32xf32> to vector<8x32xf32>
    %cst_16 = arith.constant dense<0.000000e+00> : vector<16x32xf32>
    %73 = tpu.matmul %71, %72, %cst_16 {dimension_numbers = #tpu.dot_dimension_numbers<[1], [0], [0], [1], [0, 0, 1, 1], [], []>} : vector<16x8xf32>, vector<8x32xf32>, vector<16x32xf32> -> vector<16x32xf32>
    %74 = vector.extract_strided_slice %67 {offsets = [1, 0, 0], sizes = [1, 16, 8], strides = [1, 1, 1]} : vector<4x16x8xf32> to vector<1x16x8xf32>
    %75 = vector.shape_cast %74 : vector<1x16x8xf32> to vector<16x8xf32>
    %76 = vector.extract_strided_slice %69 {offsets = [8, 0], sizes = [8, 32], strides = [1, 1]} : vector<32x32xf32> to vector<8x32xf32>
    %cst_17 = arith.constant dense<0.000000e+00> : vector<16x32xf32>
    %77 = tpu.matmul %75, %76, %cst_17 {dimension_numbers = #tpu.dot_dimension_numbers<[1], [0], [0], [1], [0, 0, 1, 1], [], []>} : vector<16x8xf32>, vector<8x32xf32>, vector<16x32xf32> -> vector<16x32xf32>
    %78 = arith.addf %73, %77 : vector<16x32xf32>
    %79 = vector.extract_strided_slice %67 {offsets = [2, 0, 0], sizes = [1, 16, 8], strides = [1, 1, 1]} : vector<4x16x8xf32> to vector<1x16x8xf32>
    %80 = vector.shape_cast %79 : vector<1x16x8xf32> to vector<16x8xf32>
    %81 = vector.extract_strided_slice %69 {offsets = [16, 0], sizes = [8, 32], strides = [1, 1]} : vector<32x32xf32> to vector<8x32xf32>
    %cst_18 = arith.constant dense<0.000000e+00> : vector<16x32xf32>
    %82 = tpu.matmul %80, %81, %cst_18 {dimension_numbers = #tpu.dot_dimension_numbers<[1], [0], [0], [1], [0, 0, 1, 1], [], []>} : vector<16x8xf32>, vector<8x32xf32>, vector<16x32xf32> -> vector<16x32xf32>
    %83 = arith.addf %78, %82 : vector<16x32xf32>
    %84 = vector.extract_strided_slice %67 {offsets = [3, 0, 0], sizes = [1, 16, 8], strides = [1, 1, 1]} : vector<4x16x8xf32> to vector<1x16x8xf32>
    %85 = vector.shape_cast %84 : vector<1x16x8xf32> to vector<16x8xf32>
    %86 = vector.extract_strided_slice %69 {offsets = [24, 0], sizes = [8, 32], strides = [1, 1]} : vector<32x32xf32> to vector<8x32xf32>
    %cst_19 = arith.constant dense<0.000000e+00> : vector<16x32xf32>
    %87 = tpu.matmul %85, %86, %cst_19 {dimension_numbers = #tpu.dot_dimension_numbers<[1], [0], [0], [1], [0, 0, 1, 1], [], []>} : vector<16x8xf32>, vector<8x32xf32>, vector<16x32xf32> -> vector<16x32xf32>
    %88 = arith.addf %83, %87 : vector<16x32xf32>
    %89 = arith.addf %3, %88 : vector<16x32xf32>
    %c0_20 = arith.constant 0 : index
    %c0_21 = arith.constant 0 : index
    %c0_22 = arith.constant 0 : index
    %90 = vector.load %arg5[%c0_20, %c0_21, %c0_22] : memref<1x1x32xf32, #tpu.memory_space<vmem>>, vector<1x1x32xf32>
    %91 = vector.shape_cast %90 : vector<1x1x32xf32> to vector<1x32xf32>
    %92 = vector.broadcast %91 : vector<1x32xf32> to vector<16x32xf32>
    %93 = arith.addf %89, %92 : vector<16x32xf32>
    %c0_23 = arith.constant 0 : index
    %c0_24 = arith.constant 0 : index
    %c0_25 = arith.constant 0 : index
    %94 = vector.load %arg6[%c0_23, %c0_24, %c0_25] : memref<1x32x64xf32, #tpu.memory_space<vmem>>, vector<1x32x64xf32>
    %95 = vector.shape_cast %94 : vector<1x32x64xf32> to vector<32x64xf32>
    %c0_26 = arith.constant 0 : index
    %c0_27 = arith.constant 0 : index
    %c0_28 = arith.constant 0 : index
    %96 = vector.load %arg7[%c0_26, %c0_27, %c0_28] : memref<1x1x64xf32, #tpu.memory_space<vmem>>, vector<1x1x64xf32>
    %97 = vector.shape_cast %96 : vector<1x1x64xf32> to vector<1x64xf32>
    %cst_29 = arith.constant dense<0.000000e+00> : vector<16x64xf32>
    %98 = tpu.matmul %93, %95, %cst_29 {dimension_numbers = #tpu.dot_dimension_numbers<[1], [0], [0], [1], [0, 0, 1, 1], [], []>} : vector<16x32xf32>, vector<32x64xf32>, vector<16x64xf32> -> vector<16x64xf32>
    %99 = vector.broadcast %97 : vector<1x64xf32> to vector<16x64xf32>
    %100 = arith.addf %98, %99 : vector<16x64xf32>
    %cst_30 = arith.constant 0.000000e+00 : f32
    %101 = vector.broadcast %cst_30 : f32 to vector<16x64xf32>
    %102 = arith.maximumf %100, %101 : vector<16x64xf32>
    %c0_31 = arith.constant 0 : index
    %c0_32 = arith.constant 0 : index
    %c0_33 = arith.constant 0 : index
    %103 = vector.load %arg8[%c0_31, %c0_32, %c0_33] : memref<1x64x32xf32, #tpu.memory_space<vmem>>, vector<1x64x32xf32>
    %104 = vector.shape_cast %103 : vector<1x64x32xf32> to vector<64x32xf32>
    %c0_34 = arith.constant 0 : index
    %c0_35 = arith.constant 0 : index
    %c0_36 = arith.constant 0 : index
    %105 = vector.load %arg9[%c0_34, %c0_35, %c0_36] : memref<1x1x32xf32, #tpu.memory_space<vmem>>, vector<1x1x32xf32>
    %106 = vector.shape_cast %105 : vector<1x1x32xf32> to vector<1x32xf32>
    %cst_37 = arith.constant dense<0.000000e+00> : vector<16x32xf32>
    %107 = tpu.matmul %102, %104, %cst_37 {dimension_numbers = #tpu.dot_dimension_numbers<[1], [0], [0], [1], [0, 0, 1, 1], [], []>} : vector<16x64xf32>, vector<64x32xf32>, vector<16x32xf32> -> vector<16x32xf32>
    %108 = vector.broadcast %106 : vector<1x32xf32> to vector<16x32xf32>
    %109 = arith.addf %107, %108 : vector<16x32xf32>
    %110 = arith.addf %93, %109 : vector<16x32xf32>
    %c0_38 = arith.constant 0 : index
    %c0_39 = arith.constant 0 : index
    %111 = vector.load %arg10[%c0_38, %c0_39] : memref<16x32xf32, #tpu.memory_space<vmem>>, vector<16x32xf32>
    tpu.vector_store %arg10[%c0_38, %c0_39], %110 {strides = array<i32>} : memref<16x32xf32, #tpu.memory_space<vmem>>, vector<16x32xf32>,
    return
  }
  func.func @transform_0(%arg0: i32) -> (i32, i32) {
    %c0_i32 = arith.constant 0 : i32
    %c0_i32_0 = arith.constant 0 : i32
    %c0_i32_1 = arith.constant 0 : i32
    return %c0_i32, %c0_i32_0 : i32, i32
  }
  func.func @transform_1(%arg0: i32) -> (i32, i32, i32) {
    %c0_i32 = arith.constant 0 : i32
    %c0_i32_0 = arith.constant 0 : i32
    %c0_i32_1 = arith.constant 0 : i32
    return %arg0, %c0_i32, %c0_i32_0 : i32, i32, i32
  }
  func.func @transform_2(%arg0: i32) -> (i32, i32, i32) {
    %c0_i32 = arith.constant 0 : i32
    %c0_i32_0 = arith.constant 0 : i32
    %c0_i32_1 = arith.constant 0 : i32
    return %arg0, %c0_i32, %c0_i32_0 : i32, i32, i32
  }
  func.func @transform_3(%arg0: i32) -> (i32, i32, i32) {
    %c0_i32 = arith.constant 0 : i32
    %c0_i32_0 = arith.constant 0 : i32
    %c0_i32_1 = arith.constant 0 : i32
    return %arg0, %c0_i32, %c0_i32_0 : i32, i32, i32
  }
  func.func @transform_4(%arg0: i32) -> (i32, i32, i32) {
    %c0_i32 = arith.constant 0 : i32
    %c0_i32_0 = arith.constant 0 : i32
    %c0_i32_1 = arith.constant 0 : i32
    return %arg0, %c0_i32, %c0_i32_0 : i32, i32, i32
  }
  func.func @transform_5(%arg0: i32) -> (i32, i32, i32) {
    %c0_i32 = arith.constant 0 : i32
    %c0_i32_0 = arith.constant 0 : i32
    %c0_i32_1 = arith.constant 0 : i32
    return %arg0, %c0_i32, %c0_i32_0 : i32, i32, i32
  }
  func.func @transform_6(%arg0: i32) -> (i32, i32, i32) {
    %c0_i32 = arith.constant 0 : i32
    %c0_i32_0 = arith.constant 0 : i32
    %c0_i32_1 = arith.constant 0 : i32
    return %arg0, %c0_i32, %c0_i32_0 : i32, i32, i32
  }
  func.func @transform_7(%arg0: i32) -> (i32, i32, i32) {
    %c0_i32 = arith.constant 0 : i32
    %c0_i32_0 = arith.constant 0 : i32
    %c0_i32_1 = arith.constant 0 : i32
    return %arg0, %c0_i32, %c0_i32_0 : i32, i32, i32
  }
  func.func @transform_8(%arg0: i32) -> (i32, i32, i32) {
    %c0_i32 = arith.constant 0 : i32
    %c0_i32_0 = arith.constant 0 : i32
    %c0_i32_1 = arith.constant 0 : i32
    return %arg0, %c0_i32, %c0_i32_0 : i32, i32, i32
  }
  func.func @transform_9(%arg0: i32) -> (i32, i32) {
    %c0_i32 = arith.constant 0 : i32
    %c0_i32_0 = arith.constant 0 : i32
    %c0_i32_1 = arith.constant 0 : i32
    return %c0_i32, %c0_i32_0 : i32, i32
  }
}

</mosaic_0001>

<llo_original>
// kernel: transformer_forward.1
$region0: #{transformer_forward.1}
  #allocation0 [shape = 'u32[]', space=smem, size = 0x4, offset = 0x4, fixed_abs, tag = 'smem constant byte address 0x4 - core index']
  #allocation1 [shape = 'u32[144,128]{1,0:T(1,128)}', space=vmem, size = 0x12000, scoped, tag = 'internal scratch']
  %s0 = inlined_call_operand.vmem [shape: f32[16,32], index: 0, kind: input, shape index: {}, may-alias: {0,9}]
  %s1 = inlined_call_operand.vmem [shape: f32[2,32,96], index: 1, kind: input, shape index: {}]
  %s2 = inlined_call_operand.vmem [shape: f32[2,1,96], index: 2, kind: input, shape index: {}]
  %s3 = inlined_call_operand.vmem [shape: f32[2,32,32], index: 3, kind: input, shape index: {}]
  %s4 = inlined_call_operand.vmem [shape: f32[2,1,32], index: 4, kind: input, shape index: {}]
  %s5 = inlined_call_operand.vmem [shape: f32[2,32,64], index: 5, kind: input, shape index: {}]
  %s6 = inlined_call_operand.vmem [shape: f32[2,1,64], index: 6, kind: input, shape index: {}]
  %s7 = inlined_call_operand.vmem [shape: f32[2,64,32], index: 7, kind: input, shape index: {}]
  %s8 = inlined_call_operand.vmem [shape: f32[2,1,32], index: 8, kind: input, shape index: {}]
  %s9 = inlined_call_operand.vmem [shape: f32[16,32], index: 9, kind: output, shape index: {}, may-alias: {0,9}]
  %s10 = sld [smem:[#allocation0]]
  $region73: #{transformer_forward.1} parent=0
    _
  %s12 = ssub.s32 1, %s10
  %s13 = scalar_select 0, %s12, %s10
  loop: start=0, step=1, limit=4
  $region2: #{transformer_forward.1} parent=0 // loop_pre_header
    _
  $region3: #{transformer_forward.1} parent=0 // loop_header
    %s15 = sphi 0, %s19
    %p16 = scmp.ge.s32.totalorder %s15, 4
    %s23 = sphi 0, %s23
    %s25 = sphi 0, %s23
    %s26 = sphi 0, %s25
    %s40 = sphi 0, %s26
    %s46 = sphi 0, %s48
    %s49 = sphi 0, %s46
    %s50 = sphi 0, %s49
    %s66 = sphi 0, %s50
    %s72 = sphi 0, %s74
    %s75 = sphi 0, %s72
    %s76 = sphi 0, %s75
    %s92 = sphi 0, %s76
    %s98 = sphi 0, %s100
    %s101 = sphi 0, %s98
    %s102 = sphi 0, %s101
    %s118 = sphi 0, %s102
    %s124 = sphi 0, %s126
    %s127 = sphi 0, %s124
    %s128 = sphi 0, %s127
    %s144 = sphi 0, %s128
    %s150 = sphi 0, %s152
    %s153 = sphi 0, %s150
    %s154 = sphi 0, %s153
    %s170 = sphi 0, %s154
    %s176 = sphi 0, %s178
    %s179 = sphi 0, %s176
    %s180 = sphi 0, %s179
    %s196 = sphi 0, %s180
    %s202 = sphi 0, %s204
    %s205 = sphi 0, %s202
    %s206 = sphi 0, %s205
    %s222 = sphi 0, %s206
    %s228 = sphi 0, %s230
    %s231 = sphi 0, %s228
    %s232 = sphi 0, %s231
    %s248 = sphi 0, %s232
    %s252 = sphi 0, %s252
    %s254 = sphi 0, %s252
    %s255 = sphi 0, %s254
    %s269 = sphi 0, %s255
  $region4: #{transformer_forward.1} parent=0 // loop_header_branch
    %18 = sbr.rel (%p16) target = $region8
  $region5: #{transformer_forward.1} parent=0 // loop_body
    %s20 = ssub.s32 %s15, 1
    %s21 = ssub.s32 %s15, 2
    %s22 = sadd.s32 %s15, 1
    %s24 = sadd.s32 %s23, 1
    %p27 = scmp.eq.s32.totalorder %s15, 1
    %p28 = scmp.ne.s32.totalorder %s23, %s25
    %p29 = scmp.eq.s32.totalorder %s15, 0
    %p30 = por %p28, %p29
    %p31 = scmp.ne.s32.totalorder %s23, %s25
    %p32 = scmp.eq.s32.totalorder %s20, 1
    %p33 = por %p31, %p32
    %p34 = scmp.ne.s32.totalorder %s25, %s26
    %p35 = scmp.eq.s32.totalorder %s20, 0
    %p36 = por %p34, %p35
    %p37 = scmp.ne.s32.totalorder %s25, %s26
    %p38 = scmp.eq.s32.totalorder %s21, 1
    %p39 = por %p37, %p38
    %p41 = scmp.ne.s32.totalorder %s26, %s40
    %p42 = scmp.eq.s32.totalorder %s21, 0
    %p43 = por %p41, %p42
    %s44 = ssub.s32 %s15, %s22
    %p45 = scmp.eq.s32.totalorder %s44, 0
    %s47 = sadd.s32 %s46, 1
    %s48 = scalar_select %p45, %s46, %s47
    %p51 = pneg %p45
    %p52 = scmp.eq.s32.totalorder %s15, 1
    %p53 = por %p51, %p52
    %p54 = scmp.ne.s32.totalorder %s46, %s49
    %p55 = scmp.eq.s32.totalorder %s15, 0
    %p56 = por %p54, %p55
    %p57 = scmp.ne.s32.totalorder %s46, %s49
    %p58 = scmp.eq.s32.totalorder %s20, 1
    %p59 = por %p57, %p58
    %p60 = scmp.ne.s32.totalorder %s49, %s50
    %p61 = scmp.eq.s32.totalorder %s20, 0
    %p62 = por %p60, %p61
    %p63 = scmp.ne.s32.totalorder %s49, %s50
    %p64 = scmp.eq.s32.totalorder %s21, 1
    %p65 = por %p63, %p64
    %p67 = scmp.ne.s32.totalorder %s50, %s66
    %p68 = scmp.eq.s32.totalorder %s21, 0
    %p69 = por %p67, %p68
    %s70 = ssub.s32 %s15, %s22
    %p71 = scmp.eq.s32.totalorder %s70, 0
    %s73 = sadd.s32 %s72, 1
    %s74 = scalar_select %p71, %s72, %s73
    %p77 = pneg %p71
    %p78 = scmp.eq.s32.totalorder %s15, 1
    %p79 = por %p77, %p78
    %p80 = scmp.ne.s32.totalorder %s72, %s75
    %p81 = scmp.eq.s32.totalorder %s15, 0
    %p82 = por %p80, %p81
    %p83 = scmp.ne.s32.totalorder %s72, %s75
    %p84 = scmp.eq.s32.totalorder %s20, 1
    %p85 = por %p83, %p84
    %p86 = scmp.ne.s32.totalorder %s75, %s76
    %p87 = scmp.eq.s32.totalorder %s20, 0
    %p88 = por %p86, %p87
    %p89 = scmp.ne.s32.totalorder %s75, %s76
    %p90 = scmp.eq.s32.totalorder %s21, 1
    %p91 = por %p89, %p90
    %p93 = scmp.ne.s32.totalorder %s76, %s92
    %p94 = scmp.eq.s32.totalorder %s21, 0
    %p95 = por %p93, %p94
    %s96 = ssub.s32 %s15, %s22
    %p97 = scmp.eq.s32.totalorder %s96, 0
    %s99 = sadd.s32 %s98, 1
    %s100 = scalar_select %p97, %s98, %s99
    %p103 = pneg %p97
    %p104 = scmp.eq.s32.totalorder %s15, 1
    %p105 = por %p103, %p104
    %p106 = scmp.ne.s32.totalorder %s98, %s101
    %p107 = scmp.eq.s32.totalorder %s15, 0
    %p108 = por %p106, %p107
    %p109 = scmp.ne.s32.totalorder %s98, %s101
    %p110 = scmp.eq.s32.totalorder %s20, 1
    %p111 = por %p109, %p110
    %p112 = scmp.ne.s32.totalorder %s101, %s102
    %p113 = scmp.eq.s32.totalorder %s20, 0
    %p114 = por %p112, %p113
    %p115 = scmp.ne.s32.totalorder %s101, %s102
    %p116 = scmp.eq.s32.totalorder %s21, 1
    %p117 = por %p115, %p116
    %p119 = scmp.ne.s32.totalorder %s102, %s118
    %p120 = scmp.eq.s32.totalorder %s21, 0
    %p121 = por %p119, %p120
    %s122 = ssub.s32 %s15, %s22
    %p123 = scmp.eq.s32.totalorder %s122, 0
    %s125 = sadd.s32 %s124, 1
    %s126 = scalar_select %p123, %s124, %s125
    %p129 = pneg %p123
    %p130 = scmp.eq.s32.totalorder %s15, 1
    %p131 = por %p129, %p130
    %p132 = scmp.ne.s32.totalorder %s124, %s127
    %p133 = scmp.eq.s32.totalorder %s15, 0
    %p134 = por %p132, %p133
    %p135 = scmp.ne.s32.totalorder %s124, %s127
    %p136 = scmp.eq.s32.totalorder %s20, 1
    %p137 = por %p135, %p136
    %p138 = scmp.ne.s32.totalorder %s127, %s128
    %p139 = scmp.eq.s32.totalorder %s20, 0
    %p140 = por %p138, %p139
    %p141 = scmp.ne.s32.totalorder %s127, %s128
    %p142 = scmp.eq.s32.totalorder %s21, 1
    %p143 = por %p141, %p142
    %p145 = scmp.ne.s32.totalorder %s128, %s144
    %p146 = scmp.eq.s32.totalorder %s21, 0
    %p147 = por %p145, %p146
    %s148 = ssub.s32 %s15, %s22
    %p149 = scmp.eq.s32.totalorder %s148, 0
    %s151 = sadd.s32 %s150, 1
    %s152 = scalar_select %p149, %s150, %s151
    %p155 = pneg %p149
    %p156 = scmp.eq.s32.totalorder %s15, 1
    %p157 = por %p155, %p156
    %p158 = scmp.ne.s32.totalorder %s150, %s153
    %p159 = scmp.eq.s32.totalorder %s15, 0
    %p160 = por %p158, %p159
    %p161 = scmp.ne.s32.totalorder %s150, %s153
    %p162 = scmp.eq.s32.totalorder %s20, 1
    %p163 = por %p161, %p162
    %p164 = scmp.ne.s32.totalorder %s153, %s154
    %p165 = scmp.eq.s32.totalorder %s20, 0
    %p166 = por %p164, %p165
    %p167 = scmp.ne.s32.totalorder %s153, %s154
    %p168 = scmp.eq.s32.totalorder %s21, 1
    %p169 = por %p167, %p168
    %p171 = scmp.ne.s32.totalorder %s154, %s170
    %p172 = scmp.eq.s32.totalorder %s21, 0
    %p173 = por %p171, %p172
    %s174 = ssub.s32 %s15, %s22
    %p175 = scmp.eq.s32.totalorder %s174, 0
    %s177 = sadd.s32 %s176, 1
    %s178 = scalar_select %p175, %s176, %s177
    %p181 = pneg %p175
    %p182 = scmp.eq.s32.totalorder %s15, 1
    %p183 = por %p181, %p182
    %p184 = scmp.ne.s32.totalorder %s176, %s179
    %p185 = scmp.eq.s32.totalorder %s15, 0
    %p186 = por %p184, %p185
    %p187 = scmp.ne.s32.totalorder %s176, %s179
    %p188 = scmp.eq.s32.totalorder %s20, 1
    %p189 = por %p187, %p188
    %p190 = scmp.ne.s32.totalorder %s179, %s180
    %p191 = scmp.eq.s32.totalorder %s20, 0
    %p192 = por %p190, %p191
    %p193 = scmp.ne.s32.totalorder %s179, %s180
    %p194 = scmp.eq.s32.totalorder %s21, 1
    %p195 = por %p193, %p194
    %p197 = scmp.ne.s32.totalorder %s180, %s196
    %p198 = scmp.eq.s32.totalorder %s21, 0
    %p199 = por %p197, %p198
    %s200 = ssub.s32 %s15, %s22
    %p201 = scmp.eq.s32.totalorder %s200, 0
    %s203 = sadd.s32 %s202, 1
    %s204 = scalar_select %p201, %s202, %s203
    %p207 = pneg %p201
    %p208 = scmp.eq.s32.totalorder %s15, 1
    %p209 = por %p207, %p208
    %p210 = scmp.ne.s32.totalorder %s202, %s205
    %p211 = scmp.eq.s32.totalorder %s15, 0
    %p212 = por %p210, %p211
    %p213 = scmp.ne.s32.totalorder %s202, %s205
    %p214 = scmp.eq.s32.totalorder %s20, 1
    %p215 = por %p213, %p214
    %p216 = scmp.ne.s32.totalorder %s205, %s206
    %p217 = scmp.eq.s32.totalorder %s20, 0
    %p218 = por %p216, %p217
    %p219 = scmp.ne.s32.totalorder %s205, %s206
    %p220 = scmp.eq.s32.totalorder %s21, 1
    %p221 = por %p219, %p220
    %p223 = scmp.ne.s32.totalorder %s206, %s222
    %p224 = scmp.eq.s32.totalorder %s21, 0
    %p225 = por %p223, %p224
    %s226 = ssub.s32 %s15, %s22
    %p227 = scmp.eq.s32.totalorder %s226, 0
    %s229 = sadd.s32 %s228, 1
    %s230 = scalar_select %p227, %s228, %s229
    %p233 = pneg %p227
    %p234 = scmp.eq.s32.totalorder %s15, 1
    %p235 = por %p233, %p234
    %p236 = scmp.ne.s32.totalorder %s228, %s231
    %p237 = scmp.eq.s32.totalorder %s15, 0
    %p238 = por %p236, %p237
    %p239 = scmp.ne.s32.totalorder %s228, %s231
    %p240 = scmp.eq.s32.totalorder %s20, 1
    %p241 = por %p239, %p240
    %p242 = scmp.ne.s32.totalorder %s231, %s232
    %p243 = scmp.eq.s32.totalorder %s20, 0
    %p244 = por %p242, %p243
    %p245 = scmp.ne.s32.totalorder %s231, %s232
    %p246 = scmp.eq.s32.totalorder %s21, 1
    %p247 = por %p245, %p246
    %p249 = scmp.ne.s32.totalorder %s232, %s248
    %p250 = scmp.eq.s32.totalorder %s21, 0
    %p251 = por %p249, %p250
    %s253 = sadd.s32 %s252, 1
    %p256 = scmp.eq.s32.totalorder %s15, 1
    %p257 = scmp.ne.s32.totalorder %s252, %s254
    %p258 = scmp.eq.s32.totalorder %s15, 0
    %p259 = por %p257, %p258
    %p260 = scmp.ne.s32.totalorder %s252, %s254
    %p261 = scmp.eq.s32.totalorder %s20, 1
    %p262 = por %p260, %p261
    %p263 = scmp.ne.s32.totalorder %s254, %s255
    %p264 = scmp.eq.s32.totalorder %s20, 0
    %p265 = por %p263, %p264
    %p266 = scmp.ne.s32.totalorder %s254, %s255
    %p267 = scmp.eq.s32.totalorder %s21, 1
    %p268 = por %p266, %p267
    %p270 = scmp.ne.s32.totalorder %s255, %s269
    %p271 = scmp.eq.s32.totalorder %s21, 0
    %p272 = por %p270, %p271
    %p273 = scmp.le.s32.totalorder 1, %s15
    %p274 = scmp.lt.s32.totalorder %s15, 3
    %p275 = pnand %p273, %p274
    %p276 = pneg %p275
    // Predicated region
    $region9: #{transformer_forward.1} parent=5 // pred_check
      _
    $region10: #{transformer_forward.1} parent=5 // pred_check_branch
      %278 = sbr.rel (%p275) target = $region12
    $region11: #{transformer_forward.1} parent=5 // pred_region
      %s279 = ssub.s32 %s15, 1
      // Predicated region
      $region13: #{transformer_forward.1} parent=11 // pred_check
        %p280 = pneg %p36
      $region14: #{transformer_forward.1} parent=11 // pred_check_branch
        %282 = sbr.rel (%p280) target = $region16
      $region15: #{transformer_forward.1} parent=11 // pred_region
        _
      $region16: #{transformer_forward.1} parent=11 // pred_fallthru
        _
    $region12: #{transformer_forward.1} parent=5 // pred_fallthru
      _
    %p283 = scmp.lt.s32.totalorder %s15, 2
    // Predicated region
    $region17: #{transformer_forward.1} parent=5 // pred_check
      %p284 = pneg %p283
    $region18: #{transformer_forward.1} parent=5 // pred_check_branch
      %286 = sbr.rel (%p284) target = $region20
    $region19: #{transformer_forward.1} parent=5 // pred_region
      // Predicated region
      $region21: #{transformer_forward.1} parent=19 // pred_check
        %p287 = pneg %p56
      $region22: #{transformer_forward.1} parent=19 // pred_check_branch
        %289 = sbr.rel (%p287) target = $region24
      $region23: #{transformer_forward.1} parent=19 // pred_region
        %p290 = scmp.lt.s32.totalorder %s15, 1
        %s291 = scalar_select %p290, %s15, 1
        %s292 = smul.addr %s291, 4
        %s293 = smul.addr %s292, 8
        %s294 = scalar_lea.vmem %s1, %s293
      $region24: #{transformer_forward.1} parent=19 // pred_fallthru
        _
      // Predicated region
      $region25: #{transformer_forward.1} parent=19 // pred_check
        %p295 = pneg %p82
      $region26: #{transformer_forward.1} parent=19 // pred_check_branch
        %297 = sbr.rel (%p295) target = $region28
      $region27: #{transformer_forward.1} parent=19 // pred_region
        %p298 = scmp.lt.s32.totalorder %s15, 1
        %s299 = scalar_select %p298, %s15, 1
        %s300 = scalar_lea.vmem %s2, %s299
      $region28: #{transformer_forward.1} parent=19 // pred_fallthru
        _
      // Predicated region
      $region29: #{transformer_forward.1} parent=19 // pred_check
        %p301 = pneg %p108
      $region30: #{transformer_forward.1} parent=19 // pred_check_branch
        %303 = sbr.rel (%p301) target = $region32
      $region31: #{transformer_forward.1} parent=19 // pred_region
        %p304 = scmp.lt.s32.totalorder %s15, 1
        %s305 = scalar_select %p304, %s15, 1
        %s306 = smul.addr %s305, 4
        %s307 = smul.addr %s306, 8
        %s308 = scalar_lea.vmem %s3, %s307
      $region32: #{transformer_forward.1} parent=19 // pred_fallthru
        _
      // Predicated region
      $region33: #{transformer_forward.1} parent=19 // pred_check
        %p309 = pneg %p134
      $region34: #{transformer_forward.1} parent=19 // pred_check_branch
        %311 = sbr.rel (%p309) target = $region36
      $region35: #{transformer_forward.1} parent=19 // pred_region
        %p312 = scmp.lt.s32.totalorder %s15, 1
        %s313 = scalar_select %p312, %s15, 1
        %s314 = scalar_lea.vmem %s4, %s313
      $region36: #{transformer_forward.1} parent=19 // pred_fallthru
        _
      // Predicated region
      $region37: #{transformer_forward.1} parent=19 // pred_check
        %p315 = pneg %p160
      $region38: #{transformer_forward.1} parent=19 // pred_check_branch
        %317 = sbr.rel (%p315) target = $region40
      $region39: #{transformer_forward.1} parent=19 // pred_region
        %p318 = scmp.lt.s32.totalorder %s15, 1
        %s319 = scalar_select %p318, %s15, 1
        %s320 = smul.addr %s319, 4
        %s321 = smul.addr %s320, 8
        %s322 = scalar_lea.vmem %s5, %s321
      $region40: #{transformer_forward.1} parent=19 // pred_fallthru
        _
      // Predicated region
      $region41: #{transformer_forward.1} parent=19 // pred_check
        %p323 = pneg %p186
      $region42: #{transformer_forward.1} parent=19 // pred_check_branch
        %325 = sbr.rel (%p323) target = $region44
      $region43: #{transformer_forward.1} parent=19 // pred_region
        %p326 = scmp.lt.s32.totalorder %s15, 1
        %s327 = scalar_select %p326, %s15, 1
        %s328 = scalar_lea.vmem %s6, %s327
      $region44: #{transformer_forward.1} parent=19 // pred_fallthru
        _
      // Predicated region
      $region45: #{transformer_forward.1} parent=19 // pred_check
        %p329 = pneg %p212
      $region46: #{transformer_forward.1} parent=19 // pred_check_branch
        %331 = sbr.rel (%p329) target = $region48
      $region47: #{transformer_forward.1} parent=19 // pred_region
        %p332 = scmp.lt.s32.totalorder %s15, 1
        %s333 = scalar_select %p332, %s15, 1
        %s334 = smul.addr %s333, 8
        %s335 = smul.addr %s334, 8
        %s336 = scalar_lea.vmem %s7, %s335
      $region48: #{transformer_forward.1} parent=19 // pred_fallthru
        _
      // Predicated region
      $region49: #{transformer_forward.1} parent=19 // pred_check
        %p337 = pneg %p238
      $region50: #{transformer_forward.1} parent=19 // pred_check_branch
        %339 = sbr.rel (%p337) target = $region52
      $region51: #{transformer_forward.1} parent=19 // pred_region
        %p340 = scmp.lt.s32.totalorder %s15, 1
        %s341 = scalar_select %p340, %s15, 1
        %s342 = scalar_lea.vmem %s8, %s341
      $region52: #{transformer_forward.1} parent=19 // pred_fallthru
        _
    $region20: #{transformer_forward.1} parent=5 // pred_fallthru
      _
    %p343 = scmp.le.s32.totalorder 1, %s15
    %p344 = scmp.lt.s32.totalorder %s15, 3
    %p345 = pnand %p343, %p344
    %p346 = pneg %p345
    // Predicated region
    $region53: #{transformer_forward.1} parent=5 // pred_check
      _
    $region54: #{transformer_forward.1} parent=5 // pred_check_branch
      %348 = sbr.rel (%p345) target = $region56
    $region55: #{transformer_forward.1} parent=5 // pred_region
      %s349 = ssub.s32 %s15, 1
      %p350 = pneg %p36
      %p351 = pneg %p33
      %p352 = scmp.lt.s32.totalorder %s20, 1
      %s353 = scalar_select %p352, %s20, 1
      %s354 = smul.addr %s353, 4
      %s355 = smul.addr %s354, 8
      %s356 = scalar_lea.vmem %s1, %s355
      %p357 = pneg %p62
      %p358 = pneg %p59
      %p359 = scmp.lt.s32.totalorder %s20, 1
      %s360 = scalar_select %p359, %s20, 1
      %s361 = scalar_lea.vmem %s2, %s360
      %p362 = pneg %p88
      %p363 = pneg %p85
      %p364 = scmp.lt.s32.totalorder %s20, 1
      %s365 = scalar_select %p364, %s20, 1
      %s366 = smul.addr %s365, 4
      %s367 = smul.addr %s366, 8
      %s368 = scalar_lea.vmem %s3, %s367
      %p369 = pneg %p114
      %p370 = pneg %p111
      %p371 = scmp.lt.s32.totalorder %s20, 1
      %s372 = scalar_select %p371, %s20, 1
      %s373 = scalar_lea.vmem %s4, %s372
      %p374 = pneg %p140
      %p375 = pneg %p137
      %p376 = scmp.lt.s32.totalorder %s20, 1
      %s377 = scalar_select %p376, %s20, 1
      %s378 = smul.addr %s377, 4
      %s379 = smul.addr %s378, 8
      %s380 = scalar_lea.vmem %s5, %s379
      %p381 = pneg %p166
      %p382 = pneg %p163
      %p383 = scmp.lt.s32.totalorder %s20, 1
      %s384 = scalar_select %p383, %s20, 1
      %s385 = scalar_lea.vmem %s6, %s384
      %p386 = pneg %p192
      %p387 = pneg %p189
      %p388 = scmp.lt.s32.totalorder %s20, 1
      %s389 = scalar_select %p388, %s20, 1
      %s390 = smul.addr %s389, 8
      %s391 = smul.addr %s390, 8
      %s392 = scalar_lea.vmem %s7, %s391
      %p393 = pneg %p218
      %p394 = pneg %p215
      %p395 = scmp.lt.s32.totalorder %s20, 1
      %s396 = scalar_select %p395, %s20, 1
      %s397 = scalar_lea.vmem %s8, %s396
      %p398 = pneg %p244
      %p399 = pneg %p241
      %p400 = pneg %p265
      %p401 = pneg %p262
      %p402 = scmp.lt.s32.totalorder %s20, 1
      %s403 = scalar_select %p402, %s20, 1
      %s404 = smul.addr %s403, 4
      %s405 = smul.addr %s404, 8
      %s406 = scalar_lea.vmem %s1, %s405
      %p407 = scmp.lt.s32.totalorder %s20, 1
      %s408 = scalar_select %p407, %s20, 1
      %s409 = scalar_lea.vmem %s2, %s408
      %p410 = scmp.lt.s32.totalorder %s20, 1
      %s411 = scalar_select %p410, %s20, 1
      %s412 = smul.addr %s411, 4
      %s413 = smul.addr %s412, 8
      %s414 = scalar_lea.vmem %s3, %s413
      %p415 = scmp.lt.s32.totalorder %s20, 1
      %s416 = scalar_select %p415, %s20, 1
      %s417 = scalar_lea.vmem %s4, %s416
      %p418 = scmp.lt.s32.totalorder %s20, 1
      %s419 = scalar_select %p418, %s20, 1
      %s420 = smul.addr %s419, 4
      %s421 = smul.addr %s420, 8
      %s422 = scalar_lea.vmem %s5, %s421
      %p423 = scmp.lt.s32.totalorder %s20, 1
      %s424 = scalar_select %p423, %s20, 1
      %s425 = scalar_lea.vmem %s6, %s424
      %p426 = scmp.lt.s32.totalorder %s20, 1
      %s427 = scalar_select %p426, %s20, 1
      %s428 = smul.addr %s427, 8
      %s429 = smul.addr %s428, 8
      %s430 = scalar_lea.vmem %s7, %s429
      %p431 = scmp.lt.s32.totalorder %s20, 1
      %s432 = scalar_select %p431, %s20, 1
      %s433 = scalar_lea.vmem %s8, %s432
      %p434 = scmp.eq.s32.totalorder %s20, 0
      // Predicated region
      $region57: #{transformer_forward.1} parent=55 // pred_check
        %p435 = pneg %p434
      $region58: #{transformer_forward.1} parent=55 // pred_check_branch
        %437 = sbr.rel (%p435) target = $region60
      $region59: #{transformer_forward.1} parent=55 // pred_region
        %v438 = vld [vmem:[%s0] sm:$0xff]
        %v439 = vld [vmem:[%s0 + $0x8] sm:$0xff]
        %vm440 = vcmask 261120
        %441 = vst.msk [vmem:[%s9] sm:$0xff] %vm440, %v438
        %442 = vst.msk [vmem:[%s9 + $0x8] sm:$0xff] %vm440, %v439
      $region60: #{transformer_forward.1} parent=55 // pred_fallthru
        _
      %v443 = vld [vmem:[%s9] sm:$0xff]
      %v444 = vld [vmem:[%s9 + $0x8] sm:$0xff]
      %v445 = vld [vmem:[%s406] sm:$0xff]
      %v446 = vld [vmem:[%s406 + $0x8] sm:$0xff]
      %v447 = vld [vmem:[%s406 + $0x10] sm:$0xff]
      %v448 = vld [vmem:[%s406 + $0x18] sm:$0xff]
      %v449 = vld [vmem:[%s409] sm:$0x1]
      %v451 = vlaneseq
      %v452 = vshrl.u32 %v451, 7
      %v453 = vsub.s32 0, %v452
      %v454 = vrot.slane %v449, %v453
      %vm456 = vcmask 261120
      %v458 = vsel %vm456, %v443, 0
      %v461 = vsel %vm456, %v444, 0
      %463 = vmatprep.subr.mxu0 0.0
      %464 = vmatpush1.msra.mxu0 %v445
      %465 = vmatprep.subr.mxu0 0.0
      %466 = vmatpush1.msra.mxu0 %v446
      %467 = vmatprep.subr.mxu0 0.0
      %468 = vmatpush1.msra.mxu0 %v447
      %469 = vmatprep.subr.mxu0 0.0
      %470 = vmatpush1.msra.mxu0 %v448
      %471 = vmatprep.subr.mxu0 0.0
      %472 = vmatpush1.msra.mxu0 0.0
      %473 = vmatprep.subr.mxu0 0.0
      %474 = vmatpush1.msra.mxu0 0.0
      %475 = vmatprep.subr.mxu0 0.0
      %476 = vmatpush1.msra.mxu0 0.0
      %477 = vmatprep.subr.mxu0 0.0
      %478 = vmatpush1.msra.mxu0 0.0
      %479 = vmatprep.subr.mxu0 0.0
      %480 = vmatpush1.msra.mxu0 0.0
      %481 = vmatprep.subr.mxu0 0.0
      %482 = vmatpush1.msra.mxu0 0.0
      %483 = vmatprep.subr.mxu0 0.0
      %484 = vmatpush1.msra.mxu0 0.0
      %485 = vmatprep.subr.mxu0 0.0
      %486 = vmatpush1.msra.mxu0 0.0
      %487 = vmatprep.subr.mxu0 0.0
      %488 = vmatpush1.msra.mxu0 0.0
      %489 = vmatprep.subr.mxu0 0.0
      %490 = vmatpush1.msra.mxu0 0.0
      %491 = vmatprep.subr.mxu0 0.0
      %492 = vmatpush1.msra.mxu0 0.0
      %493 = vmatprep.subr.mxu0 0.0
      %494 = vmatpush1.msra.mxu0 0.0
      %495 = vmatprep.subr.mxu0 0.0
      %496 = vmatpush1.msra.mxu0 0.0
      %497 = vmatprep.subr.mxu0 0.0
      %498 = vmatpush1.msra.mxu0 0.0
      %499 = vmatprep.subr.mxu0 0.0
      %500 = vmatpush1.msra.mxu0 0.0
      %501 = vmatprep.subr.mxu0 0.0
      %502 = vmatpush1.msra.mxu0 0.0
      %503 = vmatprep.subr.mxu0 0.0
      %504 = vmatpush1.msra.mxu0 0.0
      %505 = vmatprep.subr.mxu0 0.0
      %506 = vmatpush1.msra.mxu0 0.0
      %507 = vmatprep.subr.mxu0 0.0
      %508 = vmatpush1.msra.mxu0 0.0
      %509 = vmatprep.subr.mxu0 0.0
      %510 = vmatpush1.msra.mxu0 0.0
      %511 = vmatprep.subr.mxu0 0.0
      %512 = vmatpush1.msra.mxu0 0.0
      %513 = vmatprep.subr.mxu0 0.0
      %514 = vmatpush1.msra.mxu0 0.0
      %515 = vmatprep.subr.mxu0 0.0
      %516 = vmatpush1.msra.mxu0 0.0
      %517 = vmatprep.subr.mxu0 0.0
      %518 = vmatpush1.msra.mxu0 0.0
      %519 = vmatprep.subr.mxu0 0.0
      %520 = vmatpush1.msra.mxu0 0.0
      %521 = vmatprep.subr.mxu0 0.0
      %522 = vmatpush1.msra.mxu0 0.0
      %523 = vmatprep.subr.mxu0 0.0
      %524 = vmatpush1.msra.mxu0 0.0
      %525 = vmatprep.subr.mxu0 0.0
      %526 = vmatpush1.msra.mxu0 0.0
      %527 = vmatprep.mubr.f32.mxu0 0.0
      %528 = vmatmul.mubr.f32.gmra.mrb[0].mxu0 %v458
      %v529 = vpop.f32.mrb[0].mxu0
      %v530 = vadd.f32 %v454, %v529
      %v531 = vpop.f32.mrb[0].mxu0
      %532 = vmatprep.mubr.f32.mxu0 0.0
      %533 = vmatmul.mubr.f32.gmra.mrb[0].mxu0 %v461
      %v534 = vpop.f32.mrb[0].mxu0
      %v535 = vadd.f32 %v454, %v534
      %v536 = vpop.f32.mrb[0].mxu0
      %537 = vdwg.mxu0
      %540 = vrot.lane.b32.xlu0 %v530, 120
      %v541 = vpop.permute.xlu0 %540
      %542 = vrot.lane.b32.xlu0 %v535, 120
      %v543 = vpop.permute.xlu0 %542
      %544 = vrot.lane.b32.xlu0 %v530, 112
      %v545 = vpop.permute.xlu0 %544
      %546 = vrot.lane.b32.xlu0 %v535, 112
      %v547 = vpop.permute.xlu0 %546
      %548 = vrot.lane.b32.xlu0 %v530, 104
      %v549 = vpop.permute.xlu0 %548
      %550 = vrot.lane.b32.xlu0 %v535, 104
      %v551 = vpop.permute.xlu0 %550
      %552 = vrot.lane.b32.xlu0 %v530, 96
      %v553 = vpop.permute.xlu0 %552
      %vm554 = vcmask 64512
      %v555 = vsel %vm554, %v530, 0
      %v557 = vsel %vm554, %v553, 0
      %559 = vmatprep.subr.mxu0 0.0
      %560 = vmatpush1.xpose.msra.mxu0 %v557
      %561 = vmatprep.subr.mxu0 0.0
      %562 = vmatpush1.xpose.msra.mxu0 0.0
      %563 = vmatprep.subr.mxu0 0.0
      %564 = vmatpush1.xpose.msra.mxu0 0.0
      %565 = vmatprep.subr.mxu0 0.0
      %566 = vmatpush1.xpose.msra.mxu0 0.0
      %567 = vmatprep.subr.mxu0 0.0
      %568 = vmatpush1.xpose.msra.mxu0 0.0
      %569 = vmatprep.subr.mxu0 0.0
      %570 = vmatpush1.xpose.msra.mxu0 0.0
      %571 = vmatprep.subr.mxu0 0.0
      %572 = vmatpush1.xpose.msra.mxu0 0.0
      %573 = vmatprep.subr.mxu0 0.0
      %574 = vmatpush1.xpose.msra.mxu0 0.0
      %575 = vmatprep.subr.mxu0 0.0
      %576 = vmatpush1.xpose.msra.mxu0 0.0
      %577 = vmatprep.subr.mxu0 0.0
      %578 = vmatpush1.xpose.msra.mxu0 0.0
      %579 = vmatprep.subr.mxu0 0.0
      %580 = vmatpush1.xpose.msra.mxu0 0.0
      %581 = vmatprep.subr.mxu0 0.0
      %582 = vmatpush1.xpose.msra.mxu0 0.0
      %583 = vmatprep.subr.mxu0 0.0
      %584 = vmatpush1.xpose.msra.mxu0 0.0
      %585 = vmatprep.subr.mxu0 0.0
      %586 = vmatpush1.xpose.msra.mxu0 0.0
      %587 = vmatprep.subr.mxu0 0.0
      %588 = vmatpush1.xpose.msra.mxu0 0.0
      %589 = vmatprep.subr.mxu0 0.0
      %590 = vmatpush1.xpose.msra.mxu0 0.0
      %591 = vmatprep.subr.mxu0 0.0
      %592 = vmatpush1.xpose.msra.mxu0 0.0
      %593 = vmatprep.subr.mxu0 0.0
      %594 = vmatpush1.xpose.msra.mxu0 0.0
      %595 = vmatprep.subr.mxu0 0.0
      %596 = vmatpush1.xpose.msra.mxu0 0.0
      %597 = vmatprep.subr.mxu0 0.0
      %598 = vmatpush1.xpose.msra.mxu0 0.0
      %599 = vmatprep.subr.mxu0 0.0
      %600 = vmatpush1.xpose.msra.mxu0 0.0
      %601 = vmatprep.subr.mxu0 0.0
      %602 = vmatpush1.xpose.msra.mxu0 0.0
      %603 = vmatprep.subr.mxu0 0.0
      %604 = vmatpush1.xpose.msra.mxu0 0.0
      %605 = vmatprep.subr.mxu0 0.0
      %606 = vmatpush1.xpose.msra.mxu0 0.0
      %607 = vmatprep.subr.mxu0 0.0
      %608 = vmatpush1.xpose.msra.mxu0 0.0
      %609 = vmatprep.subr.mxu0 0.0
      %610 = vmatpush1.xpose.msra.mxu0 0.0
      %611 = vmatprep.subr.mxu0 0.0
      %612 = vmatpush1.xpose.msra.mxu0 0.0
      %613 = vmatprep.subr.mxu0 0.0
      %614 = vmatpush1.xpose.msra.mxu0 0.0
      %615 = vmatprep.subr.mxu0 0.0
      %616 = vmatpush1.xpose.msra.mxu0 0.0
      %617 = vmatprep.subr.mxu0 0.0
      %618 = vmatpush1.xpose.msra.mxu0 0.0
      %619 = vmatprep.subr.mxu0 0.0
      %620 = vmatpush1.xpose.msra.mxu0 0.0
      %621 = vmatprep.subr.mxu0 0.0
      %622 = vmatpush1.xpose.msra.mxu0 0.0
      %623 = vmatprep.mubr.f32.mxu0 0.0
      %624 = vmatmul.mubr.f32.gmra.mrb[0].mxu0 %v555
      %v625 = vpop.f32.mrb[0].mxu0
      %v626 = vadd.f32 0.0, %v625
      %v627 = vpop.f32.mrb[0].mxu0
      %628 = vdwg.mxu0
      %629 = vrot.lane.b32.xlu0 %v535, 96
      %v630 = vpop.permute.xlu0 %629
      %v631 = vsel %vm554, %v535, 0
      %v633 = vsel %vm554, %v630, 0
      %635 = vmatprep.subr.mxu0 0.0
      %636 = vmatpush1.xpose.msra.mxu0 %v633
      %637 = vmatprep.subr.mxu0 0.0
      %638 = vmatpush1.xpose.msra.mxu0 0.0
      %639 = vmatprep.subr.mxu0 0.0
      %640 = vmatpush1.xpose.msra.mxu0 0.0
      %641 = vmatprep.subr.mxu0 0.0
      %642 = vmatpush1.xpose.msra.mxu0 0.0
      %643 = vmatprep.subr.mxu0 0.0
      %644 = vmatpush1.xpose.msra.mxu0 0.0
      %645 = vmatprep.subr.mxu0 0.0
      %646 = vmatpush1.xpose.msra.mxu0 0.0
      %647 = vmatprep.subr.mxu0 0.0
      %648 = vmatpush1.xpose.msra.mxu0 0.0
      %649 = vmatprep.subr.mxu0 0.0
      %650 = vmatpush1.xpose.msra.mxu0 0.0
      %651 = vmatprep.subr.mxu0 0.0
      %652 = vmatpush1.xpose.msra.mxu0 0.0
      %653 = vmatprep.subr.mxu0 0.0
      %654 = vmatpush1.xpose.msra.mxu0 0.0
      %655 = vmatprep.subr.mxu0 0.0
      %656 = vmatpush1.xpose.msra.mxu0 0.0
      %657 = vmatprep.subr.mxu0 0.0
      %658 = vmatpush1.xpose.msra.mxu0 0.0
      %659 = vmatprep.subr.mxu0 0.0
      %660 = vmatpush1.xpose.msra.mxu0 0.0
      %661 = vmatprep.subr.mxu0 0.0
      %662 = vmatpush1.xpose.msra.mxu0 0.0
      %663 = vmatprep.subr.mxu0 0.0
      %664 = vmatpush1.xpose.msra.mxu0 0.0
      %665 = vmatprep.subr.mxu0 0.0
      %666 = vmatpush1.xpose.msra.mxu0 0.0
      %667 = vmatprep.subr.mxu0 0.0
      %668 = vmatpush1.xpose.msra.mxu0 0.0
      %669 = vmatprep.subr.mxu0 0.0
      %670 = vmatpush1.xpose.msra.mxu0 0.0
      %671 = vmatprep.subr.mxu0 0.0
      %672 = vmatpush1.xpose.msra.mxu0 0.0
      %673 = vmatprep.subr.mxu0 0.0
      %674 = vmatpush1.xpose.msra.mxu0 0.0
      %675 = vmatprep.subr.mxu0 0.0
      %676 = vmatpush1.xpose.msra.mxu0 0.0
      %677 = vmatprep.subr.mxu0 0.0
      %678 = vmatpush1.xpose.msra.mxu0 0.0
      %679 = vmatprep.subr.mxu0 0.0
      %680 = vmatpush1.xpose.msra.mxu0 0.0
      %681 = vmatprep.subr.mxu0 0.0
      %682 = vmatpush1.xpose.msra.mxu0 0.0
      %683 = vmatprep.subr.mxu0 0.0
      %684 = vmatpush1.xpose.msra.mxu0 0.0
      %685 = vmatprep.subr.mxu0 0.0
      %686 = vmatpush1.xpose.msra.mxu0 0.0
      %687 = vmatprep.subr.mxu0 0.0
      %688 = vmatpush1.xpose.msra.mxu0 0.0
      %689 = vmatprep.subr.mxu0 0.0
      %690 = vmatpush1.xpose.msra.mxu0 0.0
      %691 = vmatprep.subr.mxu0 0.0
      %692 = vmatpush1.xpose.msra.mxu0 0.0
      %693 = vmatprep.subr.mxu0 0.0
      %694 = vmatpush1.xpose.msra.mxu0 0.0
      %695 = vmatprep.subr.mxu0 0.0
      %696 = vmatpush1.xpose.msra.mxu0 0.0
      %697 = vmatprep.subr.mxu0 0.0
      %698 = vmatpush1.xpose.msra.mxu0 0.0
      %699 = vmatprep.mubr.f32.mxu0 0.0
      %700 = vmatmul.mubr.f32.gmra.mrb[0].mxu0 %v631
      %v701 = vpop.f32.mrb[0].mxu0
      %v702 = vadd.f32 0.0, %v701
      %v703 = vpop.f32.mrb[0].mxu0
      %704 = vdwg.mxu0
      %705 = vrot.lane.b32.xlu0 %v541, 96
      %v706 = vpop.permute.xlu0 %705
      %v707 = vsel %vm554, %v541, 0
      %v709 = vsel %vm554, %v706, 0
      %711 = vmatprep.subr.mxu0 0.0
      %712 = vmatpush1.xpose.msra.mxu0 %v709
      %713 = vmatprep.subr.mxu0 0.0
      %714 = vmatpush1.xpose.msra.mxu0 0.0
      %715 = vmatprep.subr.mxu0 0.0
      %716 = vmatpush1.xpose.msra.mxu0 0.0
      %717 = vmatprep.subr.mxu0 0.0
      %718 = vmatpush1.xpose.msra.mxu0 0.0
      %719 = vmatprep.subr.mxu0 0.0
      %720 = vmatpush1.xpose.msra.mxu0 0.0
      %721 = vmatprep.subr.mxu0 0.0
      %722 = vmatpush1.xpose.msra.mxu0 0.0
      %723 = vmatprep.subr.mxu0 0.0
      %724 = vmatpush1.xpose.msra.mxu0 0.0
      %725 = vmatprep.subr.mxu0 0.0
      %726 = vmatpush1.xpose.msra.mxu0 0.0
      %727 = vmatprep.subr.mxu0 0.0
      %728 = vmatpush1.xpose.msra.mxu0 0.0
      %729 = vmatprep.subr.mxu0 0.0
      %730 = vmatpush1.xpose.msra.mxu0 0.0
      %731 = vmatprep.subr.mxu0 0.0
      %732 = vmatpush1.xpose.msra.mxu0 0.0
      %733 = vmatprep.subr.mxu0 0.0
      %734 = vmatpush1.xpose.msra.mxu0 0.0
      %735 = vmatprep.subr.mxu0 0.0
      %736 = vmatpush1.xpose.msra.mxu0 0.0
      %737 = vmatprep.subr.mxu0 0.0
      %738 = vmatpush1.xpose.msra.mxu0 0.0
      %739 = vmatprep.subr.mxu0 0.0
      %740 = vmatpush1.xpose.msra.mxu0 0.0
      %741 = vmatprep.subr.mxu0 0.0
      %742 = vmatpush1.xpose.msra.mxu0 0.0
      %743 = vmatprep.subr.mxu0 0.0
      %744 = vmatpush1.xpose.msra.mxu0 0.0
      %745 = vmatprep.subr.mxu0 0.0
      %746 = vmatpush1.xpose.msra.mxu0 0.0
      %747 = vmatprep.subr.mxu0 0.0
      %748 = vmatpush1.xpose.msra.mxu0 0.0
      %749 = vmatprep.subr.mxu0 0.0
      %750 = vmatpush1.xpose.msra.mxu0 0.0
      %751 = vmatprep.subr.mxu0 0.0
      %752 = vmatpush1.xpose.msra.mxu0 0.0
      %753 = vmatprep.subr.mxu0 0.0
      %754 = vmatpush1.xpose.msra.mxu0 0.0
      %755 = vmatprep.subr.mxu0 0.0
      %756 = vmatpush1.xpose.msra.mxu0 0.0
      %757 = vmatprep.subr.mxu0 0.0
      %758 = vmatpush1.xpose.msra.mxu0 0.0
      %759 = vmatprep.subr.mxu0 0.0
      %760 = vmatpush1.xpose.msra.mxu0 0.0
      %761 = vmatprep.subr.mxu0 0.0
      %762 = vmatpush1.xpose.msra.mxu0 0.0
      %763 = vmatprep.subr.mxu0 0.0
      %764 = vmatpush1.xpose.msra.mxu0 0.0
      %765 = vmatprep.subr.mxu0 0.0
      %766 = vmatpush1.xpose.msra.mxu0 0.0
      %767 = vmatprep.subr.mxu0 0.0
      %768 = vmatpush1.xpose.msra.mxu0 0.0
      %769 = vmatprep.subr.mxu0 0.0
      %770 = vmatpush1.xpose.msra.mxu0 0.0
      %771 = vmatprep.subr.mxu0 0.0
      %772 = vmatpush1.xpose.msra.mxu0 0.0
      %773 = vmatprep.subr.mxu0 0.0
      %774 = vmatpush1.xpose.msra.mxu0 0.0
      %775 = vmatprep.mubr.f32.mxu0 0.0
      %776 = vmatmul.mubr.f32.gmra.mrb[0].mxu0 %v707
      %v777 = vpop.f32.mrb[0].mxu0
      %v778 = vadd.f32 0.0, %v777
      %v779 = vpop.f32.mrb[0].mxu0
      %780 = vdwg.mxu0
      %781 = vrot.lane.b32.xlu0 %v543, 96
      %v782 = vpop.permute.xlu0 %781
      %v783 = vsel %vm554, %v543, 0
      %v785 = vsel %vm554, %v782, 0
      %787 = vmatprep.subr.mxu0 0.0
      %788 = vmatpush1.xpose.msra.mxu0 %v785
      %789 = vmatprep.subr.mxu0 0.0
      %790 = vmatpush1.xpose.msra.mxu0 0.0
      %791 = vmatprep.subr.mxu0 0.0
      %792 = vmatpush1.xpose.msra.mxu0 0.0
      %793 = vmatprep.subr.mxu0 0.0
      %794 = vmatpush1.xpose.msra.mxu0 0.0
      %795 = vmatprep.subr.mxu0 0.0
      %796 = vmatpush1.xpose.msra.mxu0 0.0
      %797 = vmatprep.subr.mxu0 0.0
      %798 = vmatpush1.xpose.msra.mxu0 0.0
      %799 = vmatprep.subr.mxu0 0.0
      %800 = vmatpush1.xpose.msra.mxu0 0.0
      %801 = vmatprep.subr.mxu0 0.0
      %802 = vmatpush1.xpose.msra.mxu0 0.0
      %803 = vmatprep.subr.mxu0 0.0
      %804 = vmatpush1.xpose.msra.mxu0 0.0
      %805 = vmatprep.subr.mxu0 0.0
      %806 = vmatpush1.xpose.msra.mxu0 0.0
      %807 = vmatprep.subr.mxu0 0.0
      %808 = vmatpush1.xpose.msra.mxu0 0.0
      %809 = vmatprep.subr.mxu0 0.0
      %810 = vmatpush1.xpose.msra.mxu0 0.0
      %811 = vmatprep.subr.mxu0 0.0
      %812 = vmatpush1.xpose.msra.mxu0 0.0
      %813 = vmatprep.subr.mxu0 0.0
      %814 = vmatpush1.xpose.msra.mxu0 0.0
      %815 = vmatprep.subr.mxu0 0.0
      %816 = vmatpush1.xpose.msra.mxu0 0.0
      %817 = vmatprep.subr.mxu0 0.0
      %818 = vmatpush1.xpose.msra.mxu0 0.0
      %819 = vmatprep.subr.mxu0 0.0
      %820 = vmatpush1.xpose.msra.mxu0 0.0
      %821 = vmatprep.subr.mxu0 0.0
      %822 = vmatpush1.xpose.msra.mxu0 0.0
      %823 = vmatprep.subr.mxu0 0.0
      %824 = vmatpush1.xpose.msra.mxu0 0.0
      %825 = vmatprep.subr.mxu0 0.0
      %826 = vmatpush1.xpose.msra.mxu0 0.0
      %827 = vmatprep.subr.mxu0 0.0
      %828 = vmatpush1.xpose.msra.mxu0 0.0
      %829 = vmatprep.subr.mxu0 0.0
      %830 = vmatpush1.xpose.msra.mxu0 0.0
      %831 = vmatprep.subr.mxu0 0.0
      %832 = vmatpush1.xpose.msra.mxu0 0.0
      %833 = vmatprep.subr.mxu0 0.0
      %834 = vmatpush1.xpose.msra.mxu0 0.0
      %835 = vmatprep.subr.mxu0 0.0
      %836 = vmatpush1.xpose.msra.mxu0 0.0
      %837 = vmatprep.subr.mxu0 0.0
      %838 = vmatpush1.xpose.msra.mxu0 0.0
      %839 = vmatprep.subr.mxu0 0.0
      %840 = vmatpush1.xpose.msra.mxu0 0.0
      %841 = vmatprep.subr.mxu0 0.0
      %842 = vmatpush1.xpose.msra.mxu0 0.0
      %843 = vmatprep.subr.mxu0 0.0
      %844 = vmatpush1.xpose.msra.mxu0 0.0
      %845 = vmatprep.subr.mxu0 0.0
      %846 = vmatpush1.xpose.msra.mxu0 0.0
      %847 = vmatprep.subr.mxu0 0.0
      %848 = vmatpush1.xpose.msra.mxu0 0.0
      %849 = vmatprep.subr.mxu0 0.0
      %850 = vmatpush1.xpose.msra.mxu0 0.0
      %851 = vmatprep.mubr.f32.mxu0 0.0
      %852 = vmatmul.mubr.f32.gmra.mrb[0].mxu0 %v783
      %v853 = vpop.f32.mrb[0].mxu0
      %v854 = vadd.f32 0.0, %v853
      %v855 = vpop.f32.mrb[0].mxu0
      %856 = vdwg.mxu0
      %857 = vrot.lane.b32.xlu0 %v545, 96
      %v858 = vpop.permute.xlu0 %857
      %v859 = vsel %vm554, %v545, 0
      %v861 = vsel %vm554, %v858, 0
      %863 = vmatprep.subr.mxu0 0.0
      %864 = vmatpush1.xpose.msra.mxu0 %v861
      %865 = vmatprep.subr.mxu0 0.0
      %866 = vmatpush1.xpose.msra.mxu0 0.0
      %867 = vmatprep.subr.mxu0 0.0
      %868 = vmatpush1.xpose.msra.mxu0 0.0
      %869 = vmatprep.subr.mxu0 0.0
      %870 = vmatpush1.xpose.msra.mxu0 0.0
      %871 = vmatprep.subr.mxu0 0.0
      %872 = vmatpush1.xpose.msra.mxu0 0.0
      %873 = vmatprep.subr.mxu0 0.0
      %874 = vmatpush1.xpose.msra.mxu0 0.0
      %875 = vmatprep.subr.mxu0 0.0
      %876 = vmatpush1.xpose.msra.mxu0 0.0
      %877 = vmatprep.subr.mxu0 0.0
      %878 = vmatpush1.xpose.msra.mxu0 0.0
      %879 = vmatprep.subr.mxu0 0.0
      %880 = vmatpush1.xpose.msra.mxu0 0.0
      %881 = vmatprep.subr.mxu0 0.0
      %882 = vmatpush1.xpose.msra.mxu0 0.0
      %883 = vmatprep.subr.mxu0 0.0
      %884 = vmatpush1.xpose.msra.mxu0 0.0
      %885 = vmatprep.subr.mxu0 0.0
      %886 = vmatpush1.xpose.msra.mxu0 0.0
      %887 = vmatprep.subr.mxu0 0.0
      %888 = vmatpush1.xpose.msra.mxu0 0.0
      %889 = vmatprep.subr.mxu0 0.0
      %890 = vmatpush1.xpose.msra.mxu0 0.0
      %891 = vmatprep.subr.mxu0 0.0
      %892 = vmatpush1.xpose.msra.mxu0 0.0
      %893 = vmatprep.subr.mxu0 0.0
      %894 = vmatpush1.xpose.msra.mxu0 0.0
      %895 = vmatprep.subr.mxu0 0.0
      %896 = vmatpush1.xpose.msra.mxu0 0.0
      %897 = vmatprep.subr.mxu0 0.0
      %898 = vmatpush1.xpose.msra.mxu0 0.0
      %899 = vmatprep.subr.mxu0 0.0
      %900 = vmatpush1.xpose.msra.mxu0 0.0
      %901 = vmatprep.subr.mxu0 0.0
      %902 = vmatpush1.xpose.msra.mxu0 0.0
      %903 = vmatprep.subr.mxu0 0.0
      %904 = vmatpush1.xpose.msra.mxu0 0.0
      %905 = vmatprep.subr.mxu0 0.0
      %906 = vmatpush1.xpose.msra.mxu0 0.0
      %907 = vmatprep.subr.mxu0 0.0
      %908 = vmatpush1.xpose.msra.mxu0 0.0
      %909 = vmatprep.subr.mxu0 0.0
      %910 = vmatpush1.xpose.msra.mxu0 0.0
      %911 = vmatprep.subr.mxu0 0.0
      %912 = vmatpush1.xpose.msra.mxu0 0.0
      %913 = vmatprep.subr.mxu0 0.0
      %914 = vmatpush1.xpose.msra.mxu0 0.0
      %915 = vmatprep.subr.mxu0 0.0
      %916 = vmatpush1.xpose.msra.mxu0 0.0
      %917 = vmatprep.subr.mxu0 0.0
      %918 = vmatpush1.xpose.msra.mxu0 0.0
      %919 = vmatprep.subr.mxu0 0.0
      %920 = vmatpush1.xpose.msra.mxu0 0.0
      %921 = vmatprep.subr.mxu0 0.0
      %922 = vmatpush1.xpose.msra.mxu0 0.0
      %923 = vmatprep.subr.mxu0 0.0
      %924 = vmatpush1.xpose.msra.mxu0 0.0
      %925 = vmatprep.subr.mxu0 0.0
      %926 = vmatpush1.xpose.msra.mxu0 0.0
      %927 = vmatprep.mubr.f32.mxu0 0.0
      %928 = vmatmul.mubr.f32.gmra.mrb[0].mxu0 %v859
      %v929 = vpop.f32.mrb[0].mxu0
      %v930 = vadd.f32 0.0, %v929
      %v931 = vpop.f32.mrb[0].mxu0
      %932 = vdwg.mxu0
      %933 = vrot.lane.b32.xlu0 %v547, 96
      %v934 = vpop.permute.xlu0 %933
      %v935 = vsel %vm554, %v547, 0
      %v937 = vsel %vm554, %v934, 0
      %939 = vmatprep.subr.mxu0 0.0
      %940 = vmatpush1.xpose.msra.mxu0 %v937
      %941 = vmatprep.subr.mxu0 0.0
      %942 = vmatpush1.xpose.msra.mxu0 0.0
      %943 = vmatprep.subr.mxu0 0.0
      %944 = vmatpush1.xpose.msra.mxu0 0.0
      %945 = vmatprep.subr.mxu0 0.0
      %946 = vmatpush1.xpose.msra.mxu0 0.0
      %947 = vmatprep.subr.mxu0 0.0
      %948 = vmatpush1.xpose.msra.mxu0 0.0
      %949 = vmatprep.subr.mxu0 0.0
      %950 = vmatpush1.xpose.msra.mxu0 0.0
      %951 = vmatprep.subr.mxu0 0.0
      %952 = vmatpush1.xpose.msra.mxu0 0.0
      %953 = vmatprep.subr.mxu0 0.0
      %954 = vmatpush1.xpose.msra.mxu0 0.0
      %955 = vmatprep.subr.mxu0 0.0
      %956 = vmatpush1.xpose.msra.mxu0 0.0
      %957 = vmatprep.subr.mxu0 0.0
      %958 = vmatpush1.xpose.msra.mxu0 0.0
      %959 = vmatprep.subr.mxu0 0.0
      %960 = vmatpush1.xpose.msra.mxu0 0.0
      %961 = vmatprep.subr.mxu0 0.0
      %962 = vmatpush1.xpose.msra.mxu0 0.0
      %963 = vmatprep.subr.mxu0 0.0
      %964 = vmatpush1.xpose.msra.mxu0 0.0
      %965 = vmatprep.subr.mxu0 0.0
      %966 = vmatpush1.xpose.msra.mxu0 0.0
      %967 = vmatprep.subr.mxu0 0.0
      %968 = vmatpush1.xpose.msra.mxu0 0.0
      %969 = vmatprep.subr.mxu0 0.0
      %970 = vmatpush1.xpose.msra.mxu0 0.0
      %971 = vmatprep.subr.mxu0 0.0
      %972 = vmatpush1.xpose.msra.mxu0 0.0
      %973 = vmatprep.subr.mxu0 0.0
      %974 = vmatpush1.xpose.msra.mxu0 0.0
      %975 = vmatprep.subr.mxu0 0.0
      %976 = vmatpush1.xpose.msra.mxu0 0.0
      %977 = vmatprep.subr.mxu0 0.0
      %978 = vmatpush1.xpose.msra.mxu0 0.0
      %979 = vmatprep.subr.mxu0 0.0
      %980 = vmatpush1.xpose.msra.mxu0 0.0
      %981 = vmatprep.subr.mxu0 0.0
      %982 = vmatpush1.xpose.msra.mxu0 0.0
      %983 = vmatprep.subr.mxu0 0.0
      %984 = vmatpush1.xpose.msra.mxu0 0.0
      %985 = vmatprep.subr.mxu0 0.0
      %986 = vmatpush1.xpose.msra.mxu0 0.0
      %987 = vmatprep.subr.mxu0 0.0
      %988 = vmatpush1.xpose.msra.mxu0 0.0
      %989 = vmatprep.subr.mxu0 0.0
      %990 = vmatpush1.xpose.msra.mxu0 0.0
      %991 = vmatprep.subr.mxu0 0.0
      %992 = vmatpush1.xpose.msra.mxu0 0.0
      %993 = vmatprep.subr.mxu0 0.0
      %994 = vmatpush1.xpose.msra.mxu0 0.0
      %995 = vmatprep.subr.mxu0 0.0
      %996 = vmatpush1.xpose.msra.mxu0 0.0
      %997 = vmatprep.subr.mxu0 0.0
      %998 = vmatpush1.xpose.msra.mxu0 0.0
      %999 = vmatprep.subr.mxu0 0.0
      %1000 = vmatpush1.xpose.msra.mxu0 0.0
      %1001 = vmatprep.subr.mxu0 0.0
      %1002 = vmatpush1.xpose.msra.mxu0 0.0
      %1003 = vmatprep.mubr.f32.mxu0 0.0
      %1004 = vmatmul.mubr.f32.gmra.mrb[0].mxu0 %v935
      %v1005 = vpop.f32.mrb[0].mxu0
      %v1006 = vadd.f32 0.0, %v1005
      %v1007 = vpop.f32.mrb[0].mxu0
      %1008 = vdwg.mxu0
      %1009 = vrot.lane.b32.xlu0 %v549, 96
      %v1010 = vpop.permute.xlu0 %1009
      %v1011 = vsel %vm554, %v549, 0
      %v1013 = vsel %vm554, %v1010, 0
      %1015 = vmatprep.subr.mxu0 0.0
      %1016 = vmatpush1.xpose.msra.mxu0 %v1013
      %1017 = vmatprep.subr.mxu0 0.0
      %1018 = vmatpush1.xpose.msra.mxu0 0.0
      %1019 = vmatprep.subr.mxu0 0.0
      %1020 = vmatpush1.xpose.msra.mxu0 0.0
      %1021 = vmatprep.subr.mxu0 0.0
      %1022 = vmatpush1.xpose.msra.mxu0 0.0
      %1023 = vmatprep.subr.mxu0 0.0
      %1024 = vmatpush1.xpose.msra.mxu0 0.0
      %1025 = vmatprep.subr.mxu0 0.0
      %1026 = vmatpush1.xpose.msra.mxu0 0.0
      %1027 = vmatprep.subr.mxu0 0.0
      %1028 = vmatpush1.xpose.msra.mxu0 0.0
      %1029 = vmatprep.subr.mxu0 0.0
      %1030 = vmatpush1.xpose.msra.mxu0 0.0
      %1031 = vmatprep.subr.mxu0 0.0
      %1032 = vmatpush1.xpose.msra.mxu0 0.0
      %1033 = vmatprep.subr.mxu0 0.0
      %1034 = vmatpush1.xpose.msra.mxu0 0.0
      %1035 = vmatprep.subr.mxu0 0.0
      %1036 = vmatpush1.xpose.msra.mxu0 0.0
      %1037 = vmatprep.subr.mxu0 0.0
      %1038 = vmatpush1.xpose.msra.mxu0 0.0
      %1039 = vmatprep.subr.mxu0 0.0
      %1040 = vmatpush1.xpose.msra.mxu0 0.0
      %1041 = vmatprep.subr.mxu0 0.0
      %1042 = vmatpush1.xpose.msra.mxu0 0.0
      %1043 = vmatprep.subr.mxu0 0.0
      %1044 = vmatpush1.xpose.msra.mxu0 0.0
      %1045 = vmatprep.subr.mxu0 0.0
      %1046 = vmatpush1.xpose.msra.mxu0 0.0
      %1047 = vmatprep.subr.mxu0 0.0
      %1048 = vmatpush1.xpose.msra.mxu0 0.0
      %1049 = vmatprep.subr.mxu0 0.0
      %1050 = vmatpush1.xpose.msra.mxu0 0.0
      %1051 = vmatprep.subr.mxu0 0.0
      %1052 = vmatpush1.xpose.msra.mxu0 0.0
      %1053 = vmatprep.subr.mxu0 0.0
      %1054 = vmatpush1.xpose.msra.mxu0 0.0
      %1055 = vmatprep.subr.mxu0 0.0
      %1056 = vmatpush1.xpose.msra.mxu0 0.0
      %1057 = vmatprep.subr.mxu0 0.0
      %1058 = vmatpush1.xpose.msra.mxu0 0.0
      %1059 = vmatprep.subr.mxu0 0.0
      %1060 = vmatpush1.xpose.msra.mxu0 0.0
      %1061 = vmatprep.subr.mxu0 0.0
      %1062 = vmatpush1.xpose.msra.mxu0 0.0
      %1063 = vmatprep.subr.mxu0 0.0
      %1064 = vmatpush1.xpose.msra.mxu0 0.0
      %1065 = vmatprep.subr.mxu0 0.0
      %1066 = vmatpush1.xpose.msra.mxu0 0.0
      %1067 = vmatprep.subr.mxu0 0.0
      %1068 = vmatpush1.xpose.msra.mxu0 0.0
      %1069 = vmatprep.subr.mxu0 0.0
      %1070 = vmatpush1.xpose.msra.mxu0 0.0
      %1071 = vmatprep.subr.mxu0 0.0
      %1072 = vmatpush1.xpose.msra.mxu0 0.0
      %1073 = vmatprep.subr.mxu0 0.0
      %1074 = vmatpush1.xpose.msra.mxu0 0.0
      %1075 = vmatprep.subr.mxu0 0.0
      %1076 = vmatpush1.xpose.msra.mxu0 0.0
      %1077 = vmatprep.subr.mxu0 0.0
      %1078 = vmatpush1.xpose.msra.mxu0 0.0
      %1079 = vmatprep.mubr.f32.mxu0 0.0
      %1080 = vmatmul.mubr.f32.gmra.mrb[0].mxu0 %v1011
      %v1081 = vpop.f32.mrb[0].mxu0
      %v1082 = vadd.f32 0.0, %v1081
      %v1083 = vpop.f32.mrb[0].mxu0
      %1084 = vdwg.mxu0
      %1085 = vrot.lane.b32.xlu0 %v551, 96
      %v1086 = vpop.permute.xlu0 %1085
      %v1087 = vsel %vm554, %v551, 0
      %v1089 = vsel %vm554, %v1086, 0
      %1091 = vmatprep.subr.mxu0 0.0
      %1092 = vmatpush1.xpose.msra.mxu0 %v1089
      %1093 = vmatprep.subr.mxu0 0.0
      %1094 = vmatpush1.xpose.msra.mxu0 0.0
      %1095 = vmatprep.subr.mxu0 0.0
      %1096 = vmatpush1.xpose.msra.mxu0 0.0
      %1097 = vmatprep.subr.mxu0 0.0
      %1098 = vmatpush1.xpose.msra.mxu0 0.0
      %1099 = vmatprep.subr.mxu0 0.0
      %1100 = vmatpush1.xpose.msra.mxu0 0.0
      %1101 = vmatprep.subr.mxu0 0.0
      %1102 = vmatpush1.xpose.msra.mxu0 0.0
      %1103 = vmatprep.subr.mxu0 0.0
      %1104 = vmatpush1.xpose.msra.mxu0 0.0
      %1105 = vmatprep.subr.mxu0 0.0
      %1106 = vmatpush1.xpose.msra.mxu0 0.0
      %1107 = vmatprep.subr.mxu0 0.0
      %1108 = vmatpush1.xpose.msra.mxu0 0.0
      %1109 = vmatprep.subr.mxu0 0.0
      %1110 = vmatpush1.xpose.msra.mxu0 0.0
      %1111 = vmatprep.subr.mxu0 0.0
      %1112 = vmatpush1.xpose.msra.mxu0 0.0
      %1113 = vmatprep.subr.mxu0 0.0
      %1114 = vmatpush1.xpose.msra.mxu0 0.0
      %1115 = vmatprep.subr.mxu0 0.0
      %1116 = vmatpush1.xpose.msra.mxu0 0.0
      %1117 = vmatprep.subr.mxu0 0.0
      %1118 = vmatpush1.xpose.msra.mxu0 0.0
      %1119 = vmatprep.subr.mxu0 0.0
      %1120 = vmatpush1.xpose.msra.mxu0 0.0
      %1121 = vmatprep.subr.mxu0 0.0
      %1122 = vmatpush1.xpose.msra.mxu0 0.0
      %1123 = vmatprep.subr.mxu0 0.0
      %1124 = vmatpush1.xpose.msra.mxu0 0.0
      %1125 = vmatprep.subr.mxu0 0.0
      %1126 = vmatpush1.xpose.msra.mxu0 0.0
      %1127 = vmatprep.subr.mxu0 0.0
      %1128 = vmatpush1.xpose.msra.mxu0 0.0
      %1129 = vmatprep.subr.mxu0 0.0
      %1130 = vmatpush1.xpose.msra.mxu0 0.0
      %1131 = vmatprep.subr.mxu0 0.0
      %1132 = vmatpush1.xpose.msra.mxu0 0.0
      %1133 = vmatprep.subr.mxu0 0.0
      %1134 = vmatpush1.xpose.msra.mxu0 0.0
      %1135 = vmatprep.subr.mxu0 0.0
      %1136 = vmatpush1.xpose.msra.mxu0 0.0
      %1137 = vmatprep.subr.mxu0 0.0
      %1138 = vmatpush1.xpose.msra.mxu0 0.0
      %1139 = vmatprep.subr.mxu0 0.0
      %1140 = vmatpush1.xpose.msra.mxu0 0.0
      %1141 = vmatprep.subr.mxu0 0.0
      %1142 = vmatpush1.xpose.msra.mxu0 0.0
      %1143 = vmatprep.subr.mxu0 0.0
      %1144 = vmatpush1.xpose.msra.mxu0 0.0
      %1145 = vmatprep.subr.mxu0 0.0
      %1146 = vmatpush1.xpose.msra.mxu0 0.0
      %1147 = vmatprep.subr.mxu0 0.0
      %1148 = vmatpush1.xpose.msra.mxu0 0.0
      %1149 = vmatprep.subr.mxu0 0.0
      %1150 = vmatpush1.xpose.msra.mxu0 0.0
      %1151 = vmatprep.subr.mxu0 0.0
      %1152 = vmatpush1.xpose.msra.mxu0 0.0
      %1153 = vmatprep.subr.mxu0 0.0
      %1154 = vmatpush1.xpose.msra.mxu0 0.0
      %1155 = vmatprep.mubr.f32.mxu0 0.0
      %1156 = vmatmul.mubr.f32.gmra.mrb[0].mxu0 %v1087
      %v1157 = vpop.f32.mrb[0].mxu0
      %v1158 = vadd.f32 0.0, %v1157
      %v1159 = vpop.f32.mrb[0].mxu0
      %1160 = vdwg.mxu0
      %v1161 = vlaneseq
      %v1162 = vshrl.u32 %v1161, 7
      %v1163 = vlaneseq
      %v1164 = vand.u32 %v1163, 127
      %vm1165 = vcmp.gt.s32.totalorder %v1164, %v1162
      %v1166 = vsel %vm1165, 1, 0
      %vm1167 = vcmp.eq.s32.totalorder %v1166, 1
      %v1168 = vsel %vm1167, -1e+30, %v626
      %v1169 = vsel %vm1167, -1e+30, %v702
      %v1170 = vsel %vm1167, -1e+30, %v778
      %v1171 = vsel %vm1167, -1e+30, %v854
      %v1172 = vsel %vm1167, -1e+30, %v930
      %v1173 = vsel %vm1167, -1e+30, %v1006
      %v1174 = vsel %vm1167, -1e+30, %v1082
      %v1175 = vsel %vm1167, -1e+30, %v1158
      %v1176 = vsel %vm554, %v1168, -inf
      %1177 = vmax.xlane.f32.xlu0 %v1176
      %v1178 = vpop.xlane.xlu0 %1177
      %v1179 = vsel %vm554, %v1169, -inf
      %1180 = vmax.xlane.f32.xlu0 %v1179
      %v1181 = vpop.xlane.xlu0 %1180
      %v1182 = vsel %vm554, %v1170, -inf
      %1183 = vmax.xlane.f32.xlu0 %v1182
      %v1184 = vpop.xlane.xlu0 %1183
      %v1185 = vsel %vm554, %v1171, -inf
      %1186 = vmax.xlane.f32.xlu0 %v1185
      %v1187 = vpop.xlane.xlu0 %1186
      %v1188 = vsel %vm554, %v1172, -inf
      %1189 = vmax.xlane.f32.xlu0 %v1188
      %v1190 = vpop.xlane.xlu0 %1189
      %v1191 = vsel %vm554, %v1173, -inf
      %1192 = vmax.xlane.f32.xlu0 %v1191
      %v1193 = vpop.xlane.xlu0 %1192
      %v1194 = vsel %vm554, %v1174, -inf
      %1195 = vmax.xlane.f32.xlu0 %v1194
      %v1196 = vpop.xlane.xlu0 %1195
      %v1197 = vsel %vm554, %v1175, -inf
      %1198 = vmax.xlane.f32.xlu0 %v1197
      %v1199 = vpop.xlane.xlu0 %1198
      %v1200 = vsub.f32 %v1168, %v1178
      %v1201 = vsub.f32 %v1169, %v1181
      %v1202 = vsub.f32 %v1170, %v1184
      %v1203 = vsub.f32 %v1171, %v1187
      %v1204 = vsub.f32 %v1172, %v1190
      %v1205 = vsub.f32 %v1173, %v1193
      %v1206 = vsub.f32 %v1174, %v1196
      %v1207 = vsub.f32 %v1175, %v1199
      %v1208 = vmul.f32 %v1200, 1.442695
      %v1209 = vpow.pop %v1208
      %v1210 = vmul.f32 %v1201, 1.442695
      %v1211 = vpow.pop %v1210
      %v1212 = vmul.f32 %v1202, 1.442695
      %v1213 = vpow.pop %v1212
      %v1214 = vmul.f32 %v1203, 1.442695
      %v1215 = vpow.pop %v1214
      %v1216 = vmul.f32 %v1204, 1.442695
      %v1217 = vpow.pop %v1216
      %v1218 = vmul.f32 %v1205, 1.442695
      %v1219 = vpow.pop %v1218
      %v1220 = vmul.f32 %v1206, 1.442695
      %v1221 = vpow.pop %v1220
      %v1222 = vmul.f32 %v1207, 1.442695
      %v1223 = vpow.pop %v1222
      %v1224 = vsel %vm554, %v1209, 0.0
      %1225 = vadd.xlane.f32.xlu0 %v1224
      %v1226 = vpop.xlane.xlu0 %1225
      %v1227 = vsel %vm554, %v1211, 0.0
      %1228 = vadd.xlane.f32.xlu0 %v1227
      %v1229 = vpop.xlane.xlu0 %1228
      %v1230 = vsel %vm554, %v1213, 0.0
      %1231 = vadd.xlane.f32.xlu0 %v1230
      %v1232 = vpop.xlane.xlu0 %1231
      %v1233 = vsel %vm554, %v1215, 0.0
      %1234 = vadd.xlane.f32.xlu0 %v1233
      %v1235 = vpop.xlane.xlu0 %1234
      %v1236 = vsel %vm554, %v1217, 0.0
      %1237 = vadd.xlane.f32.xlu0 %v1236
      %v1238 = vpop.xlane.xlu0 %1237
      %v1239 = vsel %vm554, %v1219, 0.0
      %1240 = vadd.xlane.f32.xlu0 %v1239
      %v1241 = vpop.xlane.xlu0 %1240
      %v1242 = vsel %vm554, %v1221, 0.0
      %1243 = vadd.xlane.f32.xlu0 %v1242
      %v1244 = vpop.xlane.xlu0 %1243
      %v1245 = vsel %vm554, %v1223, 0.0
      %1246 = vadd.xlane.f32.xlu0 %v1245
      %v1247 = vpop.xlane.xlu0 %1246
      %1248 = vrot.lane.b32.xlu0 %v530, 64
      %v1249 = vpop.permute.xlu0 %1248
      %v1252 = vsel %vm554, %v1209, 0
      %1254 = vmatprep.subr.mxu0 0.0
      %1255 = vmatpush1.msra.mxu0 %v1249
      %1256 = vmatprep.subr.mxu0 0.0
      %1257 = vmatpush1.msra.mxu0 0.0
      %1258 = vmatprep.subr.mxu0 0.0
      %1259 = vmatpush1.msra.mxu0 0.0
      %1260 = vmatprep.subr.mxu0 0.0
      %1261 = vmatpush1.msra.mxu0 0.0
      %1262 = vmatprep.subr.mxu0 0.0
      %1263 = vmatpush1.msra.mxu0 0.0
      %1264 = vmatprep.subr.mxu0 0.0
      %1265 = vmatpush1.msra.mxu0 0.0
      %1266 = vmatprep.subr.mxu0 0.0
      %1267 = vmatpush1.msra.mxu0 0.0
      %1268 = vmatprep.subr.mxu0 0.0
      %1269 = vmatpush1.msra.mxu0 0.0
      %1270 = vmatprep.subr.mxu0 0.0
      %1271 = vmatpush1.msra.mxu0 0.0
      %1272 = vmatprep.subr.mxu0 0.0
      %1273 = vmatpush1.msra.mxu0 0.0
      %1274 = vmatprep.subr.mxu0 0.0
      %1275 = vmatpush1.msra.mxu0 0.0
      %1276 = vmatprep.subr.mxu0 0.0
      %1277 = vmatpush1.msra.mxu0 0.0
      %1278 = vmatprep.subr.mxu0 0.0
      %1279 = vmatpush1.msra.mxu0 0.0
      %1280 = vmatprep.subr.mxu0 0.0
      %1281 = vmatpush1.msra.mxu0 0.0
      %1282 = vmatprep.subr.mxu0 0.0
      %1283 = vmatpush1.msra.mxu0 0.0
      %1284 = vmatprep.subr.mxu0 0.0
      %1285 = vmatpush1.msra.mxu0 0.0
      %1286 = vmatprep.subr.mxu0 0.0
      %1287 = vmatpush1.msra.mxu0 0.0
      %1288 = vmatprep.subr.mxu0 0.0
      %1289 = vmatpush1.msra.mxu0 0.0
      %1290 = vmatprep.subr.mxu0 0.0
      %1291 = vmatpush1.msra.mxu0 0.0
      %1292 = vmatprep.subr.mxu0 0.0
      %1293 = vmatpush1.msra.mxu0 0.0
      %1294 = vmatprep.subr.mxu0 0.0
      %1295 = vmatpush1.msra.mxu0 0.0
      %1296 = vmatprep.subr.mxu0 0.0
      %1297 = vmatpush1.msra.mxu0 0.0
      %1298 = vmatprep.subr.mxu0 0.0
      %1299 = vmatpush1.msra.mxu0 0.0
      %1300 = vmatprep.subr.mxu0 0.0
      %1301 = vmatpush1.msra.mxu0 0.0
      %1302 = vmatprep.subr.mxu0 0.0
      %1303 = vmatpush1.msra.mxu0 0.0
      %1304 = vmatprep.subr.mxu0 0.0
      %1305 = vmatpush1.msra.mxu0 0.0
      %1306 = vmatprep.subr.mxu0 0.0
      %1307 = vmatpush1.msra.mxu0 0.0
      %1308 = vmatprep.subr.mxu0 0.0
      %1309 = vmatpush1.msra.mxu0 0.0
      %1310 = vmatprep.subr.mxu0 0.0
      %1311 = vmatpush1.msra.mxu0 0.0
      %1312 = vmatprep.subr.mxu0 0.0
      %1313 = vmatpush1.msra.mxu0 0.0
      %1314 = vmatprep.subr.mxu0 0.0
      %1315 = vmatpush1.msra.mxu0 0.0
      %1316 = vmatprep.subr.mxu0 0.0
      %1317 = vmatpush1.msra.mxu0 0.0
      %1318 = vmatprep.mubr.f32.mxu0 0.0
      %1319 = vmatmul.mubr.f32.gmra.mrb[0].mxu0 %v1252
      %v1320 = vpop.f32.mrb[0].mxu0
      %v1321 = vadd.f32 0.0, %v1320
      %v1322 = vpop.f32.mrb[0].mxu0
      %1323 = vdwg.mxu0
      %1324 = vrot.lane.b32.xlu0 %v535, 64
      %v1325 = vpop.permute.xlu0 %1324
      %v1328 = vsel %vm554, %v1211, 0
      %1330 = vmatprep.subr.mxu0 0.0
      %1331 = vmatpush1.msra.mxu0 %v1325
      %1332 = vmatprep.subr.mxu0 0.0
      %1333 = vmatpush1.msra.mxu0 0.0
      %1334 = vmatprep.subr.mxu0 0.0
      %1335 = vmatpush1.msra.mxu0 0.0
      %1336 = vmatprep.subr.mxu0 0.0
      %1337 = vmatpush1.msra.mxu0 0.0
      %1338 = vmatprep.subr.mxu0 0.0
      %1339 = vmatpush1.msra.mxu0 0.0
      %1340 = vmatprep.subr.mxu0 0.0
      %1341 = vmatpush1.msra.mxu0 0.0
      %1342 = vmatprep.subr.mxu0 0.0
      %1343 = vmatpush1.msra.mxu0 0.0
      %1344 = vmatprep.subr.mxu0 0.0
      %1345 = vmatpush1.msra.mxu0 0.0
      %1346 = vmatprep.subr.mxu0 0.0
      %1347 = vmatpush1.msra.mxu0 0.0
      %1348 = vmatprep.subr.mxu0 0.0
      %1349 = vmatpush1.msra.mxu0 0.0
      %1350 = vmatprep.subr.mxu0 0.0
      %1351 = vmatpush1.msra.mxu0 0.0
      %1352 = vmatprep.subr.mxu0 0.0
      %1353 = vmatpush1.msra.mxu0 0.0
      %1354 = vmatprep.subr.mxu0 0.0
      %1355 = vmatpush1.msra.mxu0 0.0
      %1356 = vmatprep.subr.mxu0 0.0
      %1357 = vmatpush1.msra.mxu0 0.0
      %1358 = vmatprep.subr.mxu0 0.0
      %1359 = vmatpush1.msra.mxu0 0.0
      %1360 = vmatprep.subr.mxu0 0.0
      %1361 = vmatpush1.msra.mxu0 0.0
      %1362 = vmatprep.subr.mxu0 0.0
      %1363 = vmatpush1.msra.mxu0 0.0
      %1364 = vmatprep.subr.mxu0 0.0
      %1365 = vmatpush1.msra.mxu0 0.0
      %1366 = vmatprep.subr.mxu0 0.0
      %1367 = vmatpush1.msra.mxu0 0.0
      %1368 = vmatprep.subr.mxu0 0.0
      %1369 = vmatpush1.msra.mxu0 0.0
      %1370 = vmatprep.subr.mxu0 0.0
      %1371 = vmatpush1.msra.mxu0 0.0
      %1372 = vmatprep.subr.mxu0 0.0
      %1373 = vmatpush1.msra.mxu0 0.0
      %1374 = vmatprep.subr.mxu0 0.0
      %1375 = vmatpush1.msra.mxu0 0.0
      %1376 = vmatprep.subr.mxu0 0.0
      %1377 = vmatpush1.msra.mxu0 0.0
      %1378 = vmatprep.subr.mxu0 0.0
      %1379 = vmatpush1.msra.mxu0 0.0
      %1380 = vmatprep.subr.mxu0 0.0
      %1381 = vmatpush1.msra.mxu0 0.0
      %1382 = vmatprep.subr.mxu0 0.0
      %1383 = vmatpush1.msra.mxu0 0.0
      %1384 = vmatprep.subr.mxu0 0.0
      %1385 = vmatpush1.msra.mxu0 0.0
      %1386 = vmatprep.subr.mxu0 0.0
      %1387 = vmatpush1.msra.mxu0 0.0
      %1388 = vmatprep.subr.mxu0 0.0
      %1389 = vmatpush1.msra.mxu0 0.0
      %1390 = vmatprep.subr.mxu0 0.0
      %1391 = vmatpush1.msra.mxu0 0.0
      %1392 = vmatprep.subr.mxu0 0.0
      %1393 = vmatpush1.msra.mxu0 0.0
      %1394 = vmatprep.mubr.f32.mxu0 0.0
      %1395 = vmatmul.mubr.f32.gmra.mrb[0].mxu0 %v1328
      %v1396 = vpop.f32.mrb[0].mxu0
      %v1397 = vadd.f32 0.0, %v1396
      %v1398 = vpop.f32.mrb[0].mxu0
      %1399 = vdwg.mxu0
      %1400 = vrot.lane.b32.xlu0 %v541, 64
      %v1401 = vpop.permute.xlu0 %1400
      %v1404 = vsel %vm554, %v1213, 0
      %1406 = vmatprep.subr.mxu0 0.0
      %1407 = vmatpush1.msra.mxu0 %v1401
      %1408 = vmatprep.subr.mxu0 0.0
      %1409 = vmatpush1.msra.mxu0 0.0
      %1410 = vmatprep.subr.mxu0 0.0
      %1411 = vmatpush1.msra.mxu0 0.0
      %1412 = vmatprep.subr.mxu0 0.0
      %1413 = vmatpush1.msra.mxu0 0.0
      %1414 = vmatprep.subr.mxu0 0.0
      %1415 = vmatpush1.msra.mxu0 0.0
      %1416 = vmatprep.subr.mxu0 0.0
      %1417 = vmatpush1.msra.mxu0 0.0
      %1418 = vmatprep.subr.mxu0 0.0
      %1419 = vmatpush1.msra.mxu0 0.0
      %1420 = vmatprep.subr.mxu0 0.0
      %1421 = vmatpush1.msra.mxu0 0.0
      %1422 = vmatprep.subr.mxu0 0.0
      %1423 = vmatpush1.msra.mxu0 0.0
      %1424 = vmatprep.subr.mxu0 0.0
      %1425 = vmatpush1.msra.mxu0 0.0
      %1426 = vmatprep.subr.mxu0 0.0
      %1427 = vmatpush1.msra.mxu0 0.0
      %1428 = vmatprep.subr.mxu0 0.0
      %1429 = vmatpush1.msra.mxu0 0.0
      %1430 = vmatprep.subr.mxu0 0.0
      %1431 = vmatpush1.msra.mxu0 0.0
      %1432 = vmatprep.subr.mxu0 0.0
      %1433 = vmatpush1.msra.mxu0 0.0
      %1434 = vmatprep.subr.mxu0 0.0
      %1435 = vmatpush1.msra.mxu0 0.0
      %1436 = vmatprep.subr.mxu0 0.0
      %1437 = vmatpush1.msra.mxu0 0.0
      %1438 = vmatprep.subr.mxu0 0.0
      %1439 = vmatpush1.msra.mxu0 0.0
      %1440 = vmatprep.subr.mxu0 0.0
      %1441 = vmatpush1.msra.mxu0 0.0
      %1442 = vmatprep.subr.mxu0 0.0
      %1443 = vmatpush1.msra.mxu0 0.0
      %1444 = vmatprep.subr.mxu0 0.0
      %1445 = vmatpush1.msra.mxu0 0.0
      %1446 = vmatprep.subr.mxu0 0.0
      %1447 = vmatpush1.msra.mxu0 0.0
      %1448 = vmatprep.subr.mxu0 0.0
      %1449 = vmatpush1.msra.mxu0 0.0
      %1450 = vmatprep.subr.mxu0 0.0
      %1451 = vmatpush1.msra.mxu0 0.0
      %1452 = vmatprep.subr.mxu0 0.0
      %1453 = vmatpush1.msra.mxu0 0.0
      %1454 = vmatprep.subr.mxu0 0.0
      %1455 = vmatpush1.msra.mxu0 0.0
      %1456 = vmatprep.subr.mxu0 0.0
      %1457 = vmatpush1.msra.mxu0 0.0
      %1458 = vmatprep.subr.mxu0 0.0
      %1459 = vmatpush1.msra.mxu0 0.0
      %1460 = vmatprep.subr.mxu0 0.0
      %1461 = vmatpush1.msra.mxu0 0.0
      %1462 = vmatprep.subr.mxu0 0.0
      %1463 = vmatpush1.msra.mxu0 0.0
      %1464 = vmatprep.subr.mxu0 0.0
      %1465 = vmatpush1.msra.mxu0 0.0
      %1466 = vmatprep.subr.mxu0 0.0
      %1467 = vmatpush1.msra.mxu0 0.0
      %1468 = vmatprep.subr.mxu0 0.0
      %1469 = vmatpush1.msra.mxu0 0.0
      %1470 = vmatprep.mubr.f32.mxu0 0.0
      %1471 = vmatmul.mubr.f32.gmra.mrb[0].mxu0 %v1404
      %v1472 = vpop.f32.mrb[0].mxu0
      %v1473 = vadd.f32 0.0, %v1472
      %v1474 = vpop.f32.mrb[0].mxu0
      %1475 = vdwg.mxu0
      %1476 = vrot.lane.b32.xlu0 %v543, 64
      %v1477 = vpop.permute.xlu0 %1476
      %v1480 = vsel %vm554, %v1215, 0
      %1482 = vmatprep.subr.mxu0 0.0
      %1483 = vmatpush1.msra.mxu0 %v1477
      %1484 = vmatprep.subr.mxu0 0.0
      %1485 = vmatpush1.msra.mxu0 0.0
      %1486 = vmatprep.subr.mxu0 0.0
      %1487 = vmatpush1.msra.mxu0 0.0
      %1488 = vmatprep.subr.mxu0 0.0
      %1489 = vmatpush1.msra.mxu0 0.0
      %1490 = vmatprep.subr.mxu0 0.0
      %1491 = vmatpush1.msra.mxu0 0.0
      %1492 = vmatprep.subr.mxu0 0.0
      %1493 = vmatpush1.msra.mxu0 0.0
      %1494 = vmatprep.subr.mxu0 0.0
      %1495 = vmatpush1.msra.mxu0 0.0
      %1496 = vmatprep.subr.mxu0 0.0
      %1497 = vmatpush1.msra.mxu0 0.0
      %1498 = vmatprep.subr.mxu0 0.0
      %1499 = vmatpush1.msra.mxu0 0.0
      %1500 = vmatprep.subr.mxu0 0.0
      %1501 = vmatpush1.msra.mxu0 0.0
      %1502 = vmatprep.subr.mxu0 0.0
      %1503 = vmatpush1.msra.mxu0 0.0
      %1504 = vmatprep.subr.mxu0 0.0
      %1505 = vmatpush1.msra.mxu0 0.0
      %1506 = vmatprep.subr.mxu0 0.0
      %1507 = vmatpush1.msra.mxu0 0.0
      %1508 = vmatprep.subr.mxu0 0.0
      %1509 = vmatpush1.msra.mxu0 0.0
      %1510 = vmatprep.subr.mxu0 0.0
      %1511 = vmatpush1.msra.mxu0 0.0
      %1512 = vmatprep.subr.mxu0 0.0
      %1513 = vmatpush1.msra.mxu0 0.0
      %1514 = vmatprep.subr.mxu0 0.0
      %1515 = vmatpush1.msra.mxu0 0.0
      %1516 = vmatprep.subr.mxu0 0.0
      %1517 = vmatpush1.msra.mxu0 0.0
      %1518 = vmatprep.subr.mxu0 0.0
      %1519 = vmatpush1.msra.mxu0 0.0
      %1520 = vmatprep.subr.mxu0 0.0
      %1521 = vmatpush1.msra.mxu0 0.0
      %1522 = vmatprep.subr.mxu0 0.0
      %1523 = vmatpush1.msra.mxu0 0.0
      %1524 = vmatprep.subr.mxu0 0.0
      %1525 = vmatpush1.msra.mxu0 0.0
      %1526 = vmatprep.subr.mxu0 0.0
      %1527 = vmatpush1.msra.mxu0 0.0
      %1528 = vmatprep.subr.mxu0 0.0
      %1529 = vmatpush1.msra.mxu0 0.0
      %1530 = vmatprep.subr.mxu0 0.0
      %1531 = vmatpush1.msra.mxu0 0.0
      %1532 = vmatprep.subr.mxu0 0.0
      %1533 = vmatpush1.msra.mxu0 0.0
      %1534 = vmatprep.subr.mxu0 0.0
      %1535 = vmatpush1.msra.mxu0 0.0
      %1536 = vmatprep.subr.mxu0 0.0
      %1537 = vmatpush1.msra.mxu0 0.0
      %1538 = vmatprep.subr.mxu0 0.0
      %1539 = vmatpush1.msra.mxu0 0.0
      %1540 = vmatprep.subr.mxu0 0.0
      %1541 = vmatpush1.msra.mxu0 0.0
      %1542 = vmatprep.subr.mxu0 0.0
      %1543 = vmatpush1.msra.mxu0 0.0
      %1544 = vmatprep.subr.mxu0 0.0
      %1545 = vmatpush1.msra.mxu0 0.0
      %1546 = vmatprep.mubr.f32.mxu0 0.0
      %1547 = vmatmul.mubr.f32.gmra.mrb[0].mxu0 %v1480
      %v1548 = vpop.f32.mrb[0].mxu0
      %v1549 = vadd.f32 0.0, %v1548
      %v1550 = vpop.f32.mrb[0].mxu0
      %1551 = vdwg.mxu0
      %1552 = vrot.lane.b32.xlu0 %v545, 64
      %v1553 = vpop.permute.xlu0 %1552
      %v1556 = vsel %vm554, %v1217, 0
      %1558 = vmatprep.subr.mxu0 0.0
      %1559 = vmatpush1.msra.mxu0 %v1553
      %1560 = vmatprep.subr.mxu0 0.0
      %1561 = vmatpush1.msra.mxu0 0.0
      %1562 = vmatprep.subr.mxu0 0.0
      %1563 = vmatpush1.msra.mxu0 0.0
      %1564 = vmatprep.subr.mxu0 0.0
      %1565 = vmatpush1.msra.mxu0 0.0
      %1566 = vmatprep.subr.mxu0 0.0
      %1567 = vmatpush1.msra.mxu0 0.0
      %1568 = vmatprep.subr.mxu0 0.0
      %1569 = vmatpush1.msra.mxu0 0.0
      %1570 = vmatprep.subr.mxu0 0.0
      %1571 = vmatpush1.msra.mxu0 0.0
      %1572 = vmatprep.subr.mxu0 0.0
      %1573 = vmatpush1.msra.mxu0 0.0
      %1574 = vmatprep.subr.mxu0 0.0
      %1575 = vmatpush1.msra.mxu0 0.0
      %1576 = vmatprep.subr.mxu0 0.0
      %1577 = vmatpush1.msra.mxu0 0.0
      %1578 = vmatprep.subr.mxu0 0.0
      %1579 = vmatpush1.msra.mxu0 0.0
      %1580 = vmatprep.subr.mxu0 0.0
      %1581 = vmatpush1.msra.mxu0 0.0
      %1582 = vmatprep.subr.mxu0 0.0
      %1583 = vmatpush1.msra.mxu0 0.0
      %1584 = vmatprep.subr.mxu0 0.0
      %1585 = vmatpush1.msra.mxu0 0.0
      %1586 = vmatprep.subr.mxu0 0.0
      %1587 = vmatpush1.msra.mxu0 0.0
      %1588 = vmatprep.subr.mxu0 0.0
      %1589 = vmatpush1.msra.mxu0 0.0
      %1590 = vmatprep.subr.mxu0 0.0
      %1591 = vmatpush1.msra.mxu0 0.0
      %1592 = vmatprep.subr.mxu0 0.0
      %1593 = vmatpush1.msra.mxu0 0.0
      %1594 = vmatprep.subr.mxu0 0.0
      %1595 = vmatpush1.msra.mxu0 0.0
      %1596 = vmatprep.subr.mxu0 0.0
      %1597 = vmatpush1.msra.mxu0 0.0
      %1598 = vmatprep.subr.mxu0 0.0
      %1599 = vmatpush1.msra.mxu0 0.0
      %1600 = vmatprep.subr.mxu0 0.0
      %1601 = vmatpush1.msra.mxu0 0.0
      %1602 = vmatprep.subr.mxu0 0.0
      %1603 = vmatpush1.msra.mxu0 0.0
      %1604 = vmatprep.subr.mxu0 0.0
      %1605 = vmatpush1.msra.mxu0 0.0
      %1606 = vmatprep.subr.mxu0 0.0
      %1607 = vmatpush1.msra.mxu0 0.0
      %1608 = vmatprep.subr.mxu0 0.0
      %1609 = vmatpush1.msra.mxu0 0.0
      %1610 = vmatprep.subr.mxu0 0.0
      %1611 = vmatpush1.msra.mxu0 0.0
      %1612 = vmatprep.subr.mxu0 0.0
      %1613 = vmatpush1.msra.mxu0 0.0
      %1614 = vmatprep.subr.mxu0 0.0
      %1615 = vmatpush1.msra.mxu0 0.0
      %1616 = vmatprep.subr.mxu0 0.0
      %1617 = vmatpush1.msra.mxu0 0.0
      %1618 = vmatprep.subr.mxu0 0.0
      %1619 = vmatpush1.msra.mxu0 0.0
      %1620 = vmatprep.subr.mxu0 0.0
      %1621 = vmatpush1.msra.mxu0 0.0
      %1622 = vmatprep.mubr.f32.mxu0 0.0
      %1623 = vmatmul.mubr.f32.gmra.mrb[0].mxu0 %v1556
      %v1624 = vpop.f32.mrb[0].mxu0
      %v1625 = vadd.f32 0.0, %v1624
      %v1626 = vpop.f32.mrb[0].mxu0
      %1627 = vdwg.mxu0
      %1628 = vrot.lane.b32.xlu0 %v547, 64
      %v1629 = vpop.permute.xlu0 %1628
      %v1632 = vsel %vm554, %v1219, 0
      %1634 = vmatprep.subr.mxu0 0.0
      %1635 = vmatpush1.msra.mxu0 %v1629
      %1636 = vmatprep.subr.mxu0 0.0
      %1637 = vmatpush1.msra.mxu0 0.0
      %1638 = vmatprep.subr.mxu0 0.0
      %1639 = vmatpush1.msra.mxu0 0.0
      %1640 = vmatprep.subr.mxu0 0.0
      %1641 = vmatpush1.msra.mxu0 0.0
      %1642 = vmatprep.subr.mxu0 0.0
      %1643 = vmatpush1.msra.mxu0 0.0
      %1644 = vmatprep.subr.mxu0 0.0
      %1645 = vmatpush1.msra.mxu0 0.0
      %1646 = vmatprep.subr.mxu0 0.0
      %1647 = vmatpush1.msra.mxu0 0.0
      %1648 = vmatprep.subr.mxu0 0.0
      %1649 = vmatpush1.msra.mxu0 0.0
      %1650 = vmatprep.subr.mxu0 0.0
      %1651 = vmatpush1.msra.mxu0 0.0
      %1652 = vmatprep.subr.mxu0 0.0
      %1653 = vmatpush1.msra.mxu0 0.0
      %1654 = vmatprep.subr.mxu0 0.0
      %1655 = vmatpush1.msra.mxu0 0.0
      %1656 = vmatprep.subr.mxu0 0.0
      %1657 = vmatpush1.msra.mxu0 0.0
      %1658 = vmatprep.subr.mxu0 0.0
      %1659 = vmatpush1.msra.mxu0 0.0
      %1660 = vmatprep.subr.mxu0 0.0
      %1661 = vmatpush1.msra.mxu0 0.0
      %1662 = vmatprep.subr.mxu0 0.0
      %1663 = vmatpush1.msra.mxu0 0.0
      %1664 = vmatprep.subr.mxu0 0.0
      %1665 = vmatpush1.msra.mxu0 0.0
      %1666 = vmatprep.subr.mxu0 0.0
      %1667 = vmatpush1.msra.mxu0 0.0
      %1668 = vmatprep.subr.mxu0 0.0
      %1669 = vmatpush1.msra.mxu0 0.0
      %1670 = vmatprep.subr.mxu0 0.0
      %1671 = vmatpush1.msra.mxu0 0.0
      %1672 = vmatprep.subr.mxu0 0.0
      %1673 = vmatpush1.msra.mxu0 0.0
      %1674 = vmatprep.subr.mxu0 0.0
      %1675 = vmatpush1.msra.mxu0 0.0
      %1676 = vmatprep.subr.mxu0 0.0
      %1677 = vmatpush1.msra.mxu0 0.0
      %1678 = vmatprep.subr.mxu0 0.0
      %1679 = vmatpush1.msra.mxu0 0.0
      %1680 = vmatprep.subr.mxu0 0.0
      %1681 = vmatpush1.msra.mxu0 0.0
      %1682 = vmatprep.subr.mxu0 0.0
      %1683 = vmatpush1.msra.mxu0 0.0
      %1684 = vmatprep.subr.mxu0 0.0
      %1685 = vmatpush1.msra.mxu0 0.0
      %1686 = vmatprep.subr.mxu0 0.0
      %1687 = vmatpush1.msra.mxu0 0.0
      %1688 = vmatprep.subr.mxu0 0.0
      %1689 = vmatpush1.msra.mxu0 0.0
      %1690 = vmatprep.subr.mxu0 0.0
      %1691 = vmatpush1.msra.mxu0 0.0
      %1692 = vmatprep.subr.mxu0 0.0
      %1693 = vmatpush1.msra.mxu0 0.0
      %1694 = vmatprep.subr.mxu0 0.0
      %1695 = vmatpush1.msra.mxu0 0.0
      %1696 = vmatprep.subr.mxu0 0.0
      %1697 = vmatpush1.msra.mxu0 0.0
      %1698 = vmatprep.mubr.f32.mxu0 0.0
      %1699 = vmatmul.mubr.f32.gmra.mrb[0].mxu0 %v1632
      %v1700 = vpop.f32.mrb[0].mxu0
      %v1701 = vadd.f32 0.0, %v1700
      %v1702 = vpop.f32.mrb[0].mxu0
      %1703 = vdwg.mxu0
      %1704 = vrot.lane.b32.xlu0 %v549, 64
      %v1705 = vpop.permute.xlu0 %1704
      %v1708 = vsel %vm554, %v1221, 0
      %1710 = vmatprep.subr.mxu0 0.0
      %1711 = vmatpush1.msra.mxu0 %v1705
      %1712 = vmatprep.subr.mxu0 0.0
      %1713 = vmatpush1.msra.mxu0 0.0
      %1714 = vmatprep.subr.mxu0 0.0
      %1715 = vmatpush1.msra.mxu0 0.0
      %1716 = vmatprep.subr.mxu0 0.0
      %1717 = vmatpush1.msra.mxu0 0.0
      %1718 = vmatprep.subr.mxu0 0.0
      %1719 = vmatpush1.msra.mxu0 0.0
      %1720 = vmatprep.subr.mxu0 0.0
      %1721 = vmatpush1.msra.mxu0 0.0
      %1722 = vmatprep.subr.mxu0 0.0
      %1723 = vmatpush1.msra.mxu0 0.0
      %1724 = vmatprep.subr.mxu0 0.0
      %1725 = vmatpush1.msra.mxu0 0.0
      %1726 = vmatprep.subr.mxu0 0.0
      %1727 = vmatpush1.msra.mxu0 0.0
      %1728 = vmatprep.subr.mxu0 0.0
      %1729 = vmatpush1.msra.mxu0 0.0
      %1730 = vmatprep.subr.mxu0 0.0
      %1731 = vmatpush1.msra.mxu0 0.0
      %1732 = vmatprep.subr.mxu0 0.0
      %1733 = vmatpush1.msra.mxu0 0.0
      %1734 = vmatprep.subr.mxu0 0.0
      %1735 = vmatpush1.msra.mxu0 0.0
      %1736 = vmatprep.subr.mxu0 0.0
      %1737 = vmatpush1.msra.mxu0 0.0
      %1738 = vmatprep.subr.mxu0 0.0
      %1739 = vmatpush1.msra.mxu0 0.0
      %1740 = vmatprep.subr.mxu0 0.0
      %1741 = vmatpush1.msra.mxu0 0.0
      %1742 = vmatprep.subr.mxu0 0.0
      %1743 = vmatpush1.msra.mxu0 0.0
      %1744 = vmatprep.subr.mxu0 0.0
      %1745 = vmatpush1.msra.mxu0 0.0
      %1746 = vmatprep.subr.mxu0 0.0
      %1747 = vmatpush1.msra.mxu0 0.0
      %1748 = vmatprep.subr.mxu0 0.0
      %1749 = vmatpush1.msra.mxu0 0.0
      %1750 = vmatprep.subr.mxu0 0.0
      %1751 = vmatpush1.msra.mxu0 0.0
      %1752 = vmatprep.subr.mxu0 0.0
      %1753 = vmatpush1.msra.mxu0 0.0
      %1754 = vmatprep.subr.mxu0 0.0
      %1755 = vmatpush1.msra.mxu0 0.0
      %1756 = vmatprep.subr.mxu0 0.0
      %1757 = vmatpush1.msra.mxu0 0.0
      %1758 = vmatprep.subr.mxu0 0.0
      %1759 = vmatpush1.msra.mxu0 0.0
      %1760 = vmatprep.subr.mxu0 0.0
      %1761 = vmatpush1.msra.mxu0 0.0
      %1762 = vmatprep.subr.mxu0 0.0
      %1763 = vmatpush1.msra.mxu0 0.0
      %1764 = vmatprep.subr.mxu0 0.0
      %1765 = vmatpush1.msra.mxu0 0.0
      %1766 = vmatprep.subr.mxu0 0.0
      %1767 = vmatpush1.msra.mxu0 0.0
      %1768 = vmatprep.subr.mxu0 0.0
      %1769 = vmatpush1.msra.mxu0 0.0
      %1770 = vmatprep.subr.mxu0 0.0
      %1771 = vmatpush1.msra.mxu0 0.0
      %1772 = vmatprep.subr.mxu0 0.0
      %1773 = vmatpush1.msra.mxu0 0.0
      %1774 = vmatprep.mubr.f32.mxu0 0.0
      %1775 = vmatmul.mubr.f32.gmra.mrb[0].mxu0 %v1708
      %v1776 = vpop.f32.mrb[0].mxu0
      %v1777 = vadd.f32 0.0, %v1776
      %v1778 = vpop.f32.mrb[0].mxu0
      %1779 = vdwg.mxu0
      %1780 = vrot.lane.b32.xlu0 %v551, 64
      %v1781 = vpop.permute.xlu0 %1780
      %v1784 = vsel %vm554, %v1223, 0
      %1786 = vmatprep.subr.mxu0 0.0
      %1787 = vmatpush1.msra.mxu0 %v1781
      %1788 = vmatprep.subr.mxu0 0.0
      %1789 = vmatpush1.msra.mxu0 0.0
      %1790 = vmatprep.subr.mxu0 0.0
      %1791 = vmatpush1.msra.mxu0 0.0
      %1792 = vmatprep.subr.mxu0 0.0
      %1793 = vmatpush1.msra.mxu0 0.0
      %1794 = vmatprep.subr.mxu0 0.0
      %1795 = vmatpush1.msra.mxu0 0.0
      %1796 = vmatprep.subr.mxu0 0.0
      %1797 = vmatpush1.msra.mxu0 0.0
      %1798 = vmatprep.subr.mxu0 0.0
      %1799 = vmatpush1.msra.mxu0 0.0
      %1800 = vmatprep.subr.mxu0 0.0
      %1801 = vmatpush1.msra.mxu0 0.0
      %1802 = vmatprep.subr.mxu0 0.0
      %1803 = vmatpush1.msra.mxu0 0.0
      %1804 = vmatprep.subr.mxu0 0.0
      %1805 = vmatpush1.msra.mxu0 0.0
      %1806 = vmatprep.subr.mxu0 0.0
      %1807 = vmatpush1.msra.mxu0 0.0
      %1808 = vmatprep.subr.mxu0 0.0
      %1809 = vmatpush1.msra.mxu0 0.0
      %1810 = vmatprep.subr.mxu0 0.0
      %1811 = vmatpush1.msra.mxu0 0.0
      %1812 = vmatprep.subr.mxu0 0.0
      %1813 = vmatpush1.msra.mxu0 0.0
      %1814 = vmatprep.subr.mxu0 0.0
      %1815 = vmatpush1.msra.mxu0 0.0
      %1816 = vmatprep.subr.mxu0 0.0
      %1817 = vmatpush1.msra.mxu0 0.0
      %1818 = vmatprep.subr.mxu0 0.0
      %1819 = vmatpush1.msra.mxu0 0.0
      %1820 = vmatprep.subr.mxu0 0.0
      %1821 = vmatpush1.msra.mxu0 0.0
      %1822 = vmatprep.subr.mxu0 0.0
      %1823 = vmatpush1.msra.mxu0 0.0
      %1824 = vmatprep.subr.mxu0 0.0
      %1825 = vmatpush1.msra.mxu0 0.0
      %1826 = vmatprep.subr.mxu0 0.0
      %1827 = vmatpush1.msra.mxu0 0.0
      %1828 = vmatprep.subr.mxu0 0.0
      %1829 = vmatpush1.msra.mxu0 0.0
      %1830 = vmatprep.subr.mxu0 0.0
      %1831 = vmatpush1.msra.mxu0 0.0
      %1832 = vmatprep.subr.mxu0 0.0
      %1833 = vmatpush1.msra.mxu0 0.0
      %1834 = vmatprep.subr.mxu0 0.0
      %1835 = vmatpush1.msra.mxu0 0.0
      %1836 = vmatprep.subr.mxu0 0.0
      %1837 = vmatpush1.msra.mxu0 0.0
      %1838 = vmatprep.subr.mxu0 0.0
      %1839 = vmatpush1.msra.mxu0 0.0
      %1840 = vmatprep.subr.mxu0 0.0
      %1841 = vmatpush1.msra.mxu0 0.0
      %1842 = vmatprep.subr.mxu0 0.0
      %1843 = vmatpush1.msra.mxu0 0.0
      %1844 = vmatprep.subr.mxu0 0.0
      %1845 = vmatpush1.msra.mxu0 0.0
      %1846 = vmatprep.subr.mxu0 0.0
      %1847 = vmatpush1.msra.mxu0 0.0
      %1848 = vmatprep.subr.mxu0 0.0
      %1849 = vmatpush1.msra.mxu0 0.0
      %1850 = vmatprep.mubr.f32.mxu0 0.0
      %1851 = vmatmul.mubr.f32.gmra.mrb[0].mxu0 %v1784
      %v1852 = vpop.f32.mrb[0].mxu0
      %v1853 = vadd.f32 0.0, %v1852
      %v1854 = vpop.f32.mrb[0].mxu0
      %1855 = vdwg.mxu0
      %v1856 = vrcp.pop %v1226
      %v1857 = vrcp.pop %v1229
      %v1858 = vrcp.pop %v1232
      %v1859 = vrcp.pop %v1235
      %v1860 = vrcp.pop %v1238
      %v1861 = vrcp.pop %v1241
      %v1862 = vrcp.pop %v1244
      %v1863 = vrcp.pop %v1247
      %v1864 = vmul.f32 %v1321, %v1856
      %v1865 = vmul.f32 %v1397, %v1857
      %v1866 = vmul.f32 %v1473, %v1858
      %v1867 = vmul.f32 %v1549, %v1859
      %v1868 = vmul.f32 %v1625, %v1860
      %v1869 = vmul.f32 %v1701, %v1861
      %v1870 = vmul.f32 %v1777, %v1862
      %v1871 = vmul.f32 %v1853, %v1863
      %v1872 = vld [vmem:[%s414] sm:$0xff]
      %v1873 = vld [vmem:[%s414 + $0x8] sm:$0xff]
      %v1874 = vld [vmem:[%s414 + $0x10] sm:$0xff]
      %v1875 = vld [vmem:[%s414 + $0x18] sm:$0xff]
      %v1877 = vsel %vm554, %v1866, 0
      %v1880 = vsel %vm554, %v1867, 0
      %1882 = vmatprep.subr.mxu0 0.0
      %1883 = vmatpush1.msra.mxu0 %v1873
      %1884 = vmatprep.subr.mxu0 0.0
      %1885 = vmatpush1.msra.mxu0 0.0
      %1886 = vmatprep.subr.mxu0 0.0
      %1887 = vmatpush1.msra.mxu0 0.0
      %1888 = vmatprep.subr.mxu0 0.0
      %1889 = vmatpush1.msra.mxu0 0.0
      %1890 = vmatprep.subr.mxu0 0.0
      %1891 = vmatpush1.msra.mxu0 0.0
      %1892 = vmatprep.subr.mxu0 0.0
      %1893 = vmatpush1.msra.mxu0 0.0
      %1894 = vmatprep.subr.mxu0 0.0
      %1895 = vmatpush1.msra.mxu0 0.0
      %1896 = vmatprep.subr.mxu0 0.0
      %1897 = vmatpush1.msra.mxu0 0.0
      %1898 = vmatprep.subr.mxu0 0.0
      %1899 = vmatpush1.msra.mxu0 0.0
      %1900 = vmatprep.subr.mxu0 0.0
      %1901 = vmatpush1.msra.mxu0 0.0
      %1902 = vmatprep.subr.mxu0 0.0
      %1903 = vmatpush1.msra.mxu0 0.0
      %1904 = vmatprep.subr.mxu0 0.0
      %1905 = vmatpush1.msra.mxu0 0.0
      %1906 = vmatprep.subr.mxu0 0.0
      %1907 = vmatpush1.msra.mxu0 0.0
      %1908 = vmatprep.subr.mxu0 0.0
      %1909 = vmatpush1.msra.mxu0 0.0
      %1910 = vmatprep.subr.mxu0 0.0
      %1911 = vmatpush1.msra.mxu0 0.0
      %1912 = vmatprep.subr.mxu0 0.0
      %1913 = vmatpush1.msra.mxu0 0.0
      %1914 = vmatprep.subr.mxu0 0.0
      %1915 = vmatpush1.msra.mxu0 0.0
      %1916 = vmatprep.subr.mxu0 0.0
      %1917 = vmatpush1.msra.mxu0 0.0
      %1918 = vmatprep.subr.mxu0 0.0
      %1919 = vmatpush1.msra.mxu0 0.0
      %1920 = vmatprep.subr.mxu0 0.0
      %1921 = vmatpush1.msra.mxu0 0.0
      %1922 = vmatprep.subr.mxu0 0.0
      %1923 = vmatpush1.msra.mxu0 0.0
      %1924 = vmatprep.subr.mxu0 0.0
      %1925 = vmatpush1.msra.mxu0 0.0
      %1926 = vmatprep.subr.mxu0 0.0
      %1927 = vmatpush1.msra.mxu0 0.0
      %1928 = vmatprep.subr.mxu0 0.0
      %1929 = vmatpush1.msra.mxu0 0.0
      %1930 = vmatprep.subr.mxu0 0.0
      %1931 = vmatpush1.msra.mxu0 0.0
      %1932 = vmatprep.subr.mxu0 0.0
      %1933 = vmatpush1.msra.mxu0 0.0
      %1934 = vmatprep.subr.mxu0 0.0
      %1935 = vmatpush1.msra.mxu0 0.0
      %1936 = vmatprep.subr.mxu0 0.0
      %1937 = vmatpush1.msra.mxu0 0.0
      %1938 = vmatprep.subr.mxu0 0.0
      %1939 = vmatpush1.msra.mxu0 0.0
      %1940 = vmatprep.subr.mxu0 0.0
      %1941 = vmatpush1.msra.mxu0 0.0
      %1942 = vmatprep.subr.mxu0 0.0
      %1943 = vmatpush1.msra.mxu0 0.0
      %1944 = vmatprep.subr.mxu0 0.0
      %1945 = vmatpush1.msra.mxu0 0.0
      %1946 = vmatprep.mubr.f32.mxu0 0.0
      %1947 = vmatmul.mubr.f32.gmra.mrb[0].mxu0 %v1877
      %v1948 = vpop.f32.mrb[0].mxu0
      %v1949 = vadd.f32 0.0, %v1948
      %v1950 = vpop.f32.mrb[0].mxu0
      %1951 = vmatprep.mubr.f32.mxu0 0.0
      %1952 = vmatmul.mubr.f32.gmra.mrb[0].mxu0 %v1880
      %v1953 = vpop.f32.mrb[0].mxu0
      %v1954 = vadd.f32 0.0, %v1953
      %v1955 = vpop.f32.mrb[0].mxu0
      %1956 = vdwg.mxu0
      %v1958 = vsel %vm554, %v1864, 0
      %v1961 = vsel %vm554, %v1865, 0
      %1963 = vmatprep.subr.mxu0 0.0
      %1964 = vmatpush1.msra.mxu0 %v1872
      %1965 = vmatprep.subr.mxu0 0.0
      %1966 = vmatpush1.msra.mxu0 0.0
      %1967 = vmatprep.subr.mxu0 0.0
      %1968 = vmatpush1.msra.mxu0 0.0
      %1969 = vmatprep.subr.mxu0 0.0
      %1970 = vmatpush1.msra.mxu0 0.0
      %1971 = vmatprep.subr.mxu0 0.0
      %1972 = vmatpush1.msra.mxu0 0.0
      %1973 = vmatprep.subr.mxu0 0.0
      %1974 = vmatpush1.msra.mxu0 0.0
      %1975 = vmatprep.subr.mxu0 0.0
      %1976 = vmatpush1.msra.mxu0 0.0
      %1977 = vmatprep.subr.mxu0 0.0
      %1978 = vmatpush1.msra.mxu0 0.0
      %1979 = vmatprep.subr.mxu0 0.0
      %1980 = vmatpush1.msra.mxu0 0.0
      %1981 = vmatprep.subr.mxu0 0.0
      %1982 = vmatpush1.msra.mxu0 0.0
      %1983 = vmatprep.subr.mxu0 0.0
      %1984 = vmatpush1.msra.mxu0 0.0
      %1985 = vmatprep.subr.mxu0 0.0
      %1986 = vmatpush1.msra.mxu0 0.0
      %1987 = vmatprep.subr.mxu0 0.0
      %1988 = vmatpush1.msra.mxu0 0.0
      %1989 = vmatprep.subr.mxu0 0.0
      %1990 = vmatpush1.msra.mxu0 0.0
      %1991 = vmatprep.subr.mxu0 0.0
      %1992 = vmatpush1.msra.mxu0 0.0
      %1993 = vmatprep.subr.mxu0 0.0
      %1994 = vmatpush1.msra.mxu0 0.0
      %1995 = vmatprep.subr.mxu0 0.0
      %1996 = vmatpush1.msra.mxu0 0.0
      %1997 = vmatprep.subr.mxu0 0.0
      %1998 = vmatpush1.msra.mxu0 0.0
      %1999 = vmatprep.subr.mxu0 0.0
      %2000 = vmatpush1.msra.mxu0 0.0
      %2001 = vmatprep.subr.mxu0 0.0
      %2002 = vmatpush1.msra.mxu0 0.0
      %2003 = vmatprep.subr.mxu0 0.0
      %2004 = vmatpush1.msra.mxu0 0.0
      %2005 = vmatprep.subr.mxu0 0.0
      %2006 = vmatpush1.msra.mxu0 0.0
      %2007 = vmatprep.subr.mxu0 0.0
      %2008 = vmatpush1.msra.mxu0 0.0
      %2009 = vmatprep.subr.mxu0 0.0
      %2010 = vmatpush1.msra.mxu0 0.0
      %2011 = vmatprep.subr.mxu0 0.0
      %2012 = vmatpush1.msra.mxu0 0.0
      %2013 = vmatprep.subr.mxu0 0.0
      %2014 = vmatpush1.msra.mxu0 0.0
      %2015 = vmatprep.subr.mxu0 0.0
      %2016 = vmatpush1.msra.mxu0 0.0
      %2017 = vmatprep.subr.mxu0 0.0
      %2018 = vmatpush1.msra.mxu0 0.0
      %2019 = vmatprep.subr.mxu0 0.0
      %2020 = vmatpush1.msra.mxu0 0.0
      %2021 = vmatprep.subr.mxu0 0.0
      %2022 = vmatpush1.msra.mxu0 0.0
      %2023 = vmatprep.subr.mxu0 0.0
      %2024 = vmatpush1.msra.mxu0 0.0
      %2025 = vmatprep.subr.mxu0 0.0
      %2026 = vmatpush1.msra.mxu0 0.0
      %2027 = vmatprep.mubr.f32.mxu0 0.0
      %2028 = vmatmul.mubr.f32.gmra.mrb[0].mxu0 %v1958
      %v2029 = vpop.f32.mrb[0].mxu0
      %v2030 = vadd.f32 %v1949, %v2029
      %v2031 = vpop.f32.mrb[0].mxu0
      %2032 = vmatprep.mubr.f32.mxu0 0.0
      %2033 = vmatmul.mubr.f32.gmra.mrb[0].mxu0 %v1961
      %v2034 = vpop.f32.mrb[0].mxu0
      %v2035 = vadd.f32 %v1954, %v2034
      %v2036 = vpop.f32.mrb[0].mxu0
      %2037 = vdwg.mxu0
      %v2039 = vsel %vm554, %v1868, 0
      %v2042 = vsel %vm554, %v1869, 0
      %2044 = vmatprep.subr.mxu0 0.0
      %2045 = vmatpush1.msra.mxu0 %v1874
      %2046 = vmatprep.subr.mxu0 0.0
      %2047 = vmatpush1.msra.mxu0 0.0
      %2048 = vmatprep.subr.mxu0 0.0
      %2049 = vmatpush1.msra.mxu0 0.0
      %2050 = vmatprep.subr.mxu0 0.0
      %2051 = vmatpush1.msra.mxu0 0.0
      %2052 = vmatprep.subr.mxu0 0.0
      %2053 = vmatpush1.msra.mxu0 0.0
      %2054 = vmatprep.subr.mxu0 0.0
      %2055 = vmatpush1.msra.mxu0 0.0
      %2056 = vmatprep.subr.mxu0 0.0
      %2057 = vmatpush1.msra.mxu0 0.0
      %2058 = vmatprep.subr.mxu0 0.0
      %2059 = vmatpush1.msra.mxu0 0.0
      %2060 = vmatprep.subr.mxu0 0.0
      %2061 = vmatpush1.msra.mxu0 0.0
      %2062 = vmatprep.subr.mxu0 0.0
      %2063 = vmatpush1.msra.mxu0 0.0
      %2064 = vmatprep.subr.mxu0 0.0
      %2065 = vmatpush1.msra.mxu0 0.0
      %2066 = vmatprep.subr.mxu0 0.0
      %2067 = vmatpush1.msra.mxu0 0.0
      %2068 = vmatprep.subr.mxu0 0.0
      %2069 = vmatpush1.msra.mxu0 0.0
      %2070 = vmatprep.subr.mxu0 0.0
      %2071 = vmatpush1.msra.mxu0 0.0
      %2072 = vmatprep.subr.mxu0 0.0
      %2073 = vmatpush1.msra.mxu0 0.0
      %2074 = vmatprep.subr.mxu0 0.0
      %2075 = vmatpush1.msra.mxu0 0.0
      %2076 = vmatprep.subr.mxu0 0.0
      %2077 = vmatpush1.msra.mxu0 0.0
      %2078 = vmatprep.subr.mxu0 0.0
      %2079 = vmatpush1.msra.mxu0 0.0
      %2080 = vmatprep.subr.mxu0 0.0
      %2081 = vmatpush1.msra.mxu0 0.0
      %2082 = vmatprep.subr.mxu0 0.0
      %2083 = vmatpush1.msra.mxu0 0.0
      %2084 = vmatprep.subr.mxu0 0.0
      %2085 = vmatpush1.msra.mxu0 0.0
      %2086 = vmatprep.subr.mxu0 0.0
      %2087 = vmatpush1.msra.mxu0 0.0
      %2088 = vmatprep.subr.mxu0 0.0
      %2089 = vmatpush1.msra.mxu0 0.0
      %2090 = vmatprep.subr.mxu0 0.0
      %2091 = vmatpush1.msra.mxu0 0.0
      %2092 = vmatprep.subr.mxu0 0.0
      %2093 = vmatpush1.msra.mxu0 0.0
      %2094 = vmatprep.subr.mxu0 0.0
      %2095 = vmatpush1.msra.mxu0 0.0
      %2096 = vmatprep.subr.mxu0 0.0
      %2097 = vmatpush1.msra.mxu0 0.0
      %2098 = vmatprep.subr.mxu0 0.0
      %2099 = vmatpush1.msra.mxu0 0.0
      %2100 = vmatprep.subr.mxu0 0.0
      %2101 = vmatpush1.msra.mxu0 0.0
      %2102 = vmatprep.subr.mxu0 0.0
      %2103 = vmatpush1.msra.mxu0 0.0
      %2104 = vmatprep.subr.mxu0 0.0
      %2105 = vmatpush1.msra.mxu0 0.0
      %2106 = vmatprep.subr.mxu0 0.0
      %2107 = vmatpush1.msra.mxu0 0.0
      %2108 = vmatprep.mubr.f32.mxu0 0.0
      %2109 = vmatmul.mubr.f32.gmra.mrb[0].mxu0 %v2039
      %v2110 = vpop.f32.mrb[0].mxu0
      %v2111 = vadd.f32 0.0, %v2110
      %v2112 = vpop.f32.mrb[0].mxu0
      %2113 = vmatprep.mubr.f32.mxu0 0.0
      %2114 = vmatmul.mubr.f32.gmra.mrb[0].mxu0 %v2042
      %v2115 = vpop.f32.mrb[0].mxu0
      %v2116 = vadd.f32 0.0, %v2115
      %v2117 = vpop.f32.mrb[0].mxu0
      %2118 = vdwg.mxu0
      %v2119 = vadd.f32 %v2030, %v2111
      %v2120 = vadd.f32 %v2035, %v2116
      %v2122 = vsel %vm554, %v1870, 0
      %v2125 = vsel %vm554, %v1871, 0
      %2127 = vmatprep.subr.mxu0 0.0
      %2128 = vmatpush1.msra.mxu0 %v1875
      %2129 = vmatprep.subr.mxu0 0.0
      %2130 = vmatpush1.msra.mxu0 0.0
      %2131 = vmatprep.subr.mxu0 0.0
      %2132 = vmatpush1.msra.mxu0 0.0
      %2133 = vmatprep.subr.mxu0 0.0
      %2134 = vmatpush1.msra.mxu0 0.0
      %2135 = vmatprep.subr.mxu0 0.0
      %2136 = vmatpush1.msra.mxu0 0.0
      %2137 = vmatprep.subr.mxu0 0.0
      %2138 = vmatpush1.msra.mxu0 0.0
      %2139 = vmatprep.subr.mxu0 0.0
      %2140 = vmatpush1.msra.mxu0 0.0
      %2141 = vmatprep.subr.mxu0 0.0
      %2142 = vmatpush1.msra.mxu0 0.0
      %2143 = vmatprep.subr.mxu0 0.0
      %2144 = vmatpush1.msra.mxu0 0.0
      %2145 = vmatprep.subr.mxu0 0.0
      %2146 = vmatpush1.msra.mxu0 0.0
      %2147 = vmatprep.subr.mxu0 0.0
      %2148 = vmatpush1.msra.mxu0 0.0
      %2149 = vmatprep.subr.mxu0 0.0
      %2150 = vmatpush1.msra.mxu0 0.0
      %2151 = vmatprep.subr.mxu0 0.0
      %2152 = vmatpush1.msra.mxu0 0.0
      %2153 = vmatprep.subr.mxu0 0.0
      %2154 = vmatpush1.msra.mxu0 0.0
      %2155 = vmatprep.subr.mxu0 0.0
      %2156 = vmatpush1.msra.mxu0 0.0
      %2157 = vmatprep.subr.mxu0 0.0
      %2158 = vmatpush1.msra.mxu0 0.0
      %2159 = vmatprep.subr.mxu0 0.0
      %2160 = vmatpush1.msra.mxu0 0.0
      %2161 = vmatprep.subr.mxu0 0.0
      %2162 = vmatpush1.msra.mxu0 0.0
      %2163 = vmatprep.subr.mxu0 0.0
      %2164 = vmatpush1.msra.mxu0 0.0
      %2165 = vmatprep.subr.mxu0 0.0
      %2166 = vmatpush1.msra.mxu0 0.0
      %2167 = vmatprep.subr.mxu0 0.0
      %2168 = vmatpush1.msra.mxu0 0.0
      %2169 = vmatprep.subr.mxu0 0.0
      %2170 = vmatpush1.msra.mxu0 0.0
      %2171 = vmatprep.subr.mxu0 0.0
      %2172 = vmatpush1.msra.mxu0 0.0
      %2173 = vmatprep.subr.mxu0 0.0
      %2174 = vmatpush1.msra.mxu0 0.0
      %2175 = vmatprep.subr.mxu0 0.0
      %2176 = vmatpush1.msra.mxu0 0.0
      %2177 = vmatprep.subr.mxu0 0.0
      %2178 = vmatpush1.msra.mxu0 0.0
      %2179 = vmatprep.subr.mxu0 0.0
      %2180 = vmatpush1.msra.mxu0 0.0
      %2181 = vmatprep.subr.mxu0 0.0
      %2182 = vmatpush1.msra.mxu0 0.0
      %2183 = vmatprep.subr.mxu0 0.0
      %2184 = vmatpush1.msra.mxu0 0.0
      %2185 = vmatprep.subr.mxu0 0.0
      %2186 = vmatpush1.msra.mxu0 0.0
      %2187 = vmatprep.subr.mxu0 0.0
      %2188 = vmatpush1.msra.mxu0 0.0
      %2189 = vmatprep.subr.mxu0 0.0
      %2190 = vmatpush1.msra.mxu0 0.0
      %2191 = vmatprep.mubr.f32.mxu0 0.0
      %2192 = vmatmul.mubr.f32.gmra.mrb[0].mxu0 %v2122
      %v2193 = vpop.f32.mrb[0].mxu0
      %v2194 = vadd.f32 0.0, %v2193
      %v2195 = vpop.f32.mrb[0].mxu0
      %2196 = vmatprep.mubr.f32.mxu0 0.0
      %2197 = vmatmul.mubr.f32.gmra.mrb[0].mxu0 %v2125
      %v2198 = vpop.f32.mrb[0].mxu0
      %v2199 = vadd.f32 0.0, %v2198
      %v2200 = vpop.f32.mrb[0].mxu0
      %2201 = vdwg.mxu0
      %v2202 = vadd.f32 %v2119, %v2194
      %v2203 = vadd.f32 %v2120, %v2199
      %v2204 = vadd.f32 %v443, %v2202
      %v2205 = vadd.f32 %v444, %v2203
      %v2206 = vld [vmem:[%s417] sm:$0x1]
      %v2208 = vlaneseq
      %v2209 = vshrl.u32 %v2208, 7
      %v2210 = vsub.s32 0, %v2209
      %v2211 = vrot.slane %v2206, %v2210
      %v2213 = vadd.f32 %v2204, %v2211
      %v2214 = vadd.f32 %v2205, %v2211
      %v2215 = vld [vmem:[%s422] sm:$0xff]
      %v2216 = vld [vmem:[%s422 + $0x8] sm:$0xff]
      %v2217 = vld [vmem:[%s422 + $0x10] sm:$0xff]
      %v2218 = vld [vmem:[%s422 + $0x18] sm:$0xff]
      %v2219 = vld [vmem:[%s425] sm:$0x1]
      %v2221 = vlaneseq
      %v2222 = vshrl.u32 %v2221, 7
      %v2223 = vsub.s32 0, %v2222
      %v2224 = vrot.slane %v2219, %v2223
      %v2227 = vsel %vm456, %v2213, 0
      %v2230 = vsel %vm456, %v2214, 0
      %2232 = vmatprep.subr.mxu0 0.0
      %2233 = vmatpush1.msra.mxu0 %v2215
      %2234 = vmatprep.subr.mxu0 0.0
      %2235 = vmatpush1.msra.mxu0 %v2216
      %2236 = vmatprep.subr.mxu0 0.0
      %2237 = vmatpush1.msra.mxu0 %v2217
      %2238 = vmatprep.subr.mxu0 0.0
      %2239 = vmatpush1.msra.mxu0 %v2218
      %2240 = vmatprep.subr.mxu0 0.0
      %2241 = vmatpush1.msra.mxu0 0.0
      %2242 = vmatprep.subr.mxu0 0.0
      %2243 = vmatpush1.msra.mxu0 0.0
      %2244 = vmatprep.subr.mxu0 0.0
      %2245 = vmatpush1.msra.mxu0 0.0
      %2246 = vmatprep.subr.mxu0 0.0
      %2247 = vmatpush1.msra.mxu0 0.0
      %2248 = vmatprep.subr.mxu0 0.0
      %2249 = vmatpush1.msra.mxu0 0.0
      %2250 = vmatprep.subr.mxu0 0.0
      %2251 = vmatpush1.msra.mxu0 0.0
      %2252 = vmatprep.subr.mxu0 0.0
      %2253 = vmatpush1.msra.mxu0 0.0
      %2254 = vmatprep.subr.mxu0 0.0
      %2255 = vmatpush1.msra.mxu0 0.0
      %2256 = vmatprep.subr.mxu0 0.0
      %2257 = vmatpush1.msra.mxu0 0.0
      %2258 = vmatprep.subr.mxu0 0.0
      %2259 = vmatpush1.msra.mxu0 0.0
      %2260 = vmatprep.subr.mxu0 0.0
      %2261 = vmatpush1.msra.mxu0 0.0
      %2262 = vmatprep.subr.mxu0 0.0
      %2263 = vmatpush1.msra.mxu0 0.0
      %2264 = vmatprep.subr.mxu0 0.0
      %2265 = vmatpush1.msra.mxu0 0.0
      %2266 = vmatprep.subr.mxu0 0.0
      %2267 = vmatpush1.msra.mxu0 0.0
      %2268 = vmatprep.subr.mxu0 0.0
      %2269 = vmatpush1.msra.mxu0 0.0
      %2270 = vmatprep.subr.mxu0 0.0
      %2271 = vmatpush1.msra.mxu0 0.0
      %2272 = vmatprep.subr.mxu0 0.0
      %2273 = vmatpush1.msra.mxu0 0.0
      %2274 = vmatprep.subr.mxu0 0.0
      %2275 = vmatpush1.msra.mxu0 0.0
      %2276 = vmatprep.subr.mxu0 0.0
      %2277 = vmatpush1.msra.mxu0 0.0
      %2278 = vmatprep.subr.mxu0 0.0
      %2279 = vmatpush1.msra.mxu0 0.0
      %2280 = vmatprep.subr.mxu0 0.0
      %2281 = vmatpush1.msra.mxu0 0.0
      %2282 = vmatprep.subr.mxu0 0.0
      %2283 = vmatpush1.msra.mxu0 0.0
      %2284 = vmatprep.subr.mxu0 0.0
      %2285 = vmatpush1.msra.mxu0 0.0
      %2286 = vmatprep.subr.mxu0 0.0
      %2287 = vmatpush1.msra.mxu0 0.0
      %2288 = vmatprep.subr.mxu0 0.0
      %2289 = vmatpush1.msra.mxu0 0.0
      %2290 = vmatprep.subr.mxu0 0.0
      %2291 = vmatpush1.msra.mxu0 0.0
      %2292 = vmatprep.subr.mxu0 0.0
      %2293 = vmatpush1.msra.mxu0 0.0
      %2294 = vmatprep.subr.mxu0 0.0
      %2295 = vmatpush1.msra.mxu0 0.0
      %2296 = vmatprep.mubr.f32.mxu0 0.0
      %2297 = vmatmul.mubr.f32.gmra.mrb[0].mxu0 %v2227
      %v2298 = vpop.f32.mrb[0].mxu0
      %v2299 = vadd.f32 %v2224, %v2298
      %v2300 = vpop.f32.mrb[0].mxu0
      %2301 = vmatprep.mubr.f32.mxu0 0.0
      %2302 = vmatmul.mubr.f32.gmra.mrb[0].mxu0 %v2230
      %v2303 = vpop.f32.mrb[0].mxu0
      %v2304 = vadd.f32 %v2224, %v2303
      %v2305 = vpop.f32.mrb[0].mxu0
      %2306 = vdwg.mxu0
      %v2307 = vmax.f32 %v2299, 0.0
      %v2308 = vmax.f32 %v2304, 0.0
      %v2309 = vld [vmem:[%s430] sm:$0xff]
      %v2310 = vld [vmem:[%s430 + $0x8] sm:$0xff]
      %v2311 = vld [vmem:[%s430 + $0x10] sm:$0xff]
      %v2312 = vld [vmem:[%s430 + $0x18] sm:$0xff]
      %v2313 = vld [vmem:[%s430 + $0x20] sm:$0xff]
      %v2314 = vld [vmem:[%s430 + $0x28] sm:$0xff]
      %v2315 = vld [vmem:[%s430 + $0x30] sm:$0xff]
      %v2316 = vld [vmem:[%s430 + $0x38] sm:$0xff]
      %v2317 = vld [vmem:[%s433] sm:$0x1]
      %v2319 = vlaneseq
      %v2320 = vshrl.u32 %v2319, 7
      %v2321 = vsub.s32 0, %v2320
      %v2322 = vrot.slane %v2317, %v2321
      %vm2324 = vcmask 523264
      %v2326 = vsel %vm2324, %v2307, 0
      %v2329 = vsel %vm2324, %v2308, 0
      %2331 = vmatprep.subr.mxu0 0.0
      %2332 = vmatpush1.msra.mxu0 %v2309
      %2333 = vmatprep.subr.mxu0 0.0
      %2334 = vmatpush1.msra.mxu0 %v2310
      %2335 = vmatprep.subr.mxu0 0.0
      %2336 = vmatpush1.msra.mxu0 %v2311
      %2337 = vmatprep.subr.mxu0 0.0
      %2338 = vmatpush1.msra.mxu0 %v2312
      %2339 = vmatprep.subr.mxu0 0.0
      %2340 = vmatpush1.msra.mxu0 %v2313
      %2341 = vmatprep.subr.mxu0 0.0
      %2342 = vmatpush1.msra.mxu0 %v2314
      %2343 = vmatprep.subr.mxu0 0.0
      %2344 = vmatpush1.msra.mxu0 %v2315
      %2345 = vmatprep.subr.mxu0 0.0
      %2346 = vmatpush1.msra.mxu0 %v2316
      %2347 = vmatprep.subr.mxu0 0.0
      %2348 = vmatpush1.msra.mxu0 0.0
      %2349 = vmatprep.subr.mxu0 0.0
      %2350 = vmatpush1.msra.mxu0 0.0
      %2351 = vmatprep.subr.mxu0 0.0
      %2352 = vmatpush1.msra.mxu0 0.0
      %2353 = vmatprep.subr.mxu0 0.0
      %2354 = vmatpush1.msra.mxu0 0.0
      %2355 = vmatprep.subr.mxu0 0.0
      %2356 = vmatpush1.msra.mxu0 0.0
      %2357 = vmatprep.subr.mxu0 0.0
      %2358 = vmatpush1.msra.mxu0 0.0
      %2359 = vmatprep.subr.mxu0 0.0
      %2360 = vmatpush1.msra.mxu0 0.0
      %2361 = vmatprep.subr.mxu0 0.0
      %2362 = vmatpush1.msra.mxu0 0.0
      %2363 = vmatprep.subr.mxu0 0.0
      %2364 = vmatpush1.msra.mxu0 0.0
      %2365 = vmatprep.subr.mxu0 0.0
      %2366 = vmatpush1.msra.mxu0 0.0
      %2367 = vmatprep.subr.mxu0 0.0
      %2368 = vmatpush1.msra.mxu0 0.0
      %2369 = vmatprep.subr.mxu0 0.0
      %2370 = vmatpush1.msra.mxu0 0.0
      %2371 = vmatprep.subr.mxu0 0.0
      %2372 = vmatpush1.msra.mxu0 0.0
      %2373 = vmatprep.subr.mxu0 0.0
      %2374 = vmatpush1.msra.mxu0 0.0
      %2375 = vmatprep.subr.mxu0 0.0
      %2376 = vmatpush1.msra.mxu0 0.0
      %2377 = vmatprep.subr.mxu0 0.0
      %2378 = vmatpush1.msra.mxu0 0.0
      %2379 = vmatprep.subr.mxu0 0.0
      %2380 = vmatpush1.msra.mxu0 0.0
      %2381 = vmatprep.subr.mxu0 0.0
      %2382 = vmatpush1.msra.mxu0 0.0
      %2383 = vmatprep.subr.mxu0 0.0
      %2384 = vmatpush1.msra.mxu0 0.0
      %2385 = vmatprep.subr.mxu0 0.0
      %2386 = vmatpush1.msra.mxu0 0.0
      %2387 = vmatprep.subr.mxu0 0.0
      %2388 = vmatpush1.msra.mxu0 0.0
      %2389 = vmatprep.subr.mxu0 0.0
      %2390 = vmatpush1.msra.mxu0 0.0
      %2391 = vmatprep.subr.mxu0 0.0
      %2392 = vmatpush1.msra.mxu0 0.0
      %2393 = vmatprep.subr.mxu0 0.0
      %2394 = vmatpush1.msra.mxu0 0.0
      %2395 = vmatprep.mubr.f32.mxu0 0.0
      %2396 = vmatmul.mubr.f32.gmra.mrb[0].mxu0 %v2326
      %v2397 = vpop.f32.mrb[0].mxu0
      %v2398 = vadd.f32 %v2322, %v2397
      %v2399 = vpop.f32.mrb[0].mxu0
      %2400 = vmatprep.mubr.f32.mxu0 0.0
      %2401 = vmatmul.mubr.f32.gmra.mrb[0].mxu0 %v2329
      %v2402 = vpop.f32.mrb[0].mxu0
      %v2403 = vadd.f32 %v2322, %v2402
      %v2404 = vpop.f32.mrb[0].mxu0
      %2405 = vdwg.mxu0
      %v2406 = vadd.f32 %v2213, %v2398
      %v2407 = vadd.f32 %v2214, %v2403
      %2408 = vst.msk [vmem:[%s9] sm:$0xff] %vm456, %v2406
      %2409 = vst.msk [vmem:[%s9 + $0x8] sm:$0xff] %vm456, %v2407
      // Predicated region
      $region61: #{transformer_forward.1} parent=55 // pred_check
        %p2410 = pneg %p262
      $region62: #{transformer_forward.1} parent=55 // pred_check_branch
        %2412 = sbr.rel (%p2410) target = $region64
      $region63: #{transformer_forward.1} parent=55 // pred_region
        _
      $region64: #{transformer_forward.1} parent=55 // pred_fallthru
        _
      // Predicated region
      $region65: #{transformer_forward.1} parent=55 // pred_check
        %p2413 = pneg %p262
      $region66: #{transformer_forward.1} parent=55 // pred_check_branch
        %2415 = sbr.rel (%p2413) target = $region68
      $region67: #{transformer_forward.1} parent=55 // pred_region
        _
      $region68: #{transformer_forward.1} parent=55 // pred_fallthru
        _
    $region56: #{transformer_forward.1} parent=5 // pred_fallthru
      _
    %p2416 = scmp.le.s32.totalorder 2, %s15
    // Predicated region
    $region69: #{transformer_forward.1} parent=5 // pred_check
      %p2417 = pneg %p2416
    $region70: #{transformer_forward.1} parent=5 // pred_check_branch
      %2419 = sbr.rel (%p2417) target = $region72
    $region71: #{transformer_forward.1} parent=5 // pred_region
      %s2420 = ssub.s32 %s15, 2
    $region72: #{transformer_forward.1} parent=5 // pred_fallthru
      _
  $region6: #{transformer_forward.1} parent=0 // loop_footer
    %s19 = sadd.s32 1, %s15
  $region7: #{transformer_forward.1} parent=0 // loop_footer_branch
    %14 = sbr.rel target = $region3
  $region8: #{transformer_forward.1} parent=0 // loop_exit
    _

// kernel: transformer_forward.1
$region0: #{transformer_forward.1}
  #allocation0 [shape = 'u32[]', space=smem, size = 0x4, offset = 0x4, fixed_abs, tag = 'smem constant byte address 0x4 - core index']
  #allocation1 [shape = 'u32[144,128]{1,0:T(1,128)}', space=vmem, size = 0x12000, scoped, tag = 'internal scratch']
  %s0 = inlined_call_operand.vmem [shape: f32[16,32], index: 0, kind: input, shape index: {}, may-alias: {0,9}]
  %s1 = inlined_call_operand.vmem [shape: f32[2,32,96], index: 1, kind: input, shape index: {}]
  %s2 = inlined_call_operand.vmem [shape: f32[2,1,96], index: 2, kind: input, shape index: {}]
  %s3 = inlined_call_operand.vmem [shape: f32[2,32,32], index: 3, kind: input, shape index: {}]
  %s4 = inlined_call_operand.vmem [shape: f32[2,1,32], index: 4, kind: input, shape index: {}]
  %s5 = inlined_call_operand.vmem [shape: f32[2,32,64], index: 5, kind: input, shape index: {}]
  %s6 = inlined_call_operand.vmem [shape: f32[2,1,64], index: 6, kind: input, shape index: {}]
  %s7 = inlined_call_operand.vmem [shape: f32[2,64,32], index: 7, kind: input, shape index: {}]
  %s8 = inlined_call_operand.vmem [shape: f32[2,1,32], index: 8, kind: input, shape index: {}]
  %s9 = inlined_call_operand.vmem [shape: f32[16,32], index: 9, kind: output, shape index: {}, may-alias: {0,9}]
  %s10 = sld [smem:[#allocation0]]
  $region73: #{transformer_forward.1} parent=0
    _
  %s12 = ssub.s32 1, %s10
  %s13 = scalar_select 0, %s12, %s10
  loop: start=0, step=1, limit=4
  $region2: #{transformer_forward.1} parent=0 // loop_pre_header
    _
  $region3: #{transformer_forward.1} parent=0 // loop_header
    %s15 = sphi 0, %s19
    %p16 = scmp.ge.s32.totalorder %s15, 4
    %s23 = sphi 0, %s23
    %s25 = sphi 0, %s23
    %s26 = sphi 0, %s25
    %s40 = sphi 0, %s26
    %s46 = sphi 0, %s48
    %s49 = sphi 0, %s46
    %s50 = sphi 0, %s49
    %s66 = sphi 0, %s50
    %s72 = sphi 0, %s74
    %s75 = sphi 0, %s72
    %s76 = sphi 0, %s75
    %s92 = sphi 0, %s76
    %s98 = sphi 0, %s100
    %s101 = sphi 0, %s98
    %s102 = sphi 0, %s101
    %s118 = sphi 0, %s102
    %s124 = sphi 0, %s126
    %s127 = sphi 0, %s124
    %s128 = sphi 0, %s127
    %s144 = sphi 0, %s128
    %s150 = sphi 0, %s152
    %s153 = sphi 0, %s150
    %s154 = sphi 0, %s153
    %s170 = sphi 0, %s154
    %s176 = sphi 0, %s178
    %s179 = sphi 0, %s176
    %s180 = sphi 0, %s179
    %s196 = sphi 0, %s180
    %s202 = sphi 0, %s204
    %s205 = sphi 0, %s202
    %s206 = sphi 0, %s205
    %s222 = sphi 0, %s206
    %s228 = sphi 0, %s230
    %s231 = sphi 0, %s228
    %s232 = sphi 0, %s231
    %s248 = sphi 0, %s232
    %s252 = sphi 0, %s252
    %s254 = sphi 0, %s252
    %s255 = sphi 0, %s254
    %s269 = sphi 0, %s255
  $region4: #{transformer_forward.1} parent=0 // loop_header_branch
    %18 = sbr.rel (%p16) target = $region8
  $region5: #{transformer_forward.1} parent=0 // loop_body
    %s20 = ssub.s32 %s15, 1
    %s21 = ssub.s32 %s15, 2
    %s22 = sadd.s32 %s15, 1
    %s24 = sadd.s32 %s23, 1
    %p27 = scmp.eq.s32.totalorder %s15, 1
    %p28 = scmp.ne.s32.totalorder %s23, %s25
    %p29 = scmp.eq.s32.totalorder %s15, 0
    %p30 = por %p28, %p29
    %p31 = scmp.ne.s32.totalorder %s23, %s25
    %p32 = scmp.eq.s32.totalorder %s20, 1
    %p33 = por %p31, %p32
    %p34 = scmp.ne.s32.totalorder %s25, %s26
    %p35 = scmp.eq.s32.totalorder %s20, 0
    %p36 = por %p34, %p35
    %p37 = scmp.ne.s32.totalorder %s25, %s26
    %p38 = scmp.eq.s32.totalorder %s21, 1
    %p39 = por %p37, %p38
    %p41 = scmp.ne.s32.totalorder %s26, %s40
    %p42 = scmp.eq.s32.totalorder %s21, 0
    %p43 = por %p41, %p42
    %s44 = ssub.s32 %s15, %s22
    %p45 = scmp.eq.s32.totalorder %s44, 0
    %s47 = sadd.s32 %s46, 1
    %s48 = scalar_select %p45, %s46, %s47
    %p51 = pneg %p45
    %p52 = scmp.eq.s32.totalorder %s15, 1
    %p53 = por %p51, %p52
    %p54 = scmp.ne.s32.totalorder %s46, %s49
    %p55 = scmp.eq.s32.totalorder %s15, 0
    %p56 = por %p54, %p55
    %p57 = scmp.ne.s32.totalorder %s46, %s49
    %p58 = scmp.eq.s32.totalorder %s20, 1
    %p59 = por %p57, %p58
    %p60 = scmp.ne.s32.totalorder %s49, %s50
    %p61 = scmp.eq.s32.totalorder %s20, 0
    %p62 = por %p60, %p61
    %p63 = scmp.ne.s32.totalorder %s49, %s50
    %p64 = scmp.eq.s32.totalorder %s21, 1
    %p65 = por %p63, %p64
    %p67 = scmp.ne.s32.totalorder %s50, %s66
    %p68 = scmp.eq.s32.totalorder %s21, 0
    %p69 = por %p67, %p68
    %s70 = ssub.s32 %s15, %s22
    %p71 = scmp.eq.s32.totalorder %s70, 0
    %s73 = sadd.s32 %s72, 1
    %s74 = scalar_select %p71, %s72, %s73
    %p77 = pneg %p71
    %p78 = scmp.eq.s32.totalorder %s15, 1
    %p79 = por %p77, %p78
    %p80 = scmp.ne.s32.totalorder %s72, %s75
    %p81 = scmp.eq.s32.totalorder %s15, 0
    %p82 = por %p80, %p81
    %p83 = scmp.ne.s32.totalorder %s72, %s75
    %p84 = scmp.eq.s32.totalorder %s20, 1
    %p85 = por %p83, %p84
    %p86 = scmp.ne.s32.totalorder %s75, %s76
    %p87 = scmp.eq.s32.totalorder %s20, 0
    %p88 = por %p86, %p87
    %p89 = scmp.ne.s32.totalorder %s75, %s76
    %p90 = scmp.eq.s32.totalorder %s21, 1
    %p91 = por %p89, %p90
    %p93 = scmp.ne.s32.totalorder %s76, %s92
    %p94 = scmp.eq.s32.totalorder %s21, 0
    %p95 = por %p93, %p94
    %s96 = ssub.s32 %s15, %s22
    %p97 = scmp.eq.s32.totalorder %s96, 0
    %s99 = sadd.s32 %s98, 1
    %s100 = scalar_select %p97, %s98, %s99
    %p103 = pneg %p97
    %p104 = scmp.eq.s32.totalorder %s15, 1
    %p105 = por %p103, %p104
    %p106 = scmp.ne.s32.totalorder %s98, %s101
    %p107 = scmp.eq.s32.totalorder %s15, 0
    %p108 = por %p106, %p107
    %p109 = scmp.ne.s32.totalorder %s98, %s101
    %p110 = scmp.eq.s32.totalorder %s20, 1
    %p111 = por %p109, %p110
    %p112 = scmp.ne.s32.totalorder %s101, %s102
    %p113 = scmp.eq.s32.totalorder %s20, 0
    %p114 = por %p112, %p113
    %p115 = scmp.ne.s32.totalorder %s101, %s102
    %p116 = scmp.eq.s32.totalorder %s21, 1
    %p117 = por %p115, %p116
    %p119 = scmp.ne.s32.totalorder %s102, %s118
    %p120 = scmp.eq.s32.totalorder %s21, 0
    %p121 = por %p119, %p120
    %s122 = ssub.s32 %s15, %s22
    %p123 = scmp.eq.s32.totalorder %s122, 0
    %s125 = sadd.s32 %s124, 1
    %s126 = scalar_select %p123, %s124, %s125
    %p129 = pneg %p123
    %p130 = scmp.eq.s32.totalorder %s15, 1
    %p131 = por %p129, %p130
    %p132 = scmp.ne.s32.totalorder %s124, %s127
    %p133 = scmp.eq.s32.totalorder %s15, 0
    %p134 = por %p132, %p133
    %p135 = scmp.ne.s32.totalorder %s124, %s127
    %p136 = scmp.eq.s32.totalorder %s20, 1
    %p137 = por %p135, %p136
    %p138 = scmp.ne.s32.totalorder %s127, %s128
    %p139 = scmp.eq.s32.totalorder %s20, 0
    %p140 = por %p138, %p139
    %p141 = scmp.ne.s32.totalorder %s127, %s128
    %p142 = scmp.eq.s32.totalorder %s21, 1
    %p143 = por %p141, %p142
    %p145 = scmp.ne.s32.totalorder %s128, %s144
    %p146 = scmp.eq.s32.totalorder %s21, 0
    %p147 = por %p145, %p146
    %s148 = ssub.s32 %s15, %s22
    %p149 = scmp.eq.s32.totalorder %s148, 0
    %s151 = sadd.s32 %s150, 1
    %s152 = scalar_select %p149, %s150, %s151
    %p155 = pneg %p149
    %p156 = scmp.eq.s32.totalorder %s15, 1
    %p157 = por %p155, %p156
    %p158 = scmp.ne.s32.totalorder %s150, %s153
    %p159 = scmp.eq.s32.totalorder %s15, 0
    %p160 = por %p158, %p159
    %p161 = scmp.ne.s32.totalorder %s150, %s153
    %p162 = scmp.eq.s32.totalorder %s20, 1
    %p163 = por %p161, %p162
    %p164 = scmp.ne.s32.totalorder %s153, %s154
    %p165 = scmp.eq.s32.totalorder %s20, 0
    %p166 = por %p164, %p165
    %p167 = scmp.ne.s32.totalorder %s153, %s154
    %p168 = scmp.eq.s32.totalorder %s21, 1
    %p169 = por %p167, %p168
    %p171 = scmp.ne.s32.totalorder %s154, %s170
    %p172 = scmp.eq.s32.totalorder %s21, 0
    %p173 = por %p171, %p172
    %s174 = ssub.s32 %s15, %s22
    %p175 = scmp.eq.s32.totalorder %s174, 0
    %s177 = sadd.s32 %s176, 1
    %s178 = scalar_select %p175, %s176, %s177
    %p181 = pneg %p175
    %p182 = scmp.eq.s32.totalorder %s15, 1
    %p183 = por %p181, %p182
    %p184 = scmp.ne.s32.totalorder %s176, %s179
    %p185 = scmp.eq.s32.totalorder %s15, 0
    %p186 = por %p184, %p185
    %p187 = scmp.ne.s32.totalorder %s176, %s179
    %p188 = scmp.eq.s32.totalorder %s20, 1
    %p189 = por %p187, %p188
    %p190 = scmp.ne.s32.totalorder %s179, %s180
    %p191 = scmp.eq.s32.totalorder %s20, 0
    %p192 = por %p190, %p191
    %p193 = scmp.ne.s32.totalorder %s179, %s180
    %p194 = scmp.eq.s32.totalorder %s21, 1
    %p195 = por %p193, %p194
    %p197 = scmp.ne.s32.totalorder %s180, %s196
    %p198 = scmp.eq.s32.totalorder %s21, 0
    %p199 = por %p197, %p198
    %s200 = ssub.s32 %s15, %s22
    %p201 = scmp.eq.s32.totalorder %s200, 0
    %s203 = sadd.s32 %s202, 1
    %s204 = scalar_select %p201, %s202, %s203
    %p207 = pneg %p201
    %p208 = scmp.eq.s32.totalorder %s15, 1
    %p209 = por %p207, %p208
    %p210 = scmp.ne.s32.totalorder %s202, %s205
    %p211 = scmp.eq.s32.totalorder %s15, 0
    %p212 = por %p210, %p211
    %p213 = scmp.ne.s32.totalorder %s202, %s205
    %p214 = scmp.eq.s32.totalorder %s20, 1
    %p215 = por %p213, %p214
    %p216 = scmp.ne.s32.totalorder %s205, %s206
    %p217 = scmp.eq.s32.totalorder %s20, 0
    %p218 = por %p216, %p217
    %p219 = scmp.ne.s32.totalorder %s205, %s206
    %p220 = scmp.eq.s32.totalorder %s21, 1
    %p221 = por %p219, %p220
    %p223 = scmp.ne.s32.totalorder %s206, %s222
    %p224 = scmp.eq.s32.totalorder %s21, 0
    %p225 = por %p223, %p224
    %s226 = ssub.s32 %s15, %s22
    %p227 = scmp.eq.s32.totalorder %s226, 0
    %s229 = sadd.s32 %s228, 1
    %s230 = scalar_select %p227, %s228, %s229
    %p233 = pneg %p227
    %p234 = scmp.eq.s32.totalorder %s15, 1
    %p235 = por %p233, %p234
    %p236 = scmp.ne.s32.totalorder %s228, %s231
    %p237 = scmp.eq.s32.totalorder %s15, 0
    %p238 = por %p236, %p237
    %p239 = scmp.ne.s32.totalorder %s228, %s231
    %p240 = scmp.eq.s32.totalorder %s20, 1
    %p241 = por %p239, %p240
    %p242 = scmp.ne.s32.totalorder %s231, %s232
    %p243 = scmp.eq.s32.totalorder %s20, 0
    %p244 = por %p242, %p243
    %p245 = scmp.ne.s32.totalorder %s231, %s232
    %p246 = scmp.eq.s32.totalorder %s21, 1
    %p247 = por %p245, %p246
    %p249 = scmp.ne.s32.totalorder %s232, %s248
    %p250 = scmp.eq.s32.totalorder %s21, 0
    %p251 = por %p249, %p250
    %s253 = sadd.s32 %s252, 1
    %p256 = scmp.eq.s32.totalorder %s15, 1
    %p257 = scmp.ne.s32.totalorder %s252, %s254
    %p258 = scmp.eq.s32.totalorder %s15, 0
    %p259 = por %p257, %p258
    %p260 = scmp.ne.s32.totalorder %s252, %s254
    %p261 = scmp.eq.s32.totalorder %s20, 1
    %p262 = por %p260, %p261
    %p263 = scmp.ne.s32.totalorder %s254, %s255
    %p264 = scmp.eq.s32.totalorder %s20, 0
    %p265 = por %p263, %p264
    %p266 = scmp.ne.s32.totalorder %s254, %s255
    %p267 = scmp.eq.s32.totalorder %s21, 1
    %p268 = por %p266, %p267
    %p270 = scmp.ne.s32.totalorder %s255, %s269
    %p271 = scmp.eq.s32.totalorder %s21, 0
    %p272 = por %p270, %p271
    %p273 = scmp.le.s32.totalorder 1, %s15
    %p274 = scmp.lt.s32.totalorder %s15, 3
    %p275 = pnand %p273, %p274
    %p276 = pneg %p275
    // Predicated region
    $region9: #{transformer_forward.1} parent=5 // pred_check
      _
    $region10: #{transformer_forward.1} parent=5 // pred_check_branch
      %278 = sbr.rel (%p275) target = $region12
    $region11: #{transformer_forward.1} parent=5 // pred_region
      %s279 = ssub.s32 %s15, 1
      // Predicated region
      $region13: #{transformer_forward.1} parent=11 // pred_check
        %p280 = pneg %p36
      $region14: #{transformer_forward.1} parent=11 // pred_check_branch
        %282 = sbr.rel (%p280) target = $region16
      $region15: #{transformer_forward.1} parent=11 // pred_region
        _
      $region16: #{transformer_forward.1} parent=11 // pred_fallthru
        _
    $region12: #{transformer_forward.1} parent=5 // pred_fallthru
      _
    %p283 = scmp.lt.s32.totalorder %s15, 2
    // Predicated region
    $region17: #{transformer_forward.1} parent=5 // pred_check
      %p284 = pneg %p283
    $region18: #{transformer_forward.1} parent=5 // pred_check_branch
      %286 = sbr.rel (%p284) target = $region20
    $region19: #{transformer_forward.1} parent=5 // pred_region
      // Predicated region
      $region21: #{transformer_forward.1} parent=19 // pred_check
        %p287 = pneg %p56
      $region22: #{transformer_forward.1} parent=19 // pred_check_branch
        %289 = sbr.rel (%p287) target = $region24
      $region23: #{transformer_forward.1} parent=19 // pred_region
        %p290 = scmp.lt.s32.totalorder %s15, 1
        %s291 = scalar_select %p290, %s15, 1
        %s292 = smul.addr %s291, 4
        %s293 = smul.addr %s292, 8
        %s294 = scalar_lea.vmem %s1, %s293
      $region24: #{transformer_forward.1} parent=19 // pred_fallthru
        _
      // Predicated region
      $region25: #{transformer_forward.1} parent=19 // pred_check
        %p295 = pneg %p82
      $region26: #{transformer_forward.1} parent=19 // pred_check_branch
        %297 = sbr.rel (%p295) target = $region28
      $region27: #{transformer_forward.1} parent=19 // pred_region
        %p298 = scmp.lt.s32.totalorder %s15, 1
        %s299 = scalar_select %p298, %s15, 1
        %s300 = scalar_lea.vmem %s2, %s299
      $region28: #{transformer_forward.1} parent=19 // pred_fallthru
        _
      // Predicated region
      $region29: #{transformer_forward.1} parent=19 // pred_check
        %p301 = pneg %p108
      $region30: #{transformer_forward.1} parent=19 // pred_check_branch
        %303 = sbr.rel (%p301) target = $region32
      $region31: #{transformer_forward.1} parent=19 // pred_region
        %p304 = scmp.lt.s32.totalorder %s15, 1
        %s305 = scalar_select %p304, %s15, 1
        %s306 = smul.addr %s305, 4
        %s307 = smul.addr %s306, 8
        %s308 = scalar_lea.vmem %s3, %s307
      $region32: #{transformer_forward.1} parent=19 // pred_fallthru
        _
      // Predicated region
      $region33: #{transformer_forward.1} parent=19 // pred_check
        %p309 = pneg %p134
      $region34: #{transformer_forward.1} parent=19 // pred_check_branch
        %311 = sbr.rel (%p309) target = $region36
      $region35: #{transformer_forward.1} parent=19 // pred_region
        %p312 = scmp.lt.s32.totalorder %s15, 1
        %s313 = scalar_select %p312, %s15, 1
        %s314 = scalar_lea.vmem %s4, %s313
      $region36: #{transformer_forward.1} parent=19 // pred_fallthru
        _
      // Predicated region
      $region37: #{transformer_forward.1} parent=19 // pred_check
        %p315 = pneg %p160
      $region38: #{transformer_forward.1} parent=19 // pred_check_branch
        %317 = sbr.rel (%p315) target = $region40
      $region39: #{transformer_forward.1} parent=19 // pred_region
        %p318 = scmp.lt.s32.totalorder %s15, 1
        %s319 = scalar_select %p318, %s15, 1
        %s320 = smul.addr %s319, 4
        %s321 = smul.addr %s320, 8
        %s322 = scalar_lea.vmem %s5, %s321
      $region40: #{transformer_forward.1} parent=19 // pred_fallthru
        _
      // Predicated region
      $region41: #{transformer_forward.1} parent=19 // pred_check
        %p323 = pneg %p186
      $region42: #{transformer_forward.1} parent=19 // pred_check_branch
        %325 = sbr.rel (%p323) target = $region44
      $region43: #{transformer_forward.1} parent=19 // pred_region
        %p326 = scmp.lt.s32.totalorder %s15, 1
        %s327 = scalar_select %p326, %s15, 1
        %s328 = scalar_lea.vmem %s6, %s327
      $region44: #{transformer_forward.1} parent=19 // pred_fallthru
        _
      // Predicated region
      $region45: #{transformer_forward.1} parent=19 // pred_check
        %p329 = pneg %p212
      $region46: #{transformer_forward.1} parent=19 // pred_check_branch
        %331 = sbr.rel (%p329) target = $region48
      $region47: #{transformer_forward.1} parent=19 // pred_region
        %p332 = scmp.lt.s32.totalorder %s15, 1
        %s333 = scalar_select %p332, %s15, 1
        %s334 = smul.addr %s333, 8
        %s335 = smul.addr %s334, 8
        %s336 = scalar_lea.vmem %s7, %s335
      $region48: #{transformer_forward.1} parent=19 // pred_fallthru
        _
      // Predicated region
      $region49: #{transformer_forward.1} parent=19 // pred_check
        %p337 = pneg %p238
      $region50: #{transformer_forward.1} parent=19 // pred_check_branch
        %339 = sbr.rel (%p337) target = $region52
      $region51: #{transformer_forward.1} parent=19 // pred_region
        %p340 = scmp.lt.s32.totalorder %s15, 1
        %s341 = scalar_select %p340, %s15, 1
        %s342 = scalar_lea.vmem %s8, %s341
      $region52: #{transformer_forward.1} parent=19 // pred_fallthru
        _
    $region20: #{transformer_forward.1} parent=5 // pred_fallthru
      _
    %p343 = scmp.le.s32.totalorder 1, %s15
    %p344 = scmp.lt.s32.totalorder %s15, 3
    %p345 = pnand %p343, %p344
    %p346 = pneg %p345
    // Predicated region
    $region53: #{transformer_forward.1} parent=5 // pred_check
      _
    $region54: #{transformer_forward.1} parent=5 // pred_check_branch
      %348 = sbr.rel (%p345) target = $region56
    $region55: #{transformer_forward.1} parent=5 // pred_region
      %s349 = ssub.s32 %s15, 1
      %p350 = pneg %p36
      %p351 = pneg %p33
      %p352 = scmp.lt.s32.totalorder %s20, 1
      %s353 = scalar_select %p352, %s20, 1
      %s354 = smul.addr %s353, 4
      %s355 = smul.addr %s354, 8
      %s356 = scalar_lea.vmem %s1, %s355
      %p357 = pneg %p62
      %p358 = pneg %p59
      %p359 = scmp.lt.s32.totalorder %s20, 1
      %s360 = scalar_select %p359, %s20, 1
      %s361 = scalar_lea.vmem %s2, %s360
      %p362 = pneg %p88
      %p363 = pneg %p85
      %p364 = scmp.lt.s32.totalorder %s20, 1
      %s365 = scalar_select %p364, %s20, 1
      %s366 = smul.addr %s365, 4
      %s367 = smul.addr %s366, 8
      %s368 = scalar_lea.vmem %s3, %s367
      %p369 = pneg %p114
      %p370 = pneg %p111
      %p371 = scmp.lt.s32.totalorder %s20, 1
      %s372 = scalar_select %p371, %s20, 1
      %s373 = scalar_lea.vmem %s4, %s372
      %p374 = pneg %p140
      %p375 = pneg %p137
      %p376 = scmp.lt.s32.totalorder %s20, 1
      %s377 = scalar_select %p376, %s20, 1
      %s378 = smul.addr %s377, 4
      %s379 = smul.addr %s378, 8
      %s380 = scalar_lea.vmem %s5, %s379
      %p381 = pneg %p166
      %p382 = pneg %p163
      %p383 = scmp.lt.s32.totalorder %s20, 1
      %s384 = scalar_select %p383, %s20, 1
      %s385 = scalar_lea.vmem %s6, %s384
      %p386 = pneg %p192
      %p387 = pneg %p189
      %p388 = scmp.lt.s32.totalorder %s20, 1
      %s389 = scalar_select %p388, %s20, 1
      %s390 = smul.addr %s389, 8
      %s391 = smul.addr %s390, 8
      %s392 = scalar_lea.vmem %s7, %s391
      %p393 = pneg %p218
      %p394 = pneg %p215
      %p395 = scmp.lt.s32.totalorder %s20, 1
      %s396 = scalar_select %p395, %s20, 1
      %s397 = scalar_lea.vmem %s8, %s396
      %p398 = pneg %p244
      %p399 = pneg %p241
      %p400 = pneg %p265
      %p401 = pneg %p262
      %p402 = scmp.lt.s32.totalorder %s20, 1
      %s403 = scalar_select %p402, %s20, 1
      %s404 = smul.addr %s403, 4
      %s405 = smul.addr %s404, 8
      %s406 = scalar_lea.vmem %s1, %s405
      %p407 = scmp.lt.s32.totalorder %s20, 1
      %s408 = scalar_select %p407, %s20, 1
      %s409 = scalar_lea.vmem %s2, %s408
      %p410 = scmp.lt.s32.totalorder %s20, 1
      %s411 = scalar_select %p410, %s20, 1
      %s412 = smul.addr %s411, 4
      %s413 = smul.addr %s412, 8
      %s414 = scalar_lea.vmem %s3, %s413
      %p415 = scmp.lt.s32.totalorder %s20, 1
      %s416 = scalar_select %p415, %s20, 1
      %s417 = scalar_lea.vmem %s4, %s416
      %p418 = scmp.lt.s32.totalorder %s20, 1
      %s419 = scalar_select %p418, %s20, 1
      %s420 = smul.addr %s419, 4
      %s421 = smul.addr %s420, 8
      %s422 = scalar_lea.vmem %s5, %s421
      %p423 = scmp.lt.s32.totalorder %s20, 1
      %s424 = scalar_select %p423, %s20, 1
      %s425 = scalar_lea.vmem %s6, %s424
      %p426 = scmp.lt.s32.totalorder %s20, 1
      %s427 = scalar_select %p426, %s20, 1
      %s428 = smul.addr %s427, 8
      %s429 = smul.addr %s428, 8
      %s430 = scalar_lea.vmem %s7, %s429
      %p431 = scmp.lt.s32.totalorder %s20, 1
      %s432 = scalar_select %p431, %s20, 1
      %s433 = scalar_lea.vmem %s8, %s432
      %p434 = scmp.eq.s32.totalorder %s20, 0
      // Predicated region
      $region57: #{transformer_forward.1} parent=55 // pred_check
        %p435 = pneg %p434
      $region58: #{transformer_forward.1} parent=55 // pred_check_branch
        %437 = sbr.rel (%p435) target = $region60
      $region59: #{transformer_forward.1} parent=55 // pred_region
        %v438 = vld [vmem:[%s0] sm:$0xff]
        %v439 = vld [vmem:[%s0 + $0x8] sm:$0xff]
        %vm440 = vcmask 261120
        %441 = vst.msk [vmem:[%s9] sm:$0xff] %vm440, %v438
        %442 = vst.msk [vmem:[%s9 + $0x8] sm:$0xff] %vm440, %v439
      $region60: #{transformer_forward.1} parent=55 // pred_fallthru
        _
      %v443 = vld [vmem:[%s9] sm:$0xff]
      %v444 = vld [vmem:[%s9 + $0x8] sm:$0xff]
      %v445 = vld [vmem:[%s406] sm:$0xff]
      %v446 = vld [vmem:[%s406 + $0x8] sm:$0xff]
      %v447 = vld [vmem:[%s406 + $0x10] sm:$0xff]
      %v448 = vld [vmem:[%s406 + $0x18] sm:$0xff]
      %v449 = vld [vmem:[%s409] sm:$0x1]
      %v451 = vlaneseq
      %v452 = vshrl.u32 %v451, 7
      %v453 = vsub.s32 0, %v452
      %v454 = vrot.slane %v449, %v453
      %vm456 = vcmask 261120
      %v458 = vsel %vm456, %v443, 0
      %v461 = vsel %vm456, %v444, 0
      %463 = vmatprep.subr.mxu0 0.0
      %464 = vmatpush1.msra.mxu0 %v445
      %465 = vmatprep.subr.mxu0 0.0
      %466 = vmatpush1.msra.mxu0 %v446
      %467 = vmatprep.subr.mxu0 0.0
      %468 = vmatpush1.msra.mxu0 %v447
      %469 = vmatprep.subr.mxu0 0.0
      %470 = vmatpush1.msra.mxu0 %v448
      %471 = vmatprep.subr.mxu0 0.0
      %472 = vmatpush1.msra.mxu0 0.0
      %473 = vmatprep.subr.mxu0 0.0
      %474 = vmatpush1.msra.mxu0 0.0
      %475 = vmatprep.subr.mxu0 0.0
      %476 = vmatpush1.msra.mxu0 0.0
      %477 = vmatprep.subr.mxu0 0.0
      %478 = vmatpush1.msra.mxu0 0.0
      %479 = vmatprep.subr.mxu0 0.0
      %480 = vmatpush1.msra.mxu0 0.0
      %481 = vmatprep.subr.mxu0 0.0
      %482 = vmatpush1.msra.mxu0 0.0
      %483 = vmatprep.subr.mxu0 0.0
      %484 = vmatpush1.msra.mxu0 0.0
      %485 = vmatprep.subr.mxu0 0.0
      %486 = vmatpush1.msra.mxu0 0.0
      %487 = vmatprep.subr.mxu0 0.0
      %488 = vmatpush1.msra.mxu0 0.0
      %489 = vmatprep.subr.mxu0 0.0
      %490 = vmatpush1.msra.mxu0 0.0
      %491 = vmatprep.subr.mxu0 0.0
      %492 = vmatpush1.msra.mxu0 0.0
      %493 = vmatprep.subr.mxu0 0.0
      %494 = vmatpush1.msra.mxu0 0.0
      %495 = vmatprep.subr.mxu0 0.0
      %496 = vmatpush1.msra.mxu0 0.0
      %497 = vmatprep.subr.mxu0 0.0
      %498 = vmatpush1.msra.mxu0 0.0
      %499 = vmatprep.subr.mxu0 0.0
      %500 = vmatpush1.msra.mxu0 0.0
      %501 = vmatprep.subr.mxu0 0.0
      %502 = vmatpush1.msra.mxu0 0.0
      %503 = vmatprep.subr.mxu0 0.0
      %504 = vmatpush1.msra.mxu0 0.0
      %505 = vmatprep.subr.mxu0 0.0
      %506 = vmatpush1.msra.mxu0 0.0
      %507 = vmatprep.subr.mxu0 0.0
      %508 = vmatpush1.msra.mxu0 0.0
      %509 = vmatprep.subr.mxu0 0.0
      %510 = vmatpush1.msra.mxu0 0.0
      %511 = vmatprep.subr.mxu0 0.0
      %512 = vmatpush1.msra.mxu0 0.0
      %513 = vmatprep.subr.mxu0 0.0
      %514 = vmatpush1.msra.mxu0 0.0
      %515 = vmatprep.subr.mxu0 0.0
      %516 = vmatpush1.msra.mxu0 0.0
      %517 = vmatprep.subr.mxu0 0.0
      %518 = vmatpush1.msra.mxu0 0.0
      %519 = vmatprep.subr.mxu0 0.0
      %520 = vmatpush1.msra.mxu0 0.0
      %521 = vmatprep.subr.mxu0 0.0
      %522 = vmatpush1.msra.mxu0 0.0
      %523 = vmatprep.subr.mxu0 0.0
      %524 = vmatpush1.msra.mxu0 0.0
      %525 = vmatprep.subr.mxu0 0.0
      %526 = vmatpush1.msra.mxu0 0.0
      %527 = vmatprep.mubr.f32.mxu0 0.0
      %528 = vmatmul.mubr.f32.gmra.mrb[0].mxu0 %v458
      %v529 = vpop.f32.mrb[0].mxu0
      %v530 = vadd.f32 %v454, %v529
      %v531 = vpop.f32.mrb[0].mxu0
      %532 = vmatprep.mubr.f32.mxu0 0.0
      %533 = vmatmul.mubr.f32.gmra.mrb[0].mxu0 %v461
      %v534 = vpop.f32.mrb[0].mxu0
      %v535 = vadd.f32 %v454, %v534
      %v536 = vpop.f32.mrb[0].mxu0
      %537 = vdwg.mxu0
      %540 = vrot.lane.b32.xlu0 %v530, 120
      %v541 = vpop.permute.xlu0 %540
      %542 = vrot.lane.b32.xlu0 %v535, 120
      %v543 = vpop.permute.xlu0 %542
      %544 = vrot.lane.b32.xlu0 %v530, 112
      %v545 = vpop.permute.xlu0 %544
      %546 = vrot.lane.b32.xlu0 %v535, 112
      %v547 = vpop.permute.xlu0 %546
      %548 = vrot.lane.b32.xlu0 %v530, 104
      %v549 = vpop.permute.xlu0 %548
      %550 = vrot.lane.b32.xlu0 %v535, 104
      %v551 = vpop.permute.xlu0 %550
      %552 = vrot.lane.b32.xlu0 %v530, 96
      %v553 = vpop.permute.xlu0 %552
      %vm554 = vcmask 64512
      %v555 = vsel %vm554, %v530, 0
      %v557 = vsel %vm554, %v553, 0
      %559 = vmatprep.subr.mxu0 0.0
      %560 = vmatpush1.xpose.msra.mxu0 %v557
      %561 = vmatprep.subr.mxu0 0.0
      %562 = vmatpush1.xpose.msra.mxu0 0.0
      %563 = vmatprep.subr.mxu0 0.0
      %564 = vmatpush1.xpose.msra.mxu0 0.0
      %565 = vmatprep.subr.mxu0 0.0
      %566 = vmatpush1.xpose.msra.mxu0 0.0
      %567 = vmatprep.subr.mxu0 0.0
      %568 = vmatpush1.xpose.msra.mxu0 0.0
      %569 = vmatprep.subr.mxu0 0.0
      %570 = vmatpush1.xpose.msra.mxu0 0.0
      %571 = vmatprep.subr.mxu0 0.0
      %572 = vmatpush1.xpose.msra.mxu0 0.0
      %573 = vmatprep.subr.mxu0 0.0
      %574 = vmatpush1.xpose.msra.mxu0 0.0
      %575 = vmatprep.subr.mxu0 0.0
      %576 = vmatpush1.xpose.msra.mxu0 0.0
      %577 = vmatprep.subr.mxu0 0.0
      %578 = vmatpush1.xpose.msra.mxu0 0.0
      %579 = vmatprep.subr.mxu0 0.0
      %580 = vmatpush1.xpose.msra.mxu0 0.0
      %581 = vmatprep.subr.mxu0 0.0
      %582 = vmatpush1.xpose.msra.mxu0 0.0
      %583 = vmatprep.subr.mxu0 0.0
      %584 = vmatpush1.xpose.msra.mxu0 0.0
      %585 = vmatprep.subr.mxu0 0.0
      %586 = vmatpush1.xpose.msra.mxu0 0.0
      %587 = vmatprep.subr.mxu0 0.0
      %588 = vmatpush1.xpose.msra.mxu0 0.0
      %589 = vmatprep.subr.mxu0 0.0
      %590 = vmatpush1.xpose.msra.mxu0 0.0
      %591 = vmatprep.subr.mxu0 0.0
      %592 = vmatpush1.xpose.msra.mxu0 0.0
      %593 = vmatprep.subr.mxu0 0.0
      %594 = vmatpush1.xpose.msra.mxu0 0.0
      %595 = vmatprep.subr.mxu0 0.0
      %596 = vmatpush1.xpose.msra.mxu0 0.0
      %597 = vmatprep.subr.mxu0 0.0
      %598 = vmatpush1.xpose.msra.mxu0 0.0
      %599 = vmatprep.subr.mxu0 0.0
      %600 = vmatpush1.xpose.msra.mxu0 0.0
      %601 = vmatprep.subr.mxu0 0.0
      %602 = vmatpush1.xpose.msra.mxu0 0.0
      %603 = vmatprep.subr.mxu0 0.0
      %604 = vmatpush1.xpose.msra.mxu0 0.0
      %605 = vmatprep.subr.mxu0 0.0
      %606 = vmatpush1.xpose.msra.mxu0 0.0
      %607 = vmatprep.subr.mxu0 0.0
      %608 = vmatpush1.xpose.msra.mxu0 0.0
      %609 = vmatprep.subr.mxu0 0.0
      %610 = vmatpush1.xpose.msra.mxu0 0.0
      %611 = vmatprep.subr.mxu0 0.0
      %612 = vmatpush1.xpose.msra.mxu0 0.0
      %613 = vmatprep.subr.mxu0 0.0
      %614 = vmatpush1.xpose.msra.mxu0 0.0
      %615 = vmatprep.subr.mxu0 0.0
      %616 = vmatpush1.xpose.msra.mxu0 0.0
      %617 = vmatprep.subr.mxu0 0.0
      %618 = vmatpush1.xpose.msra.mxu0 0.0
      %619 = vmatprep.subr.mxu0 0.0
      %620 = vmatpush1.xpose.msra.mxu0 0.0
      %621 = vmatprep.subr.mxu0 0.0
      %622 = vmatpush1.xpose.msra.mxu0 0.0
      %623 = vmatprep.mubr.f32.mxu0 0.0
      %624 = vmatmul.mubr.f32.gmra.mrb[0].mxu0 %v555
      %v625 = vpop.f32.mrb[0].mxu0
      %v626 = vadd.f32 0.0, %v625
      %v627 = vpop.f32.mrb[0].mxu0
      %628 = vdwg.mxu0
      %629 = vrot.lane.b32.xlu0 %v535, 96
      %v630 = vpop.permute.xlu0 %629
      %v631 = vsel %vm554, %v535, 0
      %v633 = vsel %vm554, %v630, 0
      %635 = vmatprep.subr.mxu0 0.0
      %636 = vmatpush1.xpose.msra.mxu0 %v633
      %637 = vmatprep.subr.mxu0 0.0
      %638 = vmatpush1.xpose.msra.mxu0 0.0
      %639 = vmatprep.subr.mxu0 0.0
      %640 = vmatpush1.xpose.msra.mxu0 0.0
      %641 = vmatprep.subr.mxu0 0.0
      %642 = vmatpush1.xpose.msra.mxu0 0.0
      %643 = vmatprep.subr.mxu0 0.0
      %644 = vmatpush1.xpose.msra.mxu0 0.0
      %645 = vmatprep.subr.mxu0 0.0
      %646 = vmatpush1.xpose.msra.mxu0 0.0
      %647 = vmatprep.subr.mxu0 0.0
      %648 = vmatpush1.xpose.msra.mxu0 0.0
      %649 = vmatprep.subr.mxu0 0.0
      %650 = vmatpush1.xpose.msra.mxu0 0.0
      %651 = vmatprep.subr.mxu0 0.0
      %652 = vmatpush1.xpose.msra.mxu0 0.0
      %653 = vmatprep.subr.mxu0 0.0
      %654 = vmatpush1.xpose.msra.mxu0 0.0
      %655 = vmatprep.subr.mxu0 0.0
      %656 = vmatpush1.xpose.msra.mxu0 0.0
      %657 = vmatprep.subr.mxu0 0.0
      %658 = vmatpush1.xpose.msra.mxu0 0.0
      %659 = vmatprep.subr.mxu0 0.0
      %660 = vmatpush1.xpose.msra.mxu0 0.0
      %661 = vmatprep.subr.mxu0 0.0
      %662 = vmatpush1.xpose.msra.mxu0 0.0
      %663 = vmatprep.subr.mxu0 0.0
      %664 = vmatpush1.xpose.msra.mxu0 0.0
      %665 = vmatprep.subr.mxu0 0.0
      %666 = vmatpush1.xpose.msra.mxu0 0.0
      %667 = vmatprep.subr.mxu0 0.0
      %668 = vmatpush1.xpose.msra.mxu0 0.0
      %669 = vmatprep.subr.mxu0 0.0
      %670 = vmatpush1.xpose.msra.mxu0 0.0
      %671 = vmatprep.subr.mxu0 0.0
      %672 = vmatpush1.xpose.msra.mxu0 0.0
      %673 = vmatprep.subr.mxu0 0.0
      %674 = vmatpush1.xpose.msra.mxu0 0.0
      %675 = vmatprep.subr.mxu0 0.0
      %676 = vmatpush1.xpose.msra.mxu0 0.0
      %677 = vmatprep.subr.mxu0 0.0
      %678 = vmatpush1.xpose.msra.mxu0 0.0
      %679 = vmatprep.subr.mxu0 0.0
      %680 = vmatpush1.xpose.msra.mxu0 0.0
      %681 = vmatprep.subr.mxu0 0.0
      %682 = vmatpush1.xpose.msra.mxu0 0.0
      %683 = vmatprep.subr.mxu0 0.0
      %684 = vmatpush1.xpose.msra.mxu0 0.0
      %685 = vmatprep.subr.mxu0 0.0
      %686 = vmatpush1.xpose.msra.mxu0 0.0
      %687 = vmatprep.subr.mxu0 0.0
      %688 = vmatpush1.xpose.msra.mxu0 0.0
      %689 = vmatprep.subr.mxu0 0.0
      %690 = vmatpush1.xpose.msra.mxu0 0.0
      %691 = vmatprep.subr.mxu0 0.0
      %692 = vmatpush1.xpose.msra.mxu0 0.0
      %693 = vmatprep.subr.mxu0 0.0
      %694 = vmatpush1.xpose.msra.mxu0 0.0
      %695 = vmatprep.subr.mxu0 0.0
      %696 = vmatpush1.xpose.msra.mxu0 0.0
      %697 = vmatprep.subr.mxu0 0.0
      %698 = vmatpush1.xpose.msra.mxu0 0.0
      %699 = vmatprep.mubr.f32.mxu0 0.0
      %700 = vmatmul.mubr.f32.gmra.mrb[0].mxu0 %v631
      %v701 = vpop.f32.mrb[0].mxu0
      %v702 = vadd.f32 0.0, %v701
      %v703 = vpop.f32.mrb[0].mxu0
      %704 = vdwg.mxu0
      %705 = vrot.lane.b32.xlu0 %v541, 96
      %v706 = vpop.permute.xlu0 %705
      %v707 = vsel %vm554, %v541, 0
      %v709 = vsel %vm554, %v706, 0
      %711 = vmatprep.subr.mxu0 0.0
      %712 = vmatpush1.xpose.msra.mxu0 %v709
      %713 = vmatprep.subr.mxu0 0.0
      %714 = vmatpush1.xpose.msra.mxu0 0.0
      %715 = vmatprep.subr.mxu0 0.0
      %716 = vmatpush1.xpose.msra.mxu0 0.0
      %717 = vmatprep.subr.mxu0 0.0
      %718 = vmatpush1.xpose.msra.mxu0 0.0
      %719 = vmatprep.subr.mxu0 0.0
      %720 = vmatpush1.xpose.msra.mxu0 0.0
      %721 = vmatprep.subr.mxu0 0.0
      %722 = vmatpush1.xpose.msra.mxu0 0.0
      %723 = vmatprep.subr.mxu0 0.0
      %724 = vmatpush1.xpose.msra.mxu0 0.0
      %725 = vmatprep.subr.mxu0 0.0
      %726 = vmatpush1.xpose.msra.mxu0 0.0
      %727 = vmatprep.subr.mxu0 0.0
      %728 = vmatpush1.xpose.msra.mxu0 0.0
      %729 = vmatprep.subr.mxu0 0.0
      %730 = vmatpush1.xpose.msra.mxu0 0.0
      %731 = vmatprep.subr.mxu0 0.0
      %732 = vmatpush1.xpose.msra.mxu0 0.0
      %733 = vmatprep.subr.mxu0 0.0
      %734 = vmatpush1.xpose.msra.mxu0 0.0
      %735 = vmatprep.subr.mxu0 0.0
      %736 = vmatpush1.xpose.msra.mxu0 0.0
      %737 = vmatprep.subr.mxu0 0.0
      %738 = vmatpush1.xpose.msra.mxu0 0.0
      %739 = vmatprep.subr.mxu0 0.0
      %740 = vmatpush1.xpose.msra.mxu0 0.0
      %741 = vmatprep.subr.mxu0 0.0
      %742 = vmatpush1.xpose.msra.mxu0 0.0
      %743 = vmatprep.subr.mxu0 0.0
      %744 = vmatpush1.xpose.msra.mxu0 0.0
      %745 = vmatprep.subr.mxu0 0.0
      %746 = vmatpush1.xpose.msra.mxu0 0.0
      %747 = vmatprep.subr.mxu0 0.0
      %748 = vmatpush1.xpose.msra.mxu0 0.0
      %749 = vmatprep.subr.mxu0 0.0
      %750 = vmatpush1.xpose.msra.mxu0 0.0
      %751 = vmatprep.subr.mxu0 0.0
      %752 = vmatpush1.xpose.msra.mxu0 0.0
      %753 = vmatprep.subr.mxu0 0.0
      %754 = vmatpush1.xpose.msra.mxu0 0.0
      %755 = vmatprep.subr.mxu0 0.0
      %756 = vmatpush1.xpose.msra.mxu0 0.0
      %757 = vmatprep.subr.mxu0 0.0
      %758 = vmatpush1.xpose.msra.mxu0 0.0
      %759 = vmatprep.subr.mxu0 0.0
      %760 = vmatpush1.xpose.msra.mxu0 0.0
      %761 = vmatprep.subr.mxu0 0.0
      %762 = vmatpush1.xpose.msra.mxu0 0.0
      %763 = vmatprep.subr.mxu0 0.0
      %764 = vmatpush1.xpose.msra.mxu0 0.0
      %765 = vmatprep.subr.mxu0 0.0
      %766 = vmatpush1.xpose.msra.mxu0 0.0
      %767 = vmatprep.subr.mxu0 0.0
      %768 = vmatpush1.xpose.msra.mxu0 0.0
      %769 = vmatprep.subr.mxu0 0.0
      %770 = vmatpush1.xpose.msra.mxu0 0.0
      %771 = vmatprep.subr.mxu0 0.0
      %772 = vmatpush1.xpose.msra.mxu0 0.0
      %773 = vmatprep.subr.mxu0 0.0
      %774 = vmatpush1.xpose.msra.mxu0 0.0
      %775 = vmatprep.mubr.f32.mxu0 0.0
      %776 = vmatmul.mubr.f32.gmra.mrb[0].mxu0 %v707
      %v777 = vpop.f32.mrb[0].mxu0
      %v778 = vadd.f32 0.0, %v777
      %v779 = vpop.f32.mrb[0].mxu0
      %780 = vdwg.mxu0
      %781 = vrot.lane.b32.xlu0 %v543, 96
      %v782 = vpop.permute.xlu0 %781
      %v783 = vsel %vm554, %v543, 0
      %v785 = vsel %vm554, %v782, 0
      %787 = vmatprep.subr.mxu0 0.0
      %788 = vmatpush1.xpose.msra.mxu0 %v785
      %789 = vmatprep.subr.mxu0 0.0
      %790 = vmatpush1.xpose.msra.mxu0 0.0
      %791 = vmatprep.subr.mxu0 0.0
      %792 = vmatpush1.xpose.msra.mxu0 0.0
      %793 = vmatprep.subr.mxu0 0.0
      %794 = vmatpush1.xpose.msra.mxu0 0.0
      %795 = vmatprep.subr.mxu0 0.0
      %796 = vmatpush1.xpose.msra.mxu0 0.0
      %797 = vmatprep.subr.mxu0 0.0
      %798 = vmatpush1.xpose.msra.mxu0 0.0
      %799 = vmatprep.subr.mxu0 0.0
      %800 = vmatpush1.xpose.msra.mxu0 0.0
      %801 = vmatprep.subr.mxu0 0.0
      %802 = vmatpush1.xpose.msra.mxu0 0.0
      %803 = vmatprep.subr.mxu0 0.0
      %804 = vmatpush1.xpose.msra.mxu0 0.0
      %805 = vmatprep.subr.mxu0 0.0
      %806 = vmatpush1.xpose.msra.mxu0 0.0
      %807 = vmatprep.subr.mxu0 0.0
      %808 = vmatpush1.xpose.msra.mxu0 0.0
      %809 = vmatprep.subr.mxu0 0.0
      %810 = vmatpush1.xpose.msra.mxu0 0.0
      %811 = vmatprep.subr.mxu0 0.0
      %812 = vmatpush1.xpose.msra.mxu0 0.0
      %813 = vmatprep.subr.mxu0 0.0
      %814 = vmatpush1.xpose.msra.mxu0 0.0
      %815 = vmatprep.subr.mxu0 0.0
      %816 = vmatpush1.xpose.msra.mxu0 0.0
      %817 = vmatprep.subr.mxu0 0.0
      %818 = vmatpush1.xpose.msra.mxu0 0.0
      %819 = vmatprep.subr.mxu0 0.0
      %820 = vmatpush1.xpose.msra.mxu0 0.0
      %821 = vmatprep.subr.mxu0 0.0
      %822 = vmatpush1.xpose.msra.mxu0 0.0
      %823 = vmatprep.subr.mxu0 0.0
      %824 = vmatpush1.xpose.msra.mxu0 0.0
      %825 = vmatprep.subr.mxu0 0.0
      %826 = vmatpush1.xpose.msra.mxu0 0.0
      %827 = vmatprep.subr.mxu0 0.0
      %828 = vmatpush1.xpose.msra.mxu0 0.0
      %829 = vmatprep.subr.mxu0 0.0
      %830 = vmatpush1.xpose.msra.mxu0 0.0
      %831 = vmatprep.subr.mxu0 0.0
      %832 = vmatpush1.xpose.msra.mxu0 0.0
      %833 = vmatprep.subr.mxu0 0.0
      %834 = vmatpush1.xpose.msra.mxu0 0.0
      %835 = vmatprep.subr.mxu0 0.0
      %836 = vmatpush1.xpose.msra.mxu0 0.0
      %837 = vmatprep.subr.mxu0 0.0
      %838 = vmatpush1.xpose.msra.mxu0 0.0
      %839 = vmatprep.subr.mxu0 0.0
      %840 = vmatpush1.xpose.msra.mxu0 0.0
      %841 = vmatprep.subr.mxu0 0.0
      %842 = vmatpush1.xpose.msra.mxu0 0.0
      %843 = vmatprep.subr.mxu0 0.0
      %844 = vmatpush1.xpose.msra.mxu0 0.0
      %845 = vmatprep.subr.mxu0 0.0
      %846 = vmatpush1.xpose.msra.mxu0 0.0
      %847 = vmatprep.subr.mxu0 0.0
      %848 = vmatpush1.xpose.msra.mxu0 0.0
      %849 = vmatprep.subr.mxu0 0.0
      %850 = vmatpush1.xpose.msra.mxu0 0.0
      %851 = vmatprep.mubr.f32.mxu0 0.0
      %852 = vmatmul.mubr.f32.gmra.mrb[0].mxu0 %v783
      %v853 = vpop.f32.mrb[0].mxu0
      %v854 = vadd.f32 0.0, %v853
      %v855 = vpop.f32.mrb[0].mxu0
      %856 = vdwg.mxu0
      %857 = vrot.lane.b32.xlu0 %v545, 96
      %v858 = vpop.permute.xlu0 %857
      %v859 = vsel %vm554, %v545, 0
      %v861 = vsel %vm554, %v858, 0
      %863 = vmatprep.subr.mxu0 0.0
      %864 = vmatpush1.xpose.msra.mxu0 %v861
      %865 = vmatprep.subr.mxu0 0.0
      %866 = vmatpush1.xpose.msra.mxu0 0.0
      %867 = vmatprep.subr.mxu0 0.0
      %868 = vmatpush1.xpose.msra.mxu0 0.0
      %869 = vmatprep.subr.mxu0 0.0
      %870 = vmatpush1.xpose.msra.mxu0 0.0
      %871 = vmatprep.subr.mxu0 0.0
      %872 = vmatpush1.xpose.msra.mxu0 0.0
      %873 = vmatprep.subr.mxu0 0.0
      %874 = vmatpush1.xpose.msra.mxu0 0.0
      %875 = vmatprep.subr.mxu0 0.0
      %876 = vmatpush1.xpose.msra.mxu0 0.0
      %877 = vmatprep.subr.mxu0 0.0
      %878 = vmatpush1.xpose.msra.mxu0 0.0
      %879 = vmatprep.subr.mxu0 0.0
      %880 = vmatpush1.xpose.msra.mxu0 0.0
      %881 = vmatprep.subr.mxu0 0.0
      %882 = vmatpush1.xpose.msra.mxu0 0.0
      %883 = vmatprep.subr.mxu0 0.0
      %884 = vmatpush1.xpose.msra.mxu0 0.0
      %885 = vmatprep.subr.mxu0 0.0
      %886 = vmatpush1.xpose.msra.mxu0 0.0
      %887 = vmatprep.subr.mxu0 0.0
      %888 = vmatpush1.xpose.msra.mxu0 0.0
      %889 = vmatprep.subr.mxu0 0.0
      %890 = vmatpush1.xpose.msra.mxu0 0.0
      %891 = vmatprep.subr.mxu0 0.0
      %892 = vmatpush1.xpose.msra.mxu0 0.0
      %893 = vmatprep.subr.mxu0 0.0
      %894 = vmatpush1.xpose.msra.mxu0 0.0
      %895 = vmatprep.subr.mxu0 0.0
      %896 = vmatpush1.xpose.msra.mxu0 0.0
      %897 = vmatprep.subr.mxu0 0.0
      %898 = vmatpush1.xpose.msra.mxu0 0.0
      %899 = vmatprep.subr.mxu0 0.0
      %900 = vmatpush1.xpose.msra.mxu0 0.0
      %901 = vmatprep.subr.mxu0 0.0
      %902 = vmatpush1.xpose.msra.mxu0 0.0
      %903 = vmatprep.subr.mxu0 0.0
      %904 = vmatpush1.xpose.msra.mxu0 0.0
      %905 = vmatprep.subr.mxu0 0.0
      %906 = vmatpush1.xpose.msra.mxu0 0.0
      %907 = vmatprep.subr.mxu0 0.0
      %908 = vmatpush1.xpose.msra.mxu0 0.0
      %909 = vmatprep.subr.mxu0 0.0
      %910 = vmatpush1.xpose.msra.mxu0 0.0
      %911 = vmatprep.subr.mxu0 0.0
      %912 = vmatpush1.xpose.msra.mxu0 0.0
      %913 = vmatprep.subr.mxu0 0.0
      %914 = vmatpush1.xpose.msra.mxu0 0.0
      %915 = vmatprep.subr.mxu0 0.0
      %916 = vmatpush1.xpose.msra.mxu0 0.0
      %917 = vmatprep.subr.mxu0 0.0
      %918 = vmatpush1.xpose.msra.mxu0 0.0
      %919 = vmatprep.subr.mxu0 0.0
      %920 = vmatpush1.xpose.msra.mxu0 0.0
      %921 = vmatprep.subr.mxu0 0.0
      %922 = vmatpush1.xpose.msra.mxu0 0.0
      %923 = vmatprep.subr.mxu0 0.0
      %924 = vmatpush1.xpose.msra.mxu0 0.0
      %925 = vmatprep.subr.mxu0 0.0
      %926 = vmatpush1.xpose.msra.mxu0 0.0
      %927 = vmatprep.mubr.f32.mxu0 0.0
      %928 = vmatmul.mubr.f32.gmra.mrb[0].mxu0 %v859
      %v929 = vpop.f32.mrb[0].mxu0
      %v930 = vadd.f32 0.0, %v929
      %v931 = vpop.f32.mrb[0].mxu0
      %932 = vdwg.mxu0
      %933 = vrot.lane.b32.xlu0 %v547, 96
      %v934 = vpop.permute.xlu0 %933
      %v935 = vsel %vm554, %v547, 0
      %v937 = vsel %vm554, %v934, 0
      %939 = vmatprep.subr.mxu0 0.0
      %940 = vmatpush1.xpose.msra.mxu0 %v937
      %941 = vmatprep.subr.mxu0 0.0
      %942 = vmatpush1.xpose.msra.mxu0 0.0
      %943 = vmatprep.subr.mxu0 0.0
      %944 = vmatpush1.xpose.msra.mxu0 0.0
      %945 = vmatprep.subr.mxu0 0.0
      %946 = vmatpush1.xpose.msra.mxu0 0.0
      %947 = vmatprep.subr.mxu0 0.0
      %948 = vmatpush1.xpose.msra.mxu0 0.0
      %949 = vmatprep.subr.mxu0 0.0
      %950 = vmatpush1.xpose.msra.mxu0 0.0
      %951 = vmatprep.subr.mxu0 0.0
      %952 = vmatpush1.xpose.msra.mxu0 0.0
      %953 = vmatprep.subr.mxu0 0.0
      %954 = vmatpush1.xpose.msra.mxu0 0.0
      %955 = vmatprep.subr.mxu0 0.0
      %956 = vmatpush1.xpose.msra.mxu0 0.0
      %957 = vmatprep.subr.mxu0 0.0
      %958 = vmatpush1.xpose.msra.mxu0 0.0
      %959 = vmatprep.subr.mxu0 0.0
      %960 = vmatpush1.xpose.msra.mxu0 0.0
      %961 = vmatprep.subr.mxu0 0.0
      %962 = vmatpush1.xpose.msra.mxu0 0.0
      %963 = vmatprep.subr.mxu0 0.0
      %964 = vmatpush1.xpose.msra.mxu0 0.0
      %965 = vmatprep.subr.mxu0 0.0
      %966 = vmatpush1.xpose.msra.mxu0 0.0
      %967 = vmatprep.subr.mxu0 0.0
      %968 = vmatpush1.xpose.msra.mxu0 0.0
      %969 = vmatprep.subr.mxu0 0.0
      %970 = vmatpush1.xpose.msra.mxu0 0.0
      %971 = vmatprep.subr.mxu0 0.0
      %972 = vmatpush1.xpose.msra.mxu0 0.0
      %973 = vmatprep.subr.mxu0 0.0
      %974 = vmatpush1.xpose.msra.mxu0 0.0
      %975 = vmatprep.subr.mxu0 0.0
      %976 = vmatpush1.xpose.msra.mxu0 0.0
      %977 = vmatprep.subr.mxu0 0.0
      %978 = vmatpush1.xpose.msra.mxu0 0.0
      %979 = vmatprep.subr.mxu0 0.0
      %980 = vmatpush1.xpose.msra.mxu0 0.0
      %981 = vmatprep.subr.mxu0 0.0
      %982 = vmatpush1.xpose.msra.mxu0 0.0
      %983 = vmatprep.subr.mxu0 0.0
      %984 = vmatpush1.xpose.msra.mxu0 0.0
      %985 = vmatprep.subr.mxu0 0.0
      %986 = vmatpush1.xpose.msra.mxu0 0.0
      %987 = vmatprep.subr.mxu0 0.0
      %988 = vmatpush1.xpose.msra.mxu0 0.0
      %989 = vmatprep.subr.mxu0 0.0
      %990 = vmatpush1.xpose.msra.mxu0 0.0
      %991 = vmatprep.subr.mxu0 0.0
      %992 = vmatpush1.xpose.msra.mxu0 0.0
      %993 = vmatprep.subr.mxu0 0.0
      %994 = vmatpush1.xpose.msra.mxu0 0.0
      %995 = vmatprep.subr.mxu0 0.0
      %996 = vmatpush1.xpose.msra.mxu0 0.0
      %997 = vmatprep.subr.mxu0 0.0
      %998 = vmatpush1.xpose.msra.mxu0 0.0
      %999 = vmatprep.subr.mxu0 0.0
      %1000 = vmatpush1.xpose.msra.mxu0 0.0
      %1001 = vmatprep.subr.mxu0 0.0
      %1002 = vmatpush1.xpose.msra.mxu0 0.0
      %1003 = vmatprep.mubr.f32.mxu0 0.0
      %1004 = vmatmul.mubr.f32.gmra.mrb[0].mxu0 %v935
      %v1005 = vpop.f32.mrb[0].mxu0
      %v1006 = vadd.f32 0.0, %v1005
      %v1007 = vpop.f32.mrb[0].mxu0
      %1008 = vdwg.mxu0
      %1009 = vrot.lane.b32.xlu0 %v549, 96
      %v1010 = vpop.permute.xlu0 %1009
      %v1011 = vsel %vm554, %v549, 0
      %v1013 = vsel %vm554, %v1010, 0
      %1015 = vmatprep.subr.mxu0 0.0
      %1016 = vmatpush1.xpose.msra.mxu0 %v1013
      %1017 = vmatprep.subr.mxu0 0.0
      %1018 = vmatpush1.xpose.msra.mxu0 0.0
      %1019 = vmatprep.subr.mxu0 0.0
      %1020 = vmatpush1.xpose.msra.mxu0 0.0
      %1021 = vmatprep.subr.mxu0 0.0
      %1022 = vmatpush1.xpose.msra.mxu0 0.0
      %1023 = vmatprep.subr.mxu0 0.0
      %1024 = vmatpush1.xpose.msra.mxu0 0.0
      %1025 = vmatprep.subr.mxu0 0.0
      %1026 = vmatpush1.xpose.msra.mxu0 0.0
      %1027 = vmatprep.subr.mxu0 0.0
      %1028 = vmatpush1.xpose.msra.mxu0 0.0
      %1029 = vmatprep.subr.mxu0 0.0
      %1030 = vmatpush1.xpose.msra.mxu0 0.0
      %1031 = vmatprep.subr.mxu0 0.0
      %1032 = vmatpush1.xpose.msra.mxu0 0.0
      %1033 = vmatprep.subr.mxu0 0.0
      %1034 = vmatpush1.xpose.msra.mxu0 0.0
      %1035 = vmatprep.subr.mxu0 0.0
      %1036 = vmatpush1.xpose.msra.mxu0 0.0
      %1037 = vmatprep.subr.mxu0 0.0
      %1038 = vmatpush1.xpose.msra.mxu0 0.0
      %1039 = vmatprep.subr.mxu0 0.0
      %1040 = vmatpush1.xpose.msra.mxu0 0.0
      %1041 = vmatprep.subr.mxu0 0.0
      %1042 = vmatpush1.xpose.msra.mxu0 0.0
      %1043 = vmatprep.subr.mxu0 0.0
      %1044 = vmatpush1.xpose.msra.mxu0 0.0
      %1045 = vmatprep.subr.mxu0 0.0
      %1046 = vmatpush1.xpose.msra.mxu0 0.0
      %1047 = vmatprep.subr.mxu0 0.0
      %1048 = vmatpush1.xpose.msra.mxu0 0.0
      %1049 = vmatprep.subr.mxu0 0.0
      %1050 = vmatpush1.xpose.msra.mxu0 0.0
      %1051 = vmatprep.subr.mxu0 0.0
      %1052 = vmatpush1.xpose.msra.mxu0 0.0
      %1053 = vmatprep.subr.mxu0 0.0
      %1054 = vmatpush1.xpose.msra.mxu0 0.0
      %1055 = vmatprep.subr.mxu0 0.0
      %1056 = vmatpush1.xpose.msra.mxu0 0.0
      %1057 = vmatprep.subr.mxu0 0.0
      %1058 = vmatpush1.xpose.msra.mxu0 0.0
      %1059 = vmatprep.subr.mxu0 0.0
      %1060 = vmatpush1.xpose.msra.mxu0 0.0
      %1061 = vmatprep.subr.mxu0 0.0
      %1062 = vmatpush1.xpose.msra.mxu0 0.0
      %1063 = vmatprep.subr.mxu0 0.0
      %1064 = vmatpush1.xpose.msra.mxu0 0.0
      %1065 = vmatprep.subr.mxu0 0.0
      %1066 = vmatpush1.xpose.msra.mxu0 0.0
      %1067 = vmatprep.subr.mxu0 0.0
      %1068 = vmatpush1.xpose.msra.mxu0 0.0
      %1069 = vmatprep.subr.mxu0 0.0
      %1070 = vmatpush1.xpose.msra.mxu0 0.0
      %1071 = vmatprep.subr.mxu0 0.0
      %1072 = vmatpush1.xpose.msra.mxu0 0.0
      %1073 = vmatprep.subr.mxu0 0.0
      %1074 = vmatpush1.xpose.msra.mxu0 0.0
      %1075 = vmatprep.subr.mxu0 0.0
      %1076 = vmatpush1.xpose.msra.mxu0 0.0
      %1077 = vmatprep.subr.mxu0 0.0
      %1078 = vmatpush1.xpose.msra.mxu0 0.0
      %1079 = vmatprep.mubr.f32.mxu0 0.0
      %1080 = vmatmul.mubr.f32.gmra.mrb[0].mxu0 %v1011
      %v1081 = vpop.f32.mrb[0].mxu0
      %v1082 = vadd.f32 0.0, %v1081
      %v1083 = vpop.f32.mrb[0].mxu0
      %1084 = vdwg.mxu0
      %1085 = vrot.lane.b32.xlu0 %v551, 96
      %v1086 = vpop.permute.xlu0 %1085
      %v1087 = vsel %vm554, %v551, 0
      %v1089 = vsel %vm554, %v1086, 0
      %1091 = vmatprep.subr.mxu0 0.0
      %1092 = vmatpush1.xpose.msra.mxu0 %v1089
      %1093 = vmatprep.subr.mxu0 0.0
      %1094 = vmatpush1.xpose.msra.mxu0 0.0
      %1095 = vmatprep.subr.mxu0 0.0
      %1096 = vmatpush1.xpose.msra.mxu0 0.0
      %1097 = vmatprep.subr.mxu0 0.0
      %1098 = vmatpush1.xpose.msra.mxu0 0.0
      %1099 = vmatprep.subr.mxu0 0.0
      %1100 = vmatpush1.xpose.msra.mxu0 0.0
      %1101 = vmatprep.subr.mxu0 0.0
      %1102 = vmatpush1.xpose.msra.mxu0 0.0
      %1103 = vmatprep.subr.mxu0 0.0
      %1104 = vmatpush1.xpose.msra.mxu0 0.0
      %1105 = vmatprep.subr.mxu0 0.0
      %1106 = vmatpush1.xpose.msra.mxu0 0.0
      %1107 = vmatprep.subr.mxu0 0.0
      %1108 = vmatpush1.xpose.msra.mxu0 0.0
      %1109 = vmatprep.subr.mxu0 0.0
      %1110 = vmatpush1.xpose.msra.mxu0 0.0
      %1111 = vmatprep.subr.mxu0 0.0
      %1112 = vmatpush1.xpose.msra.mxu0 0.0
      %1113 = vmatprep.subr.mxu0 0.0
      %1114 = vmatpush1.xpose.msra.mxu0 0.0
      %1115 = vmatprep.subr.mxu0 0.0
      %1116 = vmatpush1.xpose.msra.mxu0 0.0
      %1117 = vmatprep.subr.mxu0 0.0
      %1118 = vmatpush1.xpose.msra.mxu0 0.0
      %1119 = vmatprep.subr.mxu0 0.0
      %1120 = vmatpush1.xpose.msra.mxu0 0.0
      %1121 = vmatprep.subr.mxu0 0.0
      %1122 = vmatpush1.xpose.msra.mxu0 0.0
      %1123 = vmatprep.subr.mxu0 0.0
      %1124 = vmatpush1.xpose.msra.mxu0 0.0
      %1125 = vmatprep.subr.mxu0 0.0
      %1126 = vmatpush1.xpose.msra.mxu0 0.0
      %1127 = vmatprep.subr.mxu0 0.0
      %1128 = vmatpush1.xpose.msra.mxu0 0.0
      %1129 = vmatprep.subr.mxu0 0.0
      %1130 = vmatpush1.xpose.msra.mxu0 0.0
      %1131 = vmatprep.subr.mxu0 0.0
      %1132 = vmatpush1.xpose.msra.mxu0 0.0
      %1133 = vmatprep.subr.mxu0 0.0
      %1134 = vmatpush1.xpose.msra.mxu0 0.0
      %1135 = vmatprep.subr.mxu0 0.0
      %1136 = vmatpush1.xpose.msra.mxu0 0.0
      %1137 = vmatprep.subr.mxu0 0.0
      %1138 = vmatpush1.xpose.msra.mxu0 0.0
      %1139 = vmatprep.subr.mxu0 0.0
      %1140 = vmatpush1.xpose.msra.mxu0 0.0
      %1141 = vmatprep.subr.mxu0 0.0
      %1142 = vmatpush1.xpose.msra.mxu0 0.0
      %1143 = vmatprep.subr.mxu0 0.0
      %1144 = vmatpush1.xpose.msra.mxu0 0.0
      %1145 = vmatprep.subr.mxu0 0.0
      %1146 = vmatpush1.xpose.msra.mxu0 0.0
      %1147 = vmatprep.subr.mxu0 0.0
      %1148 = vmatpush1.xpose.msra.mxu0 0.0
      %1149 = vmatprep.subr.mxu0 0.0
      %1150 = vmatpush1.xpose.msra.mxu0 0.0
      %1151 = vmatprep.subr.mxu0 0.0
      %1152 = vmatpush1.xpose.msra.mxu0 0.0
      %1153 = vmatprep.subr.mxu0 0.0
      %1154 = vmatpush1.xpose.msra.mxu0 0.0
      %1155 = vmatprep.mubr.f32.mxu0 0.0
      %1156 = vmatmul.mubr.f32.gmra.mrb[0].mxu0 %v1087
      %v1157 = vpop.f32.mrb[0].mxu0
      %v1158 = vadd.f32 0.0, %v1157
      %v1159 = vpop.f32.mrb[0].mxu0
      %1160 = vdwg.mxu0
      %v1161 = vlaneseq
      %v1162 = vshrl.u32 %v1161, 7
      %v1163 = vlaneseq
      %v1164 = vand.u32 %v1163, 127
      %vm1165 = vcmp.gt.s32.totalorder %v1164, %v1162
      %v1166 = vsel %vm1165, 1, 0
      %vm1167 = vcmp.eq.s32.totalorder %v1166, 1
      %v1168 = vsel %vm1167, -1e+30, %v626
      %v1169 = vsel %vm1167, -1e+30, %v702
      %v1170 = vsel %vm1167, -1e+30, %v778
      %v1171 = vsel %vm1167, -1e+30, %v854
      %v1172 = vsel %vm1167, -1e+30, %v930
      %v1173 = vsel %vm1167, -1e+30, %v1006
      %v1174 = vsel %vm1167, -1e+30, %v1082
      %v1175 = vsel %vm1167, -1e+30, %v1158
      %v1176 = vsel %vm554, %v1168, -inf
      %1177 = vmax.xlane.f32.xlu0 %v1176
      %v1178 = vpop.xlane.xlu0 %1177
      %v1179 = vsel %vm554, %v1169, -inf
      %1180 = vmax.xlane.f32.xlu0 %v1179
      %v1181 = vpop.xlane.xlu0 %1180
      %v1182 = vsel %vm554, %v1170, -inf
      %1183 = vmax.xlane.f32.xlu0 %v1182
      %v1184 = vpop.xlane.xlu0 %1183
      %v1185 = vsel %vm554, %v1171, -inf
      %1186 = vmax.xlane.f32.xlu0 %v1185
      %v1187 = vpop.xlane.xlu0 %1186
      %v1188 = vsel %vm554, %v1172, -inf
      %1189 = vmax.xlane.f32.xlu0 %v1188
      %v1190 = vpop.xlane.xlu0 %1189
      %v1191 = vsel %vm554, %v1173, -inf
      %1192 = vmax.xlane.f32.xlu0 %v1191
      %v1193 = vpop.xlane.xlu0 %1192
      %v1194 = vsel %vm554, %v1174, -inf
      %1195 = vmax.xlane.f32.xlu0 %v1194
      %v1196 = vpop.xlane.xlu0 %1195
      %v1197 = vsel %vm554, %v1175, -inf
      %1198 = vmax.xlane.f32.xlu0 %v1197
      %v1199 = vpop.xlane.xlu0 %1198
      %v1200 = vsub.f32 %v1168, %v1178
      %v1201 = vsub.f32 %v1169, %v1181
      %v1202 = vsub.f32 %v1170, %v1184
      %v1203 = vsub.f32 %v1171, %v1187
      %v1204 = vsub.f32 %v1172, %v1190
      %v1205 = vsub.f32 %v1173, %v1193
      %v1206 = vsub.f32 %v1174, %v1196
      %v1207 = vsub.f32 %v1175, %v1199
      %v1208 = vmul.f32 %v1200, 1.442695
      %v1209 = vpow.pop %v1208
      %v1210 = vmul.f32 %v1201, 1.442695
      %v1211 = vpow.pop %v1210
      %v1212 = vmul.f32 %v1202, 1.442695
      %v1213 = vpow.pop %v1212
      %v1214 = vmul.f32 %v1203, 1.442695
      %v1215 = vpow.pop %v1214
      %v1216 = vmul.f32 %v1204, 1.442695
      %v1217 = vpow.pop %v1216
      %v1218 = vmul.f32 %v1205, 1.442695
      %v1219 = vpow.pop %v1218
      %v1220 = vmul.f32 %v1206, 1.442695
      %v1221 = vpow.pop %v1220
      %v1222 = vmul.f32 %v1207, 1.442695
      %v1223 = vpow.pop %v1222
      %v1224 = vsel %vm554, %v1209, 0.0
      %1225 = vadd.xlane.f32.xlu0 %v1224
      %v1226 = vpop.xlane.xlu0 %1225
      %v1227 = vsel %vm554, %v1211, 0.0
      %1228 = vadd.xlane.f32.xlu0 %v1227
      %v1229 = vpop.xlane.xlu0 %1228
      %v1230 = vsel %vm554, %v1213, 0.0
      %1231 = vadd.xlane.f32.xlu0 %v1230
      %v1232 = vpop.xlane.xlu0 %1231
      %v1233 = vsel %vm554, %v1215, 0.0
      %1234 = vadd.xlane.f32.xlu0 %v1233
      %v1235 = vpop.xlane.xlu0 %1234
      %v1236 = vsel %vm554, %v1217, 0.0
      %1237 = vadd.xlane.f32.xlu0 %v1236
      %v1238 = vpop.xlane.xlu0 %1237
      %v1239 = vsel %vm554, %v1219, 0.0
      %1240 = vadd.xlane.f32.xlu0 %v1239
      %v1241 = vpop.xlane.xlu0 %1240
      %v1242 = vsel %vm554, %v1221, 0.0
      %1243 = vadd.xlane.f32.xlu0 %v1242
      %v1244 = vpop.xlane.xlu0 %1243
      %v1245 = vsel %vm554, %v1223, 0.0
      %1246 = vadd.xlane.f32.xlu0 %v1245
      %v1247 = vpop.xlane.xlu0 %1246
      %1248 = vrot.lane.b32.xlu0 %v530, 64
      %v1249 = vpop.permute.xlu0 %1248
      %v1252 = vsel %vm554, %v1209, 0
      %1254 = vmatprep.subr.mxu0 0.0
      %1255 = vmatpush1.msra.mxu0 %v1249
      %1256 = vmatprep.subr.mxu0 0.0
      %1257 = vmatpush1.msra.mxu0 0.0
      %1258 = vmatprep.subr.mxu0 0.0
      %1259 = vmatpush1.msra.mxu0 0.0
      %1260 = vmatprep.subr.mxu0 0.0
      %1261 = vmatpush1.msra.mxu0 0.0
      %1262 = vmatprep.subr.mxu0 0.0
      %1263 = vmatpush1.msra.mxu0 0.0
      %1264 = vmatprep.subr.mxu0 0.0
      %1265 = vmatpush1.msra.mxu0 0.0
      %1266 = vmatprep.subr.mxu0 0.0
      %1267 = vmatpush1.msra.mxu0 0.0
      %1268 = vmatprep.subr.mxu0 0.0
      %1269 = vmatpush1.msra.mxu0 0.0
      %1270 = vmatprep.subr.mxu0 0.0
      %1271 = vmatpush1.msra.mxu0 0.0
      %1272 = vmatprep.subr.mxu0 0.0
      %1273 = vmatpush1.msra.mxu0 0.0
      %1274 = vmatprep.subr.mxu0 0.0
      %1275 = vmatpush1.msra.mxu0 0.0
      %1276 = vmatprep.subr.mxu0 0.0
      %1277 = vmatpush1.msra.mxu0 0.0
      %1278 = vmatprep.subr.mxu0 0.0
      %1279 = vmatpush1.msra.mxu0 0.0
      %1280 = vmatprep.subr.mxu0 0.0
      %1281 = vmatpush1.msra.mxu0 0.0
      %1282 = vmatprep.subr.mxu0 0.0
      %1283 = vmatpush1.msra.mxu0 0.0
      %1284 = vmatprep.subr.mxu0 0.0
      %1285 = vmatpush1.msra.mxu0 0.0
      %1286 = vmatprep.subr.mxu0 0.0
      %1287 = vmatpush1.msra.mxu0 0.0
      %1288 = vmatprep.subr.mxu0 0.0
      %1289 = vmatpush1.msra.mxu0 0.0
      %1290 = vmatprep.subr.mxu0 0.0
      %1291 = vmatpush1.msra.mxu0 0.0
      %1292 = vmatprep.subr.mxu0 0.0
      %1293 = vmatpush1.msra.mxu0 0.0
      %1294 = vmatprep.subr.mxu0 0.0
      %1295 = vmatpush1.msra.mxu0 0.0
      %1296 = vmatprep.subr.mxu0 0.0
      %1297 = vmatpush1.msra.mxu0 0.0
      %1298 = vmatprep.subr.mxu0 0.0
      %1299 = vmatpush1.msra.mxu0 0.0
      %1300 = vmatprep.subr.mxu0 0.0
      %1301 = vmatpush1.msra.mxu0 0.0
      %1302 = vmatprep.subr.mxu0 0.0
      %1303 = vmatpush1.msra.mxu0 0.0
      %1304 = vmatprep.subr.mxu0 0.0
      %1305 = vmatpush1.msra.mxu0 0.0
      %1306 = vmatprep.subr.mxu0 0.0
      %1307 = vmatpush1.msra.mxu0 0.0
      %1308 = vmatprep.subr.mxu0 0.0
      %1309 = vmatpush1.msra.mxu0 0.0
      %1310 = vmatprep.subr.mxu0 0.0
      %1311 = vmatpush1.msra.mxu0 0.0
      %1312 = vmatprep.subr.mxu0 0.0
      %1313 = vmatpush1.msra.mxu0 0.0
      %1314 = vmatprep.subr.mxu0 0.0
      %1315 = vmatpush1.msra.mxu0 0.0
      %1316 = vmatprep.subr.mxu0 0.0
      %1317 = vmatpush1.msra.mxu0 0.0
      %1318 = vmatprep.mubr.f32.mxu0 0.0
      %1319 = vmatmul.mubr.f32.gmra.mrb[0].mxu0 %v1252
      %v1320 = vpop.f32.mrb[0].mxu0
      %v1321 = vadd.f32 0.0, %v1320
      %v1322 = vpop.f32.mrb[0].mxu0
      %1323 = vdwg.mxu0
      %1324 = vrot.lane.b32.xlu0 %v535, 64
      %v1325 = vpop.permute.xlu0 %1324
      %v1328 = vsel %vm554, %v1211, 0
      %1330 = vmatprep.subr.mxu0 0.0
      %1331 = vmatpush1.msra.mxu0 %v1325
      %1332 = vmatprep.subr.mxu0 0.0
      %1333 = vmatpush1.msra.mxu0 0.0
      %1334 = vmatprep.subr.mxu0 0.0
      %1335 = vmatpush1.msra.mxu0 0.0
      %1336 = vmatprep.subr.mxu0 0.0
      %1337 = vmatpush1.msra.mxu0 0.0
      %1338 = vmatprep.subr.mxu0 0.0
      %1339 = vmatpush1.msra.mxu0 0.0
      %1340 = vmatprep.subr.mxu0 0.0
      %1341 = vmatpush1.msra.mxu0 0.0
      %1342 = vmatprep.subr.mxu0 0.0
      %1343 = vmatpush1.msra.mxu0 0.0
      %1344 = vmatprep.subr.mxu0 0.0
      %1345 = vmatpush1.msra.mxu0 0.0
      %1346 = vmatprep.subr.mxu0 0.0
      %1347 = vmatpush1.msra.mxu0 0.0
      %1348 = vmatprep.subr.mxu0 0.0
      %1349 = vmatpush1.msra.mxu0 0.0
      %1350 = vmatprep.subr.mxu0 0.0
      %1351 = vmatpush1.msra.mxu0 0.0
      %1352 = vmatprep.subr.mxu0 0.0
      %1353 = vmatpush1.msra.mxu0 0.0
      %1354 = vmatprep.subr.mxu0 0.0
      %1355 = vmatpush1.msra.mxu0 0.0
      %1356 = vmatprep.subr.mxu0 0.0
      %1357 = vmatpush1.msra.mxu0 0.0
      %1358 = vmatprep.subr.mxu0 0.0
      %1359 = vmatpush1.msra.mxu0 0.0
      %1360 = vmatprep.subr.mxu0 0.0
      %1361 = vmatpush1.msra.mxu0 0.0
      %1362 = vmatprep.subr.mxu0 0.0
      %1363 = vmatpush1.msra.mxu0 0.0
      %1364 = vmatprep.subr.mxu0 0.0
      %1365 = vmatpush1.msra.mxu0 0.0
      %1366 = vmatprep.subr.mxu0 0.0
      %1367 = vmatpush1.msra.mxu0 0.0
      %1368 = vmatprep.subr.mxu0 0.0
      %1369 = vmatpush1.msra.mxu0 0.0
      %1370 = vmatprep.subr.mxu0 0.0
      %1371 = vmatpush1.msra.mxu0 0.0
      %1372 = vmatprep.subr.mxu0 0.0
      %1373 = vmatpush1.msra.mxu0 0.0
      %1374 = vmatprep.subr.mxu0 0.0
      %1375 = vmatpush1.msra.mxu0 0.0
      %1376 = vmatprep.subr.mxu0 0.0
      %1377 = vmatpush1.msra.mxu0 0.0
      %1378 = vmatprep.subr.mxu0 0.0
      %1379 = vmatpush1.msra.mxu0 0.0
      %1380 = vmatprep.subr.mxu0 0.0
      %1381 = vmatpush1.msra.mxu0 0.0
      %1382 = vmatprep.subr.mxu0 0.0
      %1383 = vmatpush1.msra.mxu0 0.0
      %1384 = vmatprep.subr.mxu0 0.0
      %1385 = vmatpush1.msra.mxu0 0.0
      %1386 = vmatprep.subr.mxu0 0.0
      %1387 = vmatpush1.msra.mxu0 0.0
      %1388 = vmatprep.subr.mxu0 0.0
      %1389 = vmatpush1.msra.mxu0 0.0
      %1390 = vmatprep.subr.mxu0 0.0
      %1391 = vmatpush1.msra.mxu0 0.0
      %1392 = vmatprep.subr.mxu0 0.0
      %1393 = vmatpush1.msra.mxu0 0.0
      %1394 = vmatprep.mubr.f32.mxu0 0.0
      %1395 = vmatmul.mubr.f32.gmra.mrb[0].mxu0 %v1328
      %v1396 = vpop.f32.mrb[0].mxu0
      %v1397 = vadd.f32 0.0, %v1396
      %v1398 = vpop.f32.mrb[0].mxu0
      %1399 = vdwg.mxu0
      %1400 = vrot.lane.b32.xlu0 %v541, 64
      %v1401 = vpop.permute.xlu0 %1400
      %v1404 = vsel %vm554, %v1213, 0
      %1406 = vmatprep.subr.mxu0 0.0
      %1407 = vmatpush1.msra.mxu0 %v1401
      %1408 = vmatprep.subr.mxu0 0.0
      %1409 = vmatpush1.msra.mxu0 0.0
      %1410 = vmatprep.subr.mxu0 0.0
      %1411 = vmatpush1.msra.mxu0 0.0
      %1412 = vmatprep.subr.mxu0 0.0
      %1413 = vmatpush1.msra.mxu0 0.0
      %1414 = vmatprep.subr.mxu0 0.0
      %1415 = vmatpush1.msra.mxu0 0.0
      %1416 = vmatprep.subr.mxu0 0.0
      %1417 = vmatpush1.msra.mxu0 0.0
      %1418 = vmatprep.subr.mxu0 0.0
      %1419 = vmatpush1.msra.mxu0 0.0
      %1420 = vmatprep.subr.mxu0 0.0
      %1421 = vmatpush1.msra.mxu0 0.0
      %1422 = vmatprep.subr.mxu0 0.0
      %1423 = vmatpush1.msra.mxu0 0.0
      %1424 = vmatprep.subr.mxu0 0.0
      %1425 = vmatpush1.msra.mxu0 0.0
      %1426 = vmatprep.subr.mxu0 0.0
      %1427 = vmatpush1.msra.mxu0 0.0
      %1428 = vmatprep.subr.mxu0 0.0
      %1429 = vmatpush1.msra.mxu0 0.0
      %1430 = vmatprep.subr.mxu0 0.0
      %1431 = vmatpush1.msra.mxu0 0.0
      %1432 = vmatprep.subr.mxu0 0.0
      %1433 = vmatpush1.msra.mxu0 0.0
      %1434 = vmatprep.subr.mxu0 0.0
      %1435 = vmatpush1.msra.mxu0 0.0
      %1436 = vmatprep.subr.mxu0 0.0
      %1437 = vmatpush1.msra.mxu0 0.0
      %1438 = vmatprep.subr.mxu0 0.0
      %1439 = vmatpush1.msra.mxu0 0.0
      %1440 = vmatprep.subr.mxu0 0.0
      %1441 = vmatpush1.msra.mxu0 0.0
      %1442 = vmatprep.subr.mxu0 0.0
      %1443 = vmatpush1.msra.mxu0 0.0
      %1444 = vmatprep.subr.mxu0 0.0
      %1445 = vmatpush1.msra.mxu0 0.0
      %1446 = vmatprep.subr.mxu0 0.0
      %1447 = vmatpush1.msra.mxu0 0.0
      %1448 = vmatprep.subr.mxu0 0.0
      %1449 = vmatpush1.msra.mxu0 0.0
      %1450 = vmatprep.subr.mxu0 0.0
      %1451 = vmatpush1.msra.mxu0 0.0
      %1452 = vmatprep.subr.mxu0 0.0
      %1453 = vmatpush1.msra.mxu0 0.0
      %1454 = vmatprep.subr.mxu0 0.0
      %1455 = vmatpush1.msra.mxu0 0.0
      %1456 = vmatprep.subr.mxu0 0.0
      %1457 = vmatpush1.msra.mxu0 0.0
      %1458 = vmatprep.subr.mxu0 0.0
      %1459 = vmatpush1.msra.mxu0 0.0
      %1460 = vmatprep.subr.mxu0 0.0
      %1461 = vmatpush1.msra.mxu0 0.0
      %1462 = vmatprep.subr.mxu0 0.0
      %1463 = vmatpush1.msra.mxu0 0.0
      %1464 = vmatprep.subr.mxu0 0.0
      %1465 = vmatpush1.msra.mxu0 0.0
      %1466 = vmatprep.subr.mxu0 0.0
      %1467 = vmatpush1.msra.mxu0 0.0
      %1468 = vmatprep.subr.mxu0 0.0
      %1469 = vmatpush1.msra.mxu0 0.0
      %1470 = vmatprep.mubr.f32.mxu0 0.0
      %1471 = vmatmul.mubr.f32.gmra.mrb[0].mxu0 %v1404
      %v1472 = vpop.f32.mrb[0].mxu0
      %v1473 = vadd.f32 0.0, %v1472
      %v1474 = vpop.f32.mrb[0].mxu0
      %1475 = vdwg.mxu0
      %1476 = vrot.lane.b32.xlu0 %v543, 64
      %v1477 = vpop.permute.xlu0 %1476
      %v1480 = vsel %vm554, %v1215, 0
      %1482 = vmatprep.subr.mxu0 0.0
      %1483 = vmatpush1.msra.mxu0 %v1477
      %1484 = vmatprep.subr.mxu0 0.0
      %1485 = vmatpush1.msra.mxu0 0.0
      %1486 = vmatprep.subr.mxu0 0.0
      %1487 = vmatpush1.msra.mxu0 0.0
      %1488 = vmatprep.subr.mxu0 0.0
      %1489 = vmatpush1.msra.mxu0 0.0
      %1490 = vmatprep.subr.mxu0 0.0
      %1491 = vmatpush1.msra.mxu0 0.0
      %1492 = vmatprep.subr.mxu0 0.0
      %1493 = vmatpush1.msra.mxu0 0.0
      %1494 = vmatprep.subr.mxu0 0.0
      %1495 = vmatpush1.msra.mxu0 0.0
      %1496 = vmatprep.subr.mxu0 0.0
      %1497 = vmatpush1.msra.mxu0 0.0
      %1498 = vmatprep.subr.mxu0 0.0
      %1499 = vmatpush1.msra.mxu0 0.0
      %1500 = vmatprep.subr.mxu0 0.0
      %1501 = vmatpush1.msra.mxu0 0.0
      %1502 = vmatprep.subr.mxu0 0.0
      %1503 = vmatpush1.msra.mxu0 0.0
      %1504 = vmatprep.subr.mxu0 0.0
      %1505 = vmatpush1.msra.mxu0 0.0
      %1506 = vmatprep.subr.mxu0 0.0
      %1507 = vmatpush1.msra.mxu0 0.0
      %1508 = vmatprep.subr.mxu0 0.0
      %1509 = vmatpush1.msra.mxu0 0.0
      %1510 = vmatprep.subr.mxu0 0.0
      %1511 = vmatpush1.msra.mxu0 0.0
      %1512 = vmatprep.subr.mxu0 0.0
      %1513 = vmatpush1.msra.mxu0 0.0
      %1514 = vmatprep.subr.mxu0 0.0
      %1515 = vmatpush1.msra.mxu0 0.0
      %1516 = vmatprep.subr.mxu0 0.0
      %1517 = vmatpush1.msra.mxu0 0.0
      %1518 = vmatprep.subr.mxu0 0.0
      %1519 = vmatpush1.msra.mxu0 0.0
      %1520 = vmatprep.subr.mxu0 0.0
      %1521 = vmatpush1.msra.mxu0 0.0
      %1522 = vmatprep.subr.mxu0 0.0
      %1523 = vmatpush1.msra.mxu0 0.0
      %1524 = vmatprep.subr.mxu0 0.0
      %1525 = vmatpush1.msra.mxu0 0.0
      %1526 = vmatprep.subr.mxu0 0.0
      %1527 = vmatpush1.msra.mxu0 0.0
      %1528 = vmatprep.subr.mxu0 0.0
      %1529 = vmatpush1.msra.mxu0 0.0
      %1530 = vmatprep.subr.mxu0 0.0
      %1531 = vmatpush1.msra.mxu0 0.0
      %1532 = vmatprep.subr.mxu0 0.0
      %1533 = vmatpush1.msra.mxu0 0.0
      %1534 = vmatprep.subr.mxu0 0.0
      %1535 = vmatpush1.msra.mxu0 0.0
      %1536 = vmatprep.subr.mxu0 0.0
      %1537 = vmatpush1.msra.mxu0 0.0
      %1538 = vmatprep.subr.mxu0 0.0
      %1539 = vmatpush1.msra.mxu0 0.0
      %1540 = vmatprep.subr.mxu0 0.0
      %1541 = vmatpush1.msra.mxu0 0.0
      %1542 = vmatprep.subr.mxu0 0.0
      %1543 = vmatpush1.msra.mxu0 0.0
      %1544 = vmatprep.subr.mxu0 0.0
      %1545 = vmatpush1.msra.mxu0 0.0
      %1546 = vmatprep.mubr.f32.mxu0 0.0
      %1547 = vmatmul.mubr.f32.gmra.mrb[0].mxu0 %v1480
      %v1548 = vpop.f32.mrb[0].mxu0
      %v1549 = vadd.f32 0.0, %v1548
      %v1550 = vpop.f32.mrb[0].mxu0
      %1551 = vdwg.mxu0
      %1552 = vrot.lane.b32.xlu0 %v545, 64
      %v1553 = vpop.permute.xlu0 %1552
      %v1556 = vsel %vm554, %v1217, 0
      %1558 = vmatprep.subr.mxu0 0.0
      %1559 = vmatpush1.msra.mxu0 %v1553
      %1560 = vmatprep.subr.mxu0 0.0
      %1561 = vmatpush1.msra.mxu0 0.0
      %1562 = vmatprep.subr.mxu0 0.0
      %1563 = vmatpush1.msra.mxu0 0.0
      %1564 = vmatprep.subr.mxu0 0.0
      %1565 = vmatpush1.msra.mxu0 0.0
      %1566 = vmatprep.subr.mxu0 0.0
      %1567 = vmatpush1.msra.mxu0 0.0
      %1568 = vmatprep.subr.mxu0 0.0
      %1569 = vmatpush1.msra.mxu0 0.0
      %1570 = vmatprep.subr.mxu0 0.0
      %1571 = vmatpush1.msra.mxu0 0.0
      %1572 = vmatprep.subr.mxu0 0.0
      %1573 = vmatpush1.msra.mxu0 0.0
      %1574 = vmatprep.subr.mxu0 0.0
      %1575 = vmatpush1.msra.mxu0 0.0
      %1576 = vmatprep.subr.mxu0 0.0
      %1577 = vmatpush1.msra.mxu0 0.0
      %1578 = vmatprep.subr.mxu0 0.0
      %1579 = vmatpush1.msra.mxu0 0.0
      %1580 = vmatprep.subr.mxu0 0.0
      %1581 = vmatpush1.msra.mxu0 0.0
      %1582 = vmatprep.subr.mxu0 0.0
      %1583 = vmatpush1.msra.mxu0 0.0
      %1584 = vmatprep.subr.mxu0 0.0
      %1585 = vmatpush1.msra.mxu0 0.0
      %1586 = vmatprep.subr.mxu0 0.0
      %1587 = vmatpush1.msra.mxu0 0.0
      %1588 = vmatprep.subr.mxu0 0.0
      %1589 = vmatpush1.msra.mxu0 0.0
      %1590 = vmatprep.subr.mxu0 0.0
      %1591 = vmatpush1.msra.mxu0 0.0
      %1592 = vmatprep.subr.mxu0 0.0
      %1593 = vmatpush1.msra.mxu0 0.0
      %1594 = vmatprep.subr.mxu0 0.0
      %1595 = vmatpush1.msra.mxu0 0.0
      %1596 = vmatprep.subr.mxu0 0.0
      %1597 = vmatpush1.msra.mxu0 0.0
      %1598 = vmatprep.subr.mxu0 0.0
      %1599 = vmatpush1.msra.mxu0 0.0
      %1600 = vmatprep.subr.mxu0 0.0
      %1601 = vmatpush1.msra.mxu0 0.0
      %1602 = vmatprep.subr.mxu0 0.0
      %1603 = vmatpush1.msra.mxu0 0.0
      %1604 = vmatprep.subr.mxu0 0.0
      %1605 = vmatpush1.msra.mxu0 0.0
      %1606 = vmatprep.subr.mxu0 0.0
      %1607 = vmatpush1.msra.mxu0 0.0
      %1608 = vmatprep.subr.mxu0 0.0
      %1609 = vmatpush1.msra.mxu0 0.0
      %1610 = vmatprep.subr.mxu0 0.0
      %1611 = vmatpush1.msra.mxu0 0.0
      %1612 = vmatprep.subr.mxu0 0.0
      %1613 = vmatpush1.msra.mxu0 0.0
      %1614 = vmatprep.subr.mxu0 0.0
      %1615 = vmatpush1.msra.mxu0 0.0
      %1616 = vmatprep.subr.mxu0 0.0
      %1617 = vmatpush1.msra.mxu0 0.0
      %1618 = vmatprep.subr.mxu0 0.0
      %1619 = vmatpush1.msra.mxu0 0.0
      %1620 = vmatprep.subr.mxu0 0.0
      %1621 = vmatpush1.msra.mxu0 0.0
      %1622 = vmatprep.mubr.f32.mxu0 0.0
      %1623 = vmatmul.mubr.f32.gmra.mrb[0].mxu0 %v1556
      %v1624 = vpop.f32.mrb[0].mxu0
      %v1625 = vadd.f32 0.0, %v1624
      %v1626 = vpop.f32.mrb[0].mxu0
      %1627 = vdwg.mxu0
      %1628 = vrot.lane.b32.xlu0 %v547, 64
      %v1629 = vpop.permute.xlu0 %1628
      %v1632 = vsel %vm554, %v1219, 0
      %1634 = vmatprep.subr.mxu0 0.0
      %1635 = vmatpush1.msra.mxu0 %v1629
      %1636 = vmatprep.subr.mxu0 0.0
      %1637 = vmatpush1.msra.mxu0 0.0
      %1638 = vmatprep.subr.mxu0 0.0
      %1639 = vmatpush1.msra.mxu0 0.0
      %1640 = vmatprep.subr.mxu0 0.0
      %1641 = vmatpush1.msra.mxu0 0.0
      %1642 = vmatprep.subr.mxu0 0.0
      %1643 = vmatpush1.msra.mxu0 0.0
      %1644 = vmatprep.subr.mxu0 0.0
      %1645 = vmatpush1.msra.mxu0 0.0
      %1646 = vmatprep.subr.mxu0 0.0
      %1647 = vmatpush1.msra.mxu0 0.0
      %1648 = vmatprep.subr.mxu0 0.0
      %1649 = vmatpush1.msra.mxu0 0.0
      %1650 = vmatprep.subr.mxu0 0.0
      %1651 = vmatpush1.msra.mxu0 0.0
      %1652 = vmatprep.subr.mxu0 0.0
      %1653 = vmatpush1.msra.mxu0 0.0
      %1654 = vmatprep.subr.mxu0 0.0
      %1655 = vmatpush1.msra.mxu0 0.0
      %1656 = vmatprep.subr.mxu0 0.0
      %1657 = vmatpush1.msra.mxu0 0.0
      %1658 = vmatprep.subr.mxu0 0.0
      %1659 = vmatpush1.msra.mxu0 0.0
      %1660 = vmatprep.subr.mxu0 0.0
      %1661 = vmatpush1.msra.mxu0 0.0
      %1662 = vmatprep.subr.mxu0 0.0
      %1663 = vmatpush1.msra.mxu0 0.0
      %1664 = vmatprep.subr.mxu0 0.0
      %1665 = vmatpush1.msra.mxu0 0.0
      %1666 = vmatprep.subr.mxu0 0.0
      %1667 = vmatpush1.msra.mxu0 0.0
      %1668 = vmatprep.subr.mxu0 0.0
      %1669 = vmatpush1.msra.mxu0 0.0
      %1670 = vmatprep.subr.mxu0 0.0
      %1671 = vmatpush1.msra.mxu0 0.0
      %1672 = vmatprep.subr.mxu0 0.0
      %1673 = vmatpush1.msra.mxu0 0.0
      %1674 = vmatprep.subr.mxu0 0.0
      %1675 = vmatpush1.msra.mxu0 0.0
      %1676 = vmatprep.subr.mxu0 0.0
      %1677 = vmatpush1.msra.mxu0 0.0
      %1678 = vmatprep.subr.mxu0 0.0
      %1679 = vmatpush1.msra.mxu0 0.0
      %1680 = vmatprep.subr.mxu0 0.0
      %1681 = vmatpush1.msra.mxu0 0.0
      %1682 = vmatprep.subr.mxu0 0.0
      %1683 = vmatpush1.msra.mxu0 0.0
      %1684 = vmatprep.subr.mxu0 0.0
      %1685 = vmatpush1.msra.mxu0 0.0
      %1686 = vmatprep.subr.mxu0 0.0
      %1687 = vmatpush1.msra.mxu0 0.0
      %1688 = vmatprep.subr.mxu0 0.0
      %1689 = vmatpush1.msra.mxu0 0.0
      %1690 = vmatprep.subr.mxu0 0.0
      %1691 = vmatpush1.msra.mxu0 0.0
      %1692 = vmatprep.subr.mxu0 0.0
      %1693 = vmatpush1.msra.mxu0 0.0
      %1694 = vmatprep.subr.mxu0 0.0
      %1695 = vmatpush1.msra.mxu0 0.0
      %1696 = vmatprep.subr.mxu0 0.0
      %1697 = vmatpush1.msra.mxu0 0.0
      %1698 = vmatprep.mubr.f32.mxu0 0.0
      %1699 = vmatmul.mubr.f32.gmra.mrb[0].mxu0 %v1632
      %v1700 = vpop.f32.mrb[0].mxu0
      %v1701 = vadd.f32 0.0, %v1700
      %v1702 = vpop.f32.mrb[0].mxu0
      %1703 = vdwg.mxu0
      %1704 = vrot.lane.b32.xlu0 %v549, 64
      %v1705 = vpop.permute.xlu0 %1704
      %v1708 = vsel %vm554, %v1221, 0
      %1710 = vmatprep.subr.mxu0 0.0
      %1711 = vmatpush1.msra.mxu0 %v1705
      %1712 = vmatprep.subr.mxu0 0.0
      %1713 = vmatpush1.msra.mxu0 0.0
      %1714 = vmatprep.subr.mxu0 0.0
      %1715 = vmatpush1.msra.mxu0 0.0
      %1716 = vmatprep.subr.mxu0 0.0
      %1717 = vmatpush1.msra.mxu0 0.0
      %1718 = vmatprep.subr.mxu0 0.0
      %1719 = vmatpush1.msra.mxu0 0.0
      %1720 = vmatprep.subr.mxu0 0.0
      %1721 = vmatpush1.msra.mxu0 0.0
      %1722 = vmatprep.subr.mxu0 0.0
      %1723 = vmatpush1.msra.mxu0 0.0
      %1724 = vmatprep.subr.mxu0 0.0
      %1725 = vmatpush1.msra.mxu0 0.0
      %1726 = vmatprep.subr.mxu0 0.0
      %1727 = vmatpush1.msra.mxu0 0.0
      %1728 = vmatprep.subr.mxu0 0.0
      %1729 = vmatpush1.msra.mxu0 0.0
      %1730 = vmatprep.subr.mxu0 0.0
      %1731 = vmatpush1.msra.mxu0 0.0
      %1732 = vmatprep.subr.mxu0 0.0
      %1733 = vmatpush1.msra.mxu0 0.0
      %1734 = vmatprep.subr.mxu0 0.0
      %1735 = vmatpush1.msra.mxu0 0.0
      %1736 = vmatprep.subr.mxu0 0.0
      %1737 = vmatpush1.msra.mxu0 0.0
      %1738 = vmatprep.subr.mxu0 0.0
      %1739 = vmatpush1.msra.mxu0 0.0
      %1740 = vmatprep.subr.mxu0 0.0
      %1741 = vmatpush1.msra.mxu0 0.0
      %1742 = vmatprep.subr.mxu0 0.0
      %1743 = vmatpush1.msra.mxu0 0.0
      %1744 = vmatprep.subr.mxu0 0.0
      %1745 = vmatpush1.msra.mxu0 0.0
      %1746 = vmatprep.subr.mxu0 0.0
      %1747 = vmatpush1.msra.mxu0 0.0
      %1748 = vmatprep.subr.mxu0 0.0
      %1749 = vmatpush1.msra.mxu0 0.0
      %1750 = vmatprep.subr.mxu0 0.0
      %1751 = vmatpush1.msra.mxu0 0.0
      %1752 = vmatprep.subr.mxu0 0.0
      %1753 = vmatpush1.msra.mxu0 0.0
      %1754 = vmatprep.subr.mxu0 0.0
      %1755 = vmatpush1.msra.mxu0 0.0
      %1756 = vmatprep.subr.mxu0 0.0
      %1757 = vmatpush1.msra.mxu0 0.0
      %1758 = vmatprep.subr.mxu0 0.0
      %1759 = vmatpush1.msra.mxu0 0.0
      %1760 = vmatprep.subr.mxu0 0.0
      %1761 = vmatpush1.msra.mxu0 0.0
      %1762 = vmatprep.subr.mxu0 0.0
      %1763 = vmatpush1.msra.mxu0 0.0
      %1764 = vmatprep.subr.mxu0 0.0
      %1765 = vmatpush1.msra.mxu0 0.0
      %1766 = vmatprep.subr.mxu0 0.0
      %1767 = vmatpush1.msra.mxu0 0.0
      %1768 = vmatprep.subr.mxu0 0.0
      %1769 = vmatpush1.msra.mxu0 0.0
      %1770 = vmatprep.subr.mxu0 0.0
      %1771 = vmatpush1.msra.mxu0 0.0
      %1772 = vmatprep.subr.mxu0 0.0
      %1773 = vmatpush1.msra.mxu0 0.0
      %1774 = vmatprep.mubr.f32.mxu0 0.0
      %1775 = vmatmul.mubr.f32.gmra.mrb[0].mxu0 %v1708
      %v1776 = vpop.f32.mrb[0].mxu0
      %v1777 = vadd.f32 0.0, %v1776
      %v1778 = vpop.f32.mrb[0].mxu0
      %1779 = vdwg.mxu0
      %1780 = vrot.lane.b32.xlu0 %v551, 64
      %v1781 = vpop.permute.xlu0 %1780
      %v1784 = vsel %vm554, %v1223, 0
      %1786 = vmatprep.subr.mxu0 0.0
      %1787 = vmatpush1.msra.mxu0 %v1781
      %1788 = vmatprep.subr.mxu0 0.0
      %1789 = vmatpush1.msra.mxu0 0.0
      %1790 = vmatprep.subr.mxu0 0.0
      %1791 = vmatpush1.msra.mxu0 0.0
      %1792 = vmatprep.subr.mxu0 0.0
      %1793 = vmatpush1.msra.mxu0 0.0
      %1794 = vmatprep.subr.mxu0 0.0
      %1795 = vmatpush1.msra.mxu0 0.0
      %1796 = vmatprep.subr.mxu0 0.0
      %1797 = vmatpush1.msra.mxu0 0.0
      %1798 = vmatprep.subr.mxu0 0.0
      %1799 = vmatpush1.msra.mxu0 0.0
      %1800 = vmatprep.subr.mxu0 0.0
      %1801 = vmatpush1.msra.mxu0 0.0
      %1802 = vmatprep.subr.mxu0 0.0
      %1803 = vmatpush1.msra.mxu0 0.0
      %1804 = vmatprep.subr.mxu0 0.0
      %1805 = vmatpush1.msra.mxu0 0.0
      %1806 = vmatprep.subr.mxu0 0.0
      %1807 = vmatpush1.msra.mxu0 0.0
      %1808 = vmatprep.subr.mxu0 0.0
      %1809 = vmatpush1.msra.mxu0 0.0
      %1810 = vmatprep.subr.mxu0 0.0
      %1811 = vmatpush1.msra.mxu0 0.0
      %1812 = vmatprep.subr.mxu0 0.0
      %1813 = vmatpush1.msra.mxu0 0.0
      %1814 = vmatprep.subr.mxu0 0.0
      %1815 = vmatpush1.msra.mxu0 0.0
      %1816 = vmatprep.subr.mxu0 0.0
      %1817 = vmatpush1.msra.mxu0 0.0
      %1818 = vmatprep.subr.mxu0 0.0
      %1819 = vmatpush1.msra.mxu0 0.0
      %1820 = vmatprep.subr.mxu0 0.0
      %1821 = vmatpush1.msra.mxu0 0.0
      %1822 = vmatprep.subr.mxu0 0.0
      %1823 = vmatpush1.msra.mxu0 0.0
      %1824 = vmatprep.subr.mxu0 0.0
      %1825 = vmatpush1.msra.mxu0 0.0
      %1826 = vmatprep.subr.mxu0 0.0
      %1827 = vmatpush1.msra.mxu0 0.0
      %1828 = vmatprep.subr.mxu0 0.0
      %1829 = vmatpush1.msra.mxu0 0.0
      %1830 = vmatprep.subr.mxu0 0.0
      %1831 = vmatpush1.msra.mxu0 0.0
      %1832 = vmatprep.subr.mxu0 0.0
      %1833 = vmatpush1.msra.mxu0 0.0
      %1834 = vmatprep.subr.mxu0 0.0
      %1835 = vmatpush1.msra.mxu0 0.0
      %1836 = vmatprep.subr.mxu0 0.0
      %1837 = vmatpush1.msra.mxu0 0.0
      %1838 = vmatprep.subr.mxu0 0.0
      %1839 = vmatpush1.msra.mxu0 0.0
      %1840 = vmatprep.subr.mxu0 0.0
      %1841 = vmatpush1.msra.mxu0 0.0
      %1842 = vmatprep.subr.mxu0 0.0
      %1843 = vmatpush1.msra.mxu0 0.0
      %1844 = vmatprep.subr.mxu0 0.0
      %1845 = vmatpush1.msra.mxu0 0.0
      %1846 = vmatprep.subr.mxu0 0.0
      %1847 = vmatpush1.msra.mxu0 0.0
      %1848 = vmatprep.subr.mxu0 0.0
      %1849 = vmatpush1.msra.mxu0 0.0
      %1850 = vmatprep.mubr.f32.mxu0 0.0
      %1851 = vmatmul.mubr.f32.gmra.mrb[0].mxu0 %v1784
      %v1852 = vpop.f32.mrb[0].mxu0
      %v1853 = vadd.f32 0.0, %v1852
      %v1854 = vpop.f32.mrb[0].mxu0
      %1855 = vdwg.mxu0
      %v1856 = vrcp.pop %v1226
      %v1857 = vrcp.pop %v1229
      %v1858 = vrcp.pop %v1232
      %v1859 = vrcp.pop %v1235
      %v1860 = vrcp.pop %v1238
      %v1861 = vrcp.pop %v1241
      %v1862 = vrcp.pop %v1244
      %v1863 = vrcp.pop %v1247
      %v1864 = vmul.f32 %v1321, %v1856
      %v1865 = vmul.f32 %v1397, %v1857
      %v1866 = vmul.f32 %v1473, %v1858
      %v1867 = vmul.f32 %v1549, %v1859
      %v1868 = vmul.f32 %v1625, %v1860
      %v1869 = vmul.f32 %v1701, %v1861
      %v1870 = vmul.f32 %v1777, %v1862
      %v1871 = vmul.f32 %v1853, %v1863
      %v1872 = vld [vmem:[%s414] sm:$0xff]
      %v1873 = vld [vmem:[%s414 + $0x8] sm:$0xff]
      %v1874 = vld [vmem:[%s414 + $0x10] sm:$0xff]
      %v1875 = vld [vmem:[%s414 + $0x18] sm:$0xff]
      %v1877 = vsel %vm554, %v1866, 0
      %v1880 = vsel %vm554, %v1867, 0
      %1882 = vmatprep.subr.mxu0 0.0
      %1883 = vmatpush1.msra.mxu0 %v1873
      %1884 = vmatprep.subr.mxu0 0.0
      %1885 = vmatpush1.msra.mxu0 0.0
      %1886 = vmatprep.subr.mxu0 0.0
      %1887 = vmatpush1.msra.mxu0 0.0
      %1888 = vmatprep.subr.mxu0 0.0
      %1889 = vmatpush1.msra.mxu0 0.0
      %1890 = vmatprep.subr.mxu0 0.0
      %1891 = vmatpush1.msra.mxu0 0.0
      %1892 = vmatprep.subr.mxu0 0.0
      %1893 = vmatpush1.msra.mxu0 0.0
      %1894 = vmatprep.subr.mxu0 0.0
      %1895 = vmatpush1.msra.mxu0 0.0
      %1896 = vmatprep.subr.mxu0 0.0
      %1897 = vmatpush1.msra.mxu0 0.0
      %1898 = vmatprep.subr.mxu0 0.0
      %1899 = vmatpush1.msra.mxu0 0.0
      %1900 = vmatprep.subr.mxu0 0.0
      %1901 = vmatpush1.msra.mxu0 0.0
      %1902 = vmatprep.subr.mxu0 0.0
      %1903 = vmatpush1.msra.mxu0 0.0
      %1904 = vmatprep.subr.mxu0 0.0
      %1905 = vmatpush1.msra.mxu0 0.0
      %1906 = vmatprep.subr.mxu0 0.0
      %1907 = vmatpush1.msra.mxu0 0.0
      %1908 = vmatprep.subr.mxu0 0.0
      %1909 = vmatpush1.msra.mxu0 0.0
      %1910 = vmatprep.subr.mxu0 0.0
      %1911 = vmatpush1.msra.mxu0 0.0
      %1912 = vmatprep.subr.mxu0 0.0
      %1913 = vmatpush1.msra.mxu0 0.0
      %1914 = vmatprep.subr.mxu0 0.0
      %1915 = vmatpush1.msra.mxu0 0.0
      %1916 = vmatprep.subr.mxu0 0.0
      %1917 = vmatpush1.msra.mxu0 0.0
      %1918 = vmatprep.subr.mxu0 0.0
      %1919 = vmatpush1.msra.mxu0 0.0
      %1920 = vmatprep.subr.mxu0 0.0
      %1921 = vmatpush1.msra.mxu0 0.0
      %1922 = vmatprep.subr.mxu0 0.0
      %1923 = vmatpush1.msra.mxu0 0.0
      %1924 = vmatprep.subr.mxu0 0.0
      %1925 = vmatpush1.msra.mxu0 0.0
      %1926 = vmatprep.subr.mxu0 0.0
      %1927 = vmatpush1.msra.mxu0 0.0
      %1928 = vmatprep.subr.mxu0 0.0
      %1929 = vmatpush1.msra.mxu0 0.0
      %1930 = vmatprep.subr.mxu0 0.0
      %1931 = vmatpush1.msra.mxu0 0.0
      %1932 = vmatprep.subr.mxu0 0.0
      %1933 = vmatpush1.msra.mxu0 0.0
      %1934 = vmatprep.subr.mxu0 0.0
      %1935 = vmatpush1.msra.mxu0 0.0
      %1936 = vmatprep.subr.mxu0 0.0
      %1937 = vmatpush1.msra.mxu0 0.0
      %1938 = vmatprep.subr.mxu0 0.0
      %1939 = vmatpush1.msra.mxu0 0.0
      %1940 = vmatprep.subr.mxu0 0.0
      %1941 = vmatpush1.msra.mxu0 0.0
      %1942 = vmatprep.subr.mxu0 0.0
      %1943 = vmatpush1.msra.mxu0 0.0
      %1944 = vmatprep.subr.mxu0 0.0
      %1945 = vmatpush1.msra.mxu0 0.0
      %1946 = vmatprep.mubr.f32.mxu0 0.0
      %1947 = vmatmul.mubr.f32.gmra.mrb[0].mxu0 %v1877
      %v1948 = vpop.f32.mrb[0].mxu0
      %v1949 = vadd.f32 0.0, %v1948
      %v1950 = vpop.f32.mrb[0].mxu0
      %1951 = vmatprep.mubr.f32.mxu0 0.0
      %1952 = vmatmul.mubr.f32.gmra.mrb[0].mxu0 %v1880
      %v1953 = vpop.f32.mrb[0].mxu0
      %v1954 = vadd.f32 0.0, %v1953
      %v1955 = vpop.f32.mrb[0].mxu0
      %1956 = vdwg.mxu0
      %v1958 = vsel %vm554, %v1864, 0
      %v1961 = vsel %vm554, %v1865, 0
      %1963 = vmatprep.subr.mxu0 0.0
      %1964 = vmatpush1.msra.mxu0 %v1872
      %1965 = vmatprep.subr.mxu0 0.0
      %1966 = vmatpush1.msra.mxu0 0.0
      %1967 = vmatprep.subr.mxu0 0.0
      %1968 = vmatpush1.msra.mxu0 0.0
      %1969 = vmatprep.subr.mxu0 0.0
      %1970 = vmatpush1.msra.mxu0 0.0
      %1971 = vmatprep.subr.mxu0 0.0
      %1972 = vmatpush1.msra.mxu0 0.0
      %1973 = vmatprep.subr.mxu0 0.0
      %1974 = vmatpush1.msra.mxu0 0.0
      %1975 = vmatprep.subr.mxu0 0.0
      %1976 = vmatpush1.msra.mxu0 0.0
      %1977 = vmatprep.subr.mxu0 0.0
      %1978 = vmatpush1.msra.mxu0 0.0
      %1979 = vmatprep.subr.mxu0 0.0
      %1980 = vmatpush1.msra.mxu0 0.0
      %1981 = vmatprep.subr.mxu0 0.0
      %1982 = vmatpush1.msra.mxu0 0.0
      %1983 = vmatprep.subr.mxu0 0.0
      %1984 = vmatpush1.msra.mxu0 0.0
      %1985 = vmatprep.subr.mxu0 0.0
      %1986 = vmatpush1.msra.mxu0 0.0
      %1987 = vmatprep.subr.mxu0 0.0
      %1988 = vmatpush1.msra.mxu0 0.0
      %1989 = vmatprep.subr.mxu0 0.0
      %1990 = vmatpush1.msra.mxu0 0.0
      %1991 = vmatprep.subr.mxu0 0.0
      %1992 = vmatpush1.msra.mxu0 0.0
      %1993 = vmatprep.subr.mxu0 0.0
      %1994 = vmatpush1.msra.mxu0 0.0
      %1995 = vmatprep.subr.mxu0 0.0
      %1996 = vmatpush1.msra.mxu0 0.0
      %1997 = vmatprep.subr.mxu0 0.0
      %1998 = vmatpush1.msra.mxu0 0.0
      %1999 = vmatprep.subr.mxu0 0.0
      %2000 = vmatpush1.msra.mxu0 0.0
      %2001 = vmatprep.subr.mxu0 0.0
      %2002 = vmatpush1.msra.mxu0 0.0
      %2003 = vmatprep.subr.mxu0 0.0
      %2004 = vmatpush1.msra.mxu0 0.0
      %2005 = vmatprep.subr.mxu0 0.0
      %2006 = vmatpush1.msra.mxu0 0.0
      %2007 = vmatprep.subr.mxu0 0.0
      %2008 = vmatpush1.msra.mxu0 0.0
      %2009 = vmatprep.subr.mxu0 0.0
      %2010 = vmatpush1.msra.mxu0 0.0
      %2011 = vmatprep.subr.mxu0 0.0
      %2012 = vmatpush1.msra.mxu0 0.0
      %2013 = vmatprep.subr.mxu0 0.0
      %2014 = vmatpush1.msra.mxu0 0.0
      %2015 = vmatprep.subr.mxu0 0.0
      %2016 = vmatpush1.msra.mxu0 0.0
      %2017 = vmatprep.subr.mxu0 0.0
      %2018 = vmatpush1.msra.mxu0 0.0
      %2019 = vmatprep.subr.mxu0 0.0
      %2020 = vmatpush1.msra.mxu0 0.0
      %2021 = vmatprep.subr.mxu0 0.0
      %2022 = vmatpush1.msra.mxu0 0.0
      %2023 = vmatprep.subr.mxu0 0.0
      %2024 = vmatpush1.msra.mxu0 0.0
      %2025 = vmatprep.subr.mxu0 0.0
      %2026 = vmatpush1.msra.mxu0 0.0
      %2027 = vmatprep.mubr.f32.mxu0 0.0
      %2028 = vmatmul.mubr.f32.gmra.mrb[0].mxu0 %v1958
      %v2029 = vpop.f32.mrb[0].mxu0
      %v2030 = vadd.f32 %v1949, %v2029
      %v2031 = vpop.f32.mrb[0].mxu0
      %2032 = vmatprep.mubr.f32.mxu0 0.0
      %2033 = vmatmul.mubr.f32.gmra.mrb[0].mxu0 %v1961
      %v2034 = vpop.f32.mrb[0].mxu0
      %v2035 = vadd.f32 %v1954, %v2034
      %v2036 = vpop.f32.mrb[0].mxu0
      %2037 = vdwg.mxu0
      %v2039 = vsel %vm554, %v1868, 0
      %v2042 = vsel %vm554, %v1869, 0
      %2044 = vmatprep.subr.mxu0 0.0
      %2045 = vmatpush1.msra.mxu0 %v1874
      %2046 = vmatprep.subr.mxu0 0.0
      %2047 = vmatpush1.msra.mxu0 0.0
      %2048 = vmatprep.subr.mxu0 0.0
      %2049 = vmatpush1.msra.mxu0 0.0
      %2050 = vmatprep.subr.mxu0 0.0
      %2051 = vmatpush1.msra.mxu0 0.0
      %2052 = vmatprep.subr.mxu0 0.0
      %2053 = vmatpush1.msra.mxu0 0.0
      %2054 = vmatprep.subr.mxu0 0.0
      %2055 = vmatpush1.msra.mxu0 0.0
      %2056 = vmatprep.subr.mxu0 0.0
      %2057 = vmatpush1.msra.mxu0 0.0
      %2058 = vmatprep.subr.mxu0 0.0
      %2059 = vmatpush1.msra.mxu0 0.0
      %2060 = vmatprep.subr.mxu0 0.0
      %2061 = vmatpush1.msra.mxu0 0.0
      %2062 = vmatprep.subr.mxu0 0.0
      %2063 = vmatpush1.msra.mxu0 0.0
      %2064 = vmatprep.subr.mxu0 0.0
      %2065 = vmatpush1.msra.mxu0 0.0
      %2066 = vmatprep.subr.mxu0 0.0
      %2067 = vmatpush1.msra.mxu0 0.0
      %2068 = vmatprep.subr.mxu0 0.0
      %2069 = vmatpush1.msra.mxu0 0.0
      %2070 = vmatprep.subr.mxu0 0.0
      %2071 = vmatpush1.msra.mxu0 0.0
      %2072 = vmatprep.subr.mxu0 0.0
      %2073 = vmatpush1.msra.mxu0 0.0
      %2074 = vmatprep.subr.mxu0 0.0
      %2075 = vmatpush1.msra.mxu0 0.0
      %2076 = vmatprep.subr.mxu0 0.0
      %2077 = vmatpush1.msra.mxu0 0.0
      %2078 = vmatprep.subr.mxu0 0.0
      %2079 = vmatpush1.msra.mxu0 0.0
      %2080 = vmatprep.subr.mxu0 0.0
      %2081 = vmatpush1.msra.mxu0 0.0
      %2082 = vmatprep.subr.mxu0 0.0
      %2083 = vmatpush1.msra.mxu0 0.0
      %2084 = vmatprep.subr.mxu0 0.0
      %2085 = vmatpush1.msra.mxu0 0.0
      %2086 = vmatprep.subr.mxu0 0.0
      %2087 = vmatpush1.msra.mxu0 0.0
      %2088 = vmatprep.subr.mxu0 0.0
      %2089 = vmatpush1.msra.mxu0 0.0
      %2090 = vmatprep.subr.mxu0 0.0
      %2091 = vmatpush1.msra.mxu0 0.0
      %2092 = vmatprep.subr.mxu0 0.0
      %2093 = vmatpush1.msra.mxu0 0.0
      %2094 = vmatprep.subr.mxu0 0.0
      %2095 = vmatpush1.msra.mxu0 0.0
      %2096 = vmatprep.subr.mxu0 0.0
      %2097 = vmatpush1.msra.mxu0 0.0
      %2098 = vmatprep.subr.mxu0 0.0
      %2099 = vmatpush1.msra.mxu0 0.0
      %2100 = vmatprep.subr.mxu0 0.0
      %2101 = vmatpush1.msra.mxu0 0.0
      %2102 = vmatprep.subr.mxu0 0.0
      %2103 = vmatpush1.msra.mxu0 0.0
      %2104 = vmatprep.subr.mxu0 0.0
      %2105 = vmatpush1.msra.mxu0 0.0
      %2106 = vmatprep.subr.mxu0 0.0
      %2107 = vmatpush1.msra.mxu0 0.0
      %2108 = vmatprep.mubr.f32.mxu0 0.0
      %2109 = vmatmul.mubr.f32.gmra.mrb[0].mxu0 %v2039
      %v2110 = vpop.f32.mrb[0].mxu0
      %v2111 = vadd.f32 0.0, %v2110
      %v2112 = vpop.f32.mrb[0].mxu0
      %2113 = vmatprep.mubr.f32.mxu0 0.0
      %2114 = vmatmul.mubr.f32.gmra.mrb[0].mxu0 %v2042
      %v2115 = vpop.f32.mrb[0].mxu0
      %v2116 = vadd.f32 0.0, %v2115
      %v2117 = vpop.f32.mrb[0].mxu0
      %2118 = vdwg.mxu0
      %v2119 = vadd.f32 %v2030, %v2111
      %v2120 = vadd.f32 %v2035, %v2116
      %v2122 = vsel %vm554, %v1870, 0
      %v2125 = vsel %vm554, %v1871, 0
      %2127 = vmatprep.subr.mxu0 0.0
      %2128 = vmatpush1.msra.mxu0 %v1875
      %2129 = vmatprep.subr.mxu0 0.0
      %2130 = vmatpush1.msra.mxu0 0.0
      %2131 = vmatprep.subr.mxu0 0.0
      %2132 = vmatpush1.msra.mxu0 0.0
      %2133 = vmatprep.subr.mxu0 0.0
      %2134 = vmatpush1.msra.mxu0 0.0
      %2135 = vmatprep.subr.mxu0 0.0
      %2136 = vmatpush1.msra.mxu0 0.0
      %2137 = vmatprep.subr.mxu0 0.0
      %2138 = vmatpush1.msra.mxu0 0.0
      %2139 = vmatprep.subr.mxu0 0.0
      %2140 = vmatpush1.msra.mxu0 0.0
      %2141 = vmatprep.subr.mxu0 0.0
      %2142 = vmatpush1.msra.mxu0 0.0
      %2143 = vmatprep.subr.mxu0 0.0
      %2144 = vmatpush1.msra.mxu0 0.0
      %2145 = vmatprep.subr.mxu0 0.0
      %2146 = vmatpush1.msra.mxu0 0.0
      %2147 = vmatprep.subr.mxu0 0.0
      %2148 = vmatpush1.msra.mxu0 0.0
      %2149 = vmatprep.subr.mxu0 0.0
      %2150 = vmatpush1.msra.mxu0 0.0
      %2151 = vmatprep.subr.mxu0 0.0
      %2152 = vmatpush1.msra.mxu0 0.0
      %2153 = vmatprep.subr.mxu0 0.0
      %2154 = vmatpush1.msra.mxu0 0.0
      %2155 = vmatprep.subr.mxu0 0.0
      %2156 = vmatpush1.msra.mxu0 0.0
      %2157 = vmatprep.subr.mxu0 0.0
      %2158 = vmatpush1.msra.mxu0 0.0
      %2159 = vmatprep.subr.mxu0 0.0
      %2160 = vmatpush1.msra.mxu0 0.0
      %2161 = vmatprep.subr.mxu0 0.0
      %2162 = vmatpush1.msra.mxu0 0.0
      %2163 = vmatprep.subr.mxu0 0.0
      %2164 = vmatpush1.msra.mxu0 0.0
      %2165 = vmatprep.subr.mxu0 0.0
      %2166 = vmatpush1.msra.mxu0 0.0
      %2167 = vmatprep.subr.mxu0 0.0
      %2168 = vmatpush1.msra.mxu0 0.0
      %2169 = vmatprep.subr.mxu0 0.0
      %2170 = vmatpush1.msra.mxu0 0.0
      %2171 = vmatprep.subr.mxu0 0.0
      %2172 = vmatpush1.msra.mxu0 0.0
      %2173 = vmatprep.subr.mxu0 0.0
      %2174 = vmatpush1.msra.mxu0 0.0
      %2175 = vmatprep.subr.mxu0 0.0
      %2176 = vmatpush1.msra.mxu0 0.0
      %2177 = vmatprep.subr.mxu0 0.0
      %2178 = vmatpush1.msra.mxu0 0.0
      %2179 = vmatprep.subr.mxu0 0.0
      %2180 = vmatpush1.msra.mxu0 0.0
      %2181 = vmatprep.subr.mxu0 0.0
      %2182 = vmatpush1.msra.mxu0 0.0
      %2183 = vmatprep.subr.mxu0 0.0
      %2184 = vmatpush1.msra.mxu0 0.0
      %2185 = vmatprep.subr.mxu0 0.0
      %2186 = vmatpush1.msra.mxu0 0.0
      %2187 = vmatprep.subr.mxu0 0.0
      %2188 = vmatpush1.msra.mxu0 0.0
      %2189 = vmatprep.subr.mxu0 0.0
      %2190 = vmatpush1.msra.mxu0 0.0
      %2191 = vmatprep.mubr.f32.mxu0 0.0
      %2192 = vmatmul.mubr.f32.gmra.mrb[0].mxu0 %v2122
      %v2193 = vpop.f32.mrb[0].mxu0
      %v2194 = vadd.f32 0.0, %v2193
      %v2195 = vpop.f32.mrb[0].mxu0
      %2196 = vmatprep.mubr.f32.mxu0 0.0
      %2197 = vmatmul.mubr.f32.gmra.mrb[0].mxu0 %v2125
      %v2198 = vpop.f32.mrb[0].mxu0
      %v2199 = vadd.f32 0.0, %v2198
      %v2200 = vpop.f32.mrb[0].mxu0
      %2201 = vdwg.mxu0
      %v2202 = vadd.f32 %v2119, %v2194
      %v2203 = vadd.f32 %v2120, %v2199
      %v2204 = vadd.f32 %v443, %v2202
      %v2205 = vadd.f32 %v444, %v2203
      %v2206 = vld [vmem:[%s417] sm:$0x1]
      %v2208 = vlaneseq
      %v2209 = vshrl.u32 %v2208, 7
      %v2210 = vsub.s32 0, %v2209
      %v2211 = vrot.slane %v2206, %v2210
      %v2213 = vadd.f32 %v2204, %v2211
      %v2214 = vadd.f32 %v2205, %v2211
      %v2215 = vld [vmem:[%s422] sm:$0xff]
      %v2216 = vld [vmem:[%s422 + $0x8] sm:$0xff]
      %v2217 = vld [vmem:[%s422 + $0x10] sm:$0xff]
      %v2218 = vld [vmem:[%s422 + $0x18] sm:$0xff]
      %v2219 = vld [vmem:[%s425] sm:$0x1]
      %v2221 = vlaneseq
      %v2222 = vshrl.u32 %v2221, 7
      %v2223 = vsub.s32 0, %v2222
      %v2224 = vrot.slane %v2219, %v2223
      %v2227 = vsel %vm456, %v2213, 0
      %v2230 = vsel %vm456, %v2214, 0
      %2232 = vmatprep.subr.mxu0 0.0
      %2233 = vmatpush1.msra.mxu0 %v2215
      %2234 = vmatprep.subr.mxu0 0.0
      %2235 = vmatpush1.msra.mxu0 %v2216
      %2236 = vmatprep.subr.mxu0 0.0
      %2237 = vmatpush1.msra.mxu0 %v2217
      %2238 = vmatprep.subr.mxu0 0.0
      %2239 = vmatpush1.msra.mxu0 %v2218
      %2240 = vmatprep.subr.mxu0 0.0
      %2241 = vmatpush1.msra.mxu0 0.0
      %2242 = vmatprep.subr.mxu0 0.0
      %2243 = vmatpush1.msra.mxu0 0.0
      %2244 = vmatprep.subr.mxu0 0.0
      %2245 = vmatpush1.msra.mxu0 0.0
      %2246 = vmatprep.subr.mxu0 0.0
      %2247 = vmatpush1.msra.mxu0 0.0
      %2248 = vmatprep.subr.mxu0 0.0
      %2249 = vmatpush1.msra.mxu0 0.0
      %2250 = vmatprep.subr.mxu0 0.0
      %2251 = vmatpush1.msra.mxu0 0.0
      %2252 = vmatprep.subr.mxu0 0.0
      %2253 = vmatpush1.msra.mxu0 0.0
      %2254 = vmatprep.subr.mxu0 0.0
      %2255 = vmatpush1.msra.mxu0 0.0
      %2256 = vmatprep.subr.mxu0 0.0
      %2257 = vmatpush1.msra.mxu0 0.0
      %2258 = vmatprep.subr.mxu0 0.0
      %2259 = vmatpush1.msra.mxu0 0.0
      %2260 = vmatprep.subr.mxu0 0.0
      %2261 = vmatpush1.msra.mxu0 0.0
      %2262 = vmatprep.subr.mxu0 0.0
      %2263 = vmatpush1.msra.mxu0 0.0
      %2264 = vmatprep.subr.mxu0 0.0
      %2265 = vmatpush1.msra.mxu0 0.0
      %2266 = vmatprep.subr.mxu0 0.0
      %2267 = vmatpush1.msra.mxu0 0.0
      %2268 = vmatprep.subr.mxu0 0.0
      %2269 = vmatpush1.msra.mxu0 0.0
      %2270 = vmatprep.subr.mxu0 0.0
      %2271 = vmatpush1.msra.mxu0 0.0
      %2272 = vmatprep.subr.mxu0 0.0
      %2273 = vmatpush1.msra.mxu0 0.0
      %2274 = vmatprep.subr.mxu0 0.0
      %2275 = vmatpush1.msra.mxu0 0.0
      %2276 = vmatprep.subr.mxu0 0.0
      %2277 = vmatpush1.msra.mxu0 0.0
      %2278 = vmatprep.subr.mxu0 0.0
      %2279 = vmatpush1.msra.mxu0 0.0
      %2280 = vmatprep.subr.mxu0 0.0
      %2281 = vmatpush1.msra.mxu0 0.0
      %2282 = vmatprep.subr.mxu0 0.0
      %2283 = vmatpush1.msra.mxu0 0.0
      %2284 = vmatprep.subr.mxu0 0.0
      %2285 = vmatpush1.msra.mxu0 0.0
      %2286 = vmatprep.subr.mxu0 0.0
      %2287 = vmatpush1.msra.mxu0 0.0
      %2288 = vmatprep.subr.mxu0 0.0
      %2289 = vmatpush1.msra.mxu0 0.0
      %2290 = vmatprep.subr.mxu0 0.0
      %2291 = vmatpush1.msra.mxu0 0.0
      %2292 = vmatprep.subr.mxu0 0.0
      %2293 = vmatpush1.msra.mxu0 0.0
      %2294 = vmatprep.subr.mxu0 0.0
      %2295 = vmatpush1.msra.mxu0 0.0
      %2296 = vmatprep.mubr.f32.mxu0 0.0
      %2297 = vmatmul.mubr.f32.gmra.mrb[0].mxu0 %v2227
      %v2298 = vpop.f32.mrb[0].mxu0
      %v2299 = vadd.f32 %v2224, %v2298
      %v2300 = vpop.f32.mrb[0].mxu0
      %2301 = vmatprep.mubr.f32.mxu0 0.0
      %2302 = vmatmul.mubr.f32.gmra.mrb[0].mxu0 %v2230
      %v2303 = vpop.f32.mrb[0].mxu0
      %v2304 = vadd.f32 %v2224, %v2303
      %v2305 = vpop.f32.mrb[0].mxu0
      %2306 = vdwg.mxu0
      %v2307 = vmax.f32 %v2299, 0.0
      %v2308 = vmax.f32 %v2304, 0.0
      %v2309 = vld [vmem:[%s430] sm:$0xff]
      %v2310 = vld [vmem:[%s430 + $0x8] sm:$0xff]
      %v2311 = vld [vmem:[%s430 + $0x10] sm:$0xff]
      %v2312 = vld [vmem:[%s430 + $0x18] sm:$0xff]
      %v2313 = vld [vmem:[%s430 + $0x20] sm:$0xff]
      %v2314 = vld [vmem:[%s430 + $0x28] sm:$0xff]
      %v2315 = vld [vmem:[%s430 + $0x30] sm:$0xff]
      %v2316 = vld [vmem:[%s430 + $0x38] sm:$0xff]
      %v2317 = vld [vmem:[%s433] sm:$0x1]
      %v2319 = vlaneseq
      %v2320 = vshrl.u32 %v2319, 7
      %v2321 = vsub.s32 0, %v2320
      %v2322 = vrot.slane %v2317, %v2321
      %vm2324 = vcmask 523264
      %v2326 = vsel %vm2324, %v2307, 0
      %v2329 = vsel %vm2324, %v2308, 0
      %2331 = vmatprep.subr.mxu0 0.0
      %2332 = vmatpush1.msra.mxu0 %v2309
      %2333 = vmatprep.subr.mxu0 0.0
      %2334 = vmatpush1.msra.mxu0 %v2310
      %2335 = vmatprep.subr.mxu0 0.0
      %2336 = vmatpush1.msra.mxu0 %v2311
      %2337 = vmatprep.subr.mxu0 0.0
      %2338 = vmatpush1.msra.mxu0 %v2312
      %2339 = vmatprep.subr.mxu0 0.0
      %2340 = vmatpush1.msra.mxu0 %v2313
      %2341 = vmatprep.subr.mxu0 0.0
      %2342 = vmatpush1.msra.mxu0 %v2314
      %2343 = vmatprep.subr.mxu0 0.0
      %2344 = vmatpush1.msra.mxu0 %v2315
      %2345 = vmatprep.subr.mxu0 0.0
      %2346 = vmatpush1.msra.mxu0 %v2316
      %2347 = vmatprep.subr.mxu0 0.0
      %2348 = vmatpush1.msra.mxu0 0.0
      %2349 = vmatprep.subr.mxu0 0.0
      %2350 = vmatpush1.msra.mxu0 0.0
      %2351 = vmatprep.subr.mxu0 0.0
      %2352 = vmatpush1.msra.mxu0 0.0
      %2353 = vmatprep.subr.mxu0 0.0
      %2354 = vmatpush1.msra.mxu0 0.0
      %2355 = vmatprep.subr.mxu0 0.0
      %2356 = vmatpush1.msra.mxu0 0.0
      %2357 = vmatprep.subr.mxu0 0.0
      %2358 = vmatpush1.msra.mxu0 0.0
      %2359 = vmatprep.subr.mxu0 0.0
      %2360 = vmatpush1.msra.mxu0 0.0
      %2361 = vmatprep.subr.mxu0 0.0
      %2362 = vmatpush1.msra.mxu0 0.0
      %2363 = vmatprep.subr.mxu0 0.0
      %2364 = vmatpush1.msra.mxu0 0.0
      %2365 = vmatprep.subr.mxu0 0.0
      %2366 = vmatpush1.msra.mxu0 0.0
      %2367 = vmatprep.subr.mxu0 0.0
      %2368 = vmatpush1.msra.mxu0 0.0
      %2369 = vmatprep.subr.mxu0 0.0
      %2370 = vmatpush1.msra.mxu0 0.0
      %2371 = vmatprep.subr.mxu0 0.0
      %2372 = vmatpush1.msra.mxu0 0.0
      %2373 = vmatprep.subr.mxu0 0.0
      %2374 = vmatpush1.msra.mxu0 0.0
      %2375 = vmatprep.subr.mxu0 0.0
      %2376 = vmatpush1.msra.mxu0 0.0
      %2377 = vmatprep.subr.mxu0 0.0
      %2378 = vmatpush1.msra.mxu0 0.0
      %2379 = vmatprep.subr.mxu0 0.0
      %2380 = vmatpush1.msra.mxu0 0.0
      %2381 = vmatprep.subr.mxu0 0.0
      %2382 = vmatpush1.msra.mxu0 0.0
      %2383 = vmatprep.subr.mxu0 0.0
      %2384 = vmatpush1.msra.mxu0 0.0
      %2385 = vmatprep.subr.mxu0 0.0
      %2386 = vmatpush1.msra.mxu0 0.0
      %2387 = vmatprep.subr.mxu0 0.0
      %2388 = vmatpush1.msra.mxu0 0.0
      %2389 = vmatprep.subr.mxu0 0.0
      %2390 = vmatpush1.msra.mxu0 0.0
      %2391 = vmatprep.subr.mxu0 0.0
      %2392 = vmatpush1.msra.mxu0 0.0
      %2393 = vmatprep.subr.mxu0 0.0
      %2394 = vmatpush1.msra.mxu0 0.0
      %2395 = vmatprep.mubr.f32.mxu0 0.0
      %2396 = vmatmul.mubr.f32.gmra.mrb[0].mxu0 %v2326
      %v2397 = vpop.f32.mrb[0].mxu0
      %v2398 = vadd.f32 %v2322, %v2397
      %v2399 = vpop.f32.mrb[0].mxu0
      %2400 = vmatprep.mubr.f32.mxu0 0.0
      %2401 = vmatmul.mubr.f32.gmra.mrb[0].mxu0 %v2329
      %v2402 = vpop.f32.mrb[0].mxu0
      %v2403 = vadd.f32 %v2322, %v2402
      %v2404 = vpop.f32.mrb[0].mxu0
      %2405 = vdwg.mxu0
      %v2406 = vadd.f32 %v2213, %v2398
      %v2407 = vadd.f32 %v2214, %v2403
      %2408 = vst.msk [vmem:[%s9] sm:$0xff] %vm456, %v2406
      %2409 = vst.msk [vmem:[%s9 + $0x8] sm:$0xff] %vm456, %v2407
      // Predicated region
      $region61: #{transformer_forward.1} parent=55 // pred_check
        %p2410 = pneg %p262
      $region62: #{transformer_forward.1} parent=55 // pred_check_branch
        %2412 = sbr.rel (%p2410) target = $region64
      $region63: #{transformer_forward.1} parent=55 // pred_region
        _
      $region64: #{transformer_forward.1} parent=55 // pred_fallthru
        _
      // Predicated region
      $region65: #{transformer_forward.1} parent=55 // pred_check
        %p2413 = pneg %p262
      $region66: #{transformer_forward.1} parent=55 // pred_check_branch
        %2415 = sbr.rel (%p2413) target = $region68
      $region67: #{transformer_forward.1} parent=55 // pred_region
        _
      $region68: #{transformer_forward.1} parent=55 // pred_fallthru
        _
    $region56: #{transformer_forward.1} parent=5 // pred_fallthru
      _
    %p2416 = scmp.le.s32.totalorder 2, %s15
    // Predicated region
    $region69: #{transformer_forward.1} parent=5 // pred_check
      %p2417 = pneg %p2416
    $region70: #{transformer_forward.1} parent=5 // pred_check_branch
      %2419 = sbr.rel (%p2417) target = $region72
    $region71: #{transformer_forward.1} parent=5 // pred_region
      %s2420 = ssub.s32 %s15, 2
    $region72: #{transformer_forward.1} parent=5 // pred_fallthru
      _
  $region6: #{transformer_forward.1} parent=0 // loop_footer
    %s19 = sadd.s32 1, %s15
  $region7: #{transformer_forward.1} parent=0 // loop_footer_branch
    %14 = sbr.rel target = $region3
  $region8: #{transformer_forward.1} parent=0 // loop_exit
    _

</llo_original>
